<compile_context>
chip_gen: v7x
topology: tpu7x:2x2x1
jax: 0.10.0
libtpu: 0.0.40
codegen_flags: <defaults>
</compile_context>

<pallas_src>
import math
import functools

import jax
import jax.numpy as jnp
from jax import lax
from jax.experimental import pallas as pl
from jax.experimental.pallas import tpu as pltpu

LANE = 128


def _ru(n, m=LANE):
    return ((n + m - 1) // m) * m


def _pad2(w, rows, cols):
    return jnp.pad(w, ((0, rows - w.shape[0]), (0, cols - w.shape[1])))


# ----------------------------- in-kernel helpers -----------------------------

def _mha_body(q_in, kv_in, wq_ref, wk_ref, wv_ref, wo_ref, num_heads):
    """Multi-head scaled-dot-product attention + output projection, all heads.

    q_in: (Sq, Dq_pad), kv_in: (Sk, Dkv_pad).  Weights are per-head:
    wq/wk/wv: (H, D_pad, dh), wo: (H, dh, Dout_pad).  1/sqrt(dh) is already
    folded into wq.  Returns (Sq, Dout_pad) f32.
    """
    sq = q_in.shape[0]
    d_out = wo_ref.shape[-1]
    acc = jnp.zeros((sq, d_out), jnp.float32)
    for h in range(num_heads):                      # static unroll (tiny H)
        q = jnp.dot(q_in, wq_ref[h], preferred_element_type=jnp.float32)   # (Sq, dh)
        k = jnp.dot(kv_in, wk_ref[h], preferred_element_type=jnp.float32)  # (Sk, dh)
        v = jnp.dot(kv_in, wv_ref[h], preferred_element_type=jnp.float32)  # (Sk, dh)
        # q @ k^T without materializing a transpose of k.
        s = lax.dot_general(q, k, (((1,), (1,)), ((), ())),
                            preferred_element_type=jnp.float32)            # (Sq, Sk)
        m = jnp.max(s, axis=-1, keepdims=True)
        p = jnp.exp(s - m)
        p = p * pl.reciprocal(jnp.sum(p, axis=-1, keepdims=True), approx=True)
        ctx = jnp.dot(p, v, preferred_element_type=jnp.float32)            # (Sq, dh)
        acc = acc + jnp.dot(ctx, wo_ref[h], preferred_element_type=jnp.float32)
    return acc


def _layernorm(z, gamma, beta, d_real, eps=1e-5):
    """LayerNorm over the real feature width d_real of a zero-padded (S, Dp) slab."""
    dp = z.shape[-1]
    mask = (lax.broadcasted_iota(jnp.int32, (1, dp), 1) < d_real).astype(jnp.float32)
    inv_d = 1.0 / float(d_real)
    mean = jnp.sum(z, axis=-1, keepdims=True) * inv_d        # pad lanes are zero
    cen = (z - mean) * mask
    var = jnp.sum(cen * cen, axis=-1, keepdims=True) * inv_d
    return cen * lax.rsqrt(var + eps) * gamma + beta         # gamma/beta zero-padded


# ----------------------------- fused kernels -----------------------------

def _encoder_block_kernel(x_ref, wq_ref, wk_ref, wv_ref, wo_ref,
                          ln1g_ref, ln1b_ref, w1_ref, b1_ref, w2_ref, b2_ref,
                          ln2g_ref, ln2b_ref, o_ref, *, num_heads, d_real):
    x = x_ref[...]                                                     # (S, Dp)
    attn = _mha_body(x, x, wq_ref, wk_ref, wv_ref, wo_ref, num_heads)  # (S, Dp)
    res1 = _layernorm(x + attn, ln1g_ref[...], ln1b_ref[...], d_real)
    h = jnp.dot(res1, w1_ref[...], preferred_element_type=jnp.float32) + b1_ref[...]
    h = jnp.maximum(h, 0.0)
    ff = jnp.dot(h, w2_ref[...], preferred_element_type=jnp.float32) + b2_ref[...]
    # TODO(synk): nn.Dropout is identity in eval mode; training-mode dropout not implemented.
    res2 = _layernorm(res1 + ff, ln2g_ref[...], ln2b_ref[...], d_real)
    o_ref[...] = res2.astype(o_ref.dtype)


def encoder_block(x_pad, p, *, num_heads, d_real):
    B, S, Dp = x_pad.shape
    H, _, dh = p["wq"].shape
    Fp = p["w1"].shape[1]
    kernel = functools.partial(_encoder_block_kernel,
                               num_heads=num_heads, d_real=d_real)
    rep2 = lambda b: (0, 0)
    rep3 = lambda b: (0, 0, 0)
    return pl.pallas_call(
        kernel,
        out_shape=jax.ShapeDtypeStruct((B, S, Dp), jnp.float32),
        grid=(B,),
        in_specs=[
            pl.BlockSpec((None, S, Dp), lambda b: (b, 0, 0)),   # x (per batch)
            pl.BlockSpec((H, Dp, dh), rep3),                    # wq (resident)
            pl.BlockSpec((H, Dp, dh), rep3),                    # wk
            pl.BlockSpec((H, Dp, dh), rep3),                    # wv
            pl.BlockSpec((H, dh, Dp), rep3),                    # wo
            pl.BlockSpec((1, Dp), rep2),                        # ln1 gamma
            pl.BlockSpec((1, Dp), rep2),                        # ln1 beta
            pl.BlockSpec((Dp, Fp), rep2),                       # w1
            pl.BlockSpec((1, Fp), rep2),                        # b1
            pl.BlockSpec((Fp, Dp), rep2),                       # w2
            pl.BlockSpec((1, Dp), rep2),                        # b2
            pl.BlockSpec((1, Dp), rep2),                        # ln2 gamma
            pl.BlockSpec((1, Dp), rep2),                        # ln2 beta
        ],
        out_specs=pl.BlockSpec((None, S, Dp), lambda b: (b, 0, 0)),
        compiler_params=pltpu.CompilerParams(
            dimension_semantics=("parallel",)),
    )(x_pad, p["wq"], p["wk"], p["wv"], p["wo"],
      p["ln1_g"], p["ln1_b"], p["w1"], p["b1"], p["w2"], p["b2"],
      p["ln2_g"], p["ln2_b"])


def _cross_final_kernel(q_ref, enc_ref, wq_ref, wk_ref, wv_ref, wo_ref,
                        wl_ref, bl_ref, o_ref, *, num_heads):
    qin = q_ref[...]                                                     # (Sq, Dqp)
    enc = enc_ref[...]                                                   # (S, Dp)
    y = _mha_body(qin, enc, wq_ref, wk_ref, wv_ref, wo_ref, num_heads)   # (Sq, Dp)
    out = jnp.dot(y, wl_ref[...], preferred_element_type=jnp.float32) + bl_ref[...]
    o_ref[...] = out.astype(o_ref.dtype)


def cross_and_linear(q_pad, enc_pad, p, *, num_heads):
    B, Sq, Dqp = q_pad.shape
    _, S, Dp = enc_pad.shape
    H, _, dh = p["wq"].shape
    Vp = p["wl"].shape[1]
    kernel = functools.partial(_cross_final_kernel, num_heads=num_heads)
    rep2 = lambda b: (0, 0)
    rep3 = lambda b: (0, 0, 0)
    return pl.pallas_call(
        kernel,
        out_shape=jax.ShapeDtypeStruct((B, Sq, Vp), jnp.float32),
        grid=(B,),
        in_specs=[
            pl.BlockSpec((None, Sq, Dqp), lambda b: (b, 0, 0)),  # Q (per batch)
            pl.BlockSpec((None, S, Dp), lambda b: (b, 0, 0)),    # encoder output
            pl.BlockSpec((H, Dqp, dh), rep3),                    # wq
            pl.BlockSpec((H, Dp, dh), rep3),                     # wk
            pl.BlockSpec((H, Dp, dh), rep3),                     # wv
            pl.BlockSpec((H, dh, Dp), rep3),                     # wo
            pl.BlockSpec((Dp, Vp), rep2),                        # final linear W
            pl.BlockSpec((1, Vp), rep2),                         # final linear b
        ],
        out_specs=pl.BlockSpec((None, Sq, Vp), lambda b: (b, 0, 0)),
        compiler_params=pltpu.CompilerParams(
            dimension_semantics=("parallel",)),
    )(q_pad, enc_pad, p["wq"], p["wk"], p["wv"], p["wo"], p["wl"], p["bl"])


# ----------------------------- model glue (plain JAX) -----------------------------

def transf_enc_dec_apply(packed, K, V, Q, *, num_heads, input_size, input_v):
    Dp = _ru(input_size)
    Dqp = _ru(Q.shape[-1])
    X = jnp.concatenate([K, V, Q], axis=2)                    # (B, S, input_size)
    Xp = jnp.pad(X, ((0, 0), (0, 0), (0, Dp - input_size)))   # lane-dense slab
    for blk in packed["blocks"]:
        Xp = encoder_block(Xp, blk, num_heads=num_heads, d_real=input_size)
    Qp = jnp.pad(Q, ((0, 0), (0, 0), (0, Dqp - Q.shape[-1])))
    out_p = cross_and_linear(Qp, Xp, packed["cross"], num_heads=num_heads)
    return out_p[..., :input_v]                               # slice off lane padding


# ----------------------------- parameter init & packing -----------------------------

def _init_dense(key, din, dout, bias, scale=0.1):
    kw, kb = jax.random.split(key)
    w = scale * jax.random.normal(kw, (din, dout), jnp.float32)
    b = (scale * jax.random.normal(kb, (1, dout), jnp.float32)
         if bias else jnp.zeros((1, dout), jnp.float32))
    return w, b


def _init_mha(key, input_k, input_q, input_v, hidden):
    kq, kk, kv, ko = jax.random.split(key, 4)
    Wq, _ = _init_dense(kq, input_q, hidden, bias=False)
    Wk, _ = _init_dense(kk, input_k, hidden, bias=False)
    Wv, _ = _init_dense(kv, input_v, hidden, bias=False)
    Wo, _ = _init_dense(ko, hidden, input_v, bias=False)
    return dict(Wq=Wq, Wk=Wk, Wv=Wv, Wo=Wo)


def init_params(key, input_k, input_q, input_v, hidden, num_heads, dim_ff, num_blk):
    input_size = input_k + input_q + input_v
    blocks = []
    for _ in range(num_blk):
        key, k_attn, k1, k2 = jax.random.split(key, 4)
        w1, b1 = _init_dense(k1, input_size, dim_ff, bias=True)
        w2, b2 = _init_dense(k2, dim_ff, input_size, bias=True)
        blocks.append(dict(
            attn=_init_mha(k_attn, input_size, input_size, input_size, hidden),
            ln1_g=jnp.ones((1, input_size), jnp.float32),
            ln1_b=jnp.zeros((1, input_size), jnp.float32),
            w1=w1, b1=b1, w2=w2, b2=b2,
            ln2_g=jnp.ones((1, input_size), jnp.float32),
            ln2_b=jnp.zeros((1, input_size), jnp.float32),
        ))
    key, k_cross, k_lin = jax.random.split(key, 3)
    cross = _init_mha(k_cross, input_size, input_q, input_size, hidden)
    Wl, bl = _init_dense(k_lin, input_size, input_v, bias=True)
    return dict(blocks=blocks, cross=cross, Wl=Wl, bl=bl)


def _pack_mha(p, num_heads, dq_pad, dkv_pad, dout_pad):
    """Split projection weights per head and zero-pad feature dims to lane width."""
    hidden = p["Wq"].shape[1]
    dh = hidden // num_heads
    scale = 1.0 / math.sqrt(dh)          # fold 1/sqrt(dh) into Wq

    def split_heads(w, dpad):
        wp = _pad2(w, dpad, hidden)                                   # (dpad, hidden)
        return jnp.transpose(wp.reshape(dpad, num_heads, dh), (1, 0, 2))  # (H, dpad, dh)

    wq = split_heads(p["Wq"] * scale, dq_pad)
    wk = split_heads(p["Wk"], dkv_pad)
    wv = split_heads(p["Wv"], dkv_pad)
    dout = p["Wo"].shape[1]
    wo = jnp.pad(p["Wo"].reshape(num_heads, dh, dout),
                 ((0, 0), (0, 0), (0, dout_pad - dout)))              # (H, dh, dout_pad)
    return dict(wq=wq, wk=wk, wv=wv, wo=wo)


def pack_params(params, *, num_heads, input_size, input_q, input_v, dim_ff):
    Dp, Fp, Dqp, Vp = _ru(input_size), _ru(dim_ff), _ru(input_q), _ru(input_v)
    blocks = []
    for blk in params["blocks"]:
        pb = _pack_mha(blk["attn"], num_heads, Dp, Dp, Dp)
        pb.update(
            ln1_g=_pad2(blk["ln1_g"], 1, Dp), ln1_b=_pad2(blk["ln1_b"], 1, Dp),
            w1=_pad2(blk["w1"], Dp, Fp), b1=_pad2(blk["b1"], 1, Fp),
            w2=_pad2(blk["w2"], Fp, Dp), b2=_pad2(blk["b2"], 1, Dp),
            ln2_g=_pad2(blk["ln2_g"], 1, Dp), ln2_b=_pad2(blk["ln2_b"], 1, Dp),
        )
        blocks.append(pb)
    cross = _pack_mha(params["cross"], num_heads, Dqp, Dp, Dp)
    cross["wl"] = _pad2(params["Wl"], Dp, Vp)
    cross["bl"] = _pad2(params["bl"], 1, Vp)
    return dict(blocks=blocks, cross=cross)


# ----------------------------- main -----------------------------

if __name__ == "__main__":
    # Small shapes: B=2, S=8, input_k = input_q = input_v = 4  -> input_size = 12
    B, S = 2, 8
    input_k = input_q = input_v = 4
    hidden_size = 32
    num_heads = 4
    dim_feedforward = 32
    num_blk = 2
    input_size = input_k + input_q + input_v

    root = jax.random.PRNGKey(0)
    k_params, kK, kV, kQ = jax.random.split(root, 4)
    params = init_params(k_params, input_k, input_q, input_v,
                         hidden_size, num_heads, dim_feedforward, num_blk)
    packed = pack_params(params, num_heads=num_heads, input_size=input_size,
                         input_q=input_q, input_v=input_v, dim_ff=dim_feedforward)

    K = jax.random.normal(kK, (B, S, input_k), jnp.float32)
    V = jax.random.normal(kV, (B, S, input_v), jnp.float32)
    Q = jax.random.normal(kQ, (B, S, input_q), jnp.float32)

    fwd = jax.jit(functools.partial(transf_enc_dec_apply,
                                    num_heads=num_heads,
                                    input_size=input_size,
                                    input_v=input_v))
    out = fwd(packed, K, V, Q)
    out = jax.block_until_ready(out)
    assert out.shape == (B, S, input_v), out.shape
    print("KERNEL_OK")
</pallas_src>

<mosaic_0001>
module attributes {stable_mosaic.version = 11 : i64} {
  func.func @_encoder_block_kernel(%arg0: i32, %arg1: memref<1x8x128xf32, #tpu.memory_space<vmem>>, %arg2: memref<4x128x8xf32, #tpu.memory_space<vmem>>, %arg3: memref<4x128x8xf32, #tpu.memory_space<vmem>>, %arg4: memref<4x128x8xf32, #tpu.memory_space<vmem>>, %arg5: memref<4x8x128xf32, #tpu.memory_space<vmem>>, %arg6: memref<1x128xf32, #tpu.memory_space<vmem>>, %arg7: memref<1x128xf32, #tpu.memory_space<vmem>>, %arg8: memref<128x128xf32, #tpu.memory_space<vmem>>, %arg9: memref<1x128xf32, #tpu.memory_space<vmem>>, %arg10: memref<128x128xf32, #tpu.memory_space<vmem>>, %arg11: memref<1x128xf32, #tpu.memory_space<vmem>>, %arg12: memref<1x128xf32, #tpu.memory_space<vmem>>, %arg13: memref<1x128xf32, #tpu.memory_space<vmem>>, %arg14: memref<1x8x128xf32, #tpu.memory_space<vmem>>) attributes {dimension_semantics = [#tpu.dimension_semantics<parallel>], iteration_bounds = array<i64: 2>, scalar_prefetch = 0 : i64, scratch_operands = 0 : i64, tpu.core_type = #tpu.core_type<tc>, window_params = [{transform_indices = @transform_0, window_bounds = array<i64: 1, 8, 128>}, {pipeline_mode = #tpu.pipeline_mode<synchronous>, transform_indices = @transform_1, window_bounds = array<i64: 4, 128, 8>}, {pipeline_mode = #tpu.pipeline_mode<synchronous>, transform_indices = @transform_2, window_bounds = array<i64: 4, 128, 8>}, {pipeline_mode = #tpu.pipeline_mode<synchronous>, transform_indices = @transform_3, window_bounds = array<i64: 4, 128, 8>}, {pipeline_mode = #tpu.pipeline_mode<synchronous>, transform_indices = @transform_4, window_bounds = array<i64: 4, 8, 128>}, {pipeline_mode = #tpu.pipeline_mode<synchronous>, transform_indices = @transform_5, window_bounds = array<i64: 1, 128>}, {pipeline_mode = #tpu.pipeline_mode<synchronous>, transform_indices = @transform_6, window_bounds = array<i64: 1, 128>}, {pipeline_mode = #tpu.pipeline_mode<synchronous>, transform_indices = @transform_7, window_bounds = array<i64: 128, 128>}, {pipeline_mode = #tpu.pipeline_mode<synchronous>, transform_indices = @transform_8, window_bounds = array<i64: 1, 128>}, {pipeline_mode = #tpu.pipeline_mode<synchronous>, transform_indices = @transform_9, window_bounds = array<i64: 128, 128>}, {pipeline_mode = #tpu.pipeline_mode<synchronous>, transform_indices = @transform_10, window_bounds = array<i64: 1, 128>}, {pipeline_mode = #tpu.pipeline_mode<synchronous>, transform_indices = @transform_11, window_bounds = array<i64: 1, 128>}, {pipeline_mode = #tpu.pipeline_mode<synchronous>, transform_indices = @transform_12, window_bounds = array<i64: 1, 128>}, {transform_indices = @transform_13, window_bounds = array<i64: 1, 8, 128>}]} {
    %c0 = arith.constant 0 : index
    %c0_0 = arith.constant 0 : index
    %c0_1 = arith.constant 0 : index
    %0 = vector.load %arg1[%c0, %c0_0, %c0_1] : memref<1x8x128xf32, #tpu.memory_space<vmem>>, vector<1x8x128xf32>
    %1 = vector.shape_cast %0 : vector<1x8x128xf32> to vector<8x128xf32>
    %cst = arith.constant 0.000000e+00 : f32
    %2 = vector.broadcast %cst : f32 to vector<8x128xf32>
    %c0_2 = arith.constant 0 : index
    %c0_3 = arith.constant 0 : index
    %c0_4 = arith.constant 0 : index
    %3 = vector.load %arg2[%c0_2, %c0_3, %c0_4] : memref<4x128x8xf32, #tpu.memory_space<vmem>>, vector<1x128x8xf32>
    %4 = vector.shape_cast %3 : vector<1x128x8xf32> to vector<128x8xf32>
    %cst_5 = arith.constant dense<0.000000e+00> : vector<8x8xf32>
    %5 = tpu.matmul %1, %4, %cst_5 {dimension_numbers = #tpu.dot_dimension_numbers<[1], [0], [0], [1], [0, 0, 1, 1], [], []>} : vector<8x128xf32>, vector<128x8xf32>, vector<8x8xf32> -> vector<8x8xf32>
    %c0_6 = arith.constant 0 : index
    %c0_7 = arith.constant 0 : index
    %c0_8 = arith.constant 0 : index
    %6 = vector.load %arg3[%c0_6, %c0_7, %c0_8] : memref<4x128x8xf32, #tpu.memory_space<vmem>>, vector<1x128x8xf32>
    %7 = vector.shape_cast %6 : vector<1x128x8xf32> to vector<128x8xf32>
    %cst_9 = arith.constant dense<0.000000e+00> : vector<8x8xf32>
    %8 = tpu.matmul %1, %7, %cst_9 {dimension_numbers = #tpu.dot_dimension_numbers<[1], [0], [0], [1], [0, 0, 1, 1], [], []>} : vector<8x128xf32>, vector<128x8xf32>, vector<8x8xf32> -> vector<8x8xf32>
    %c0_10 = arith.constant 0 : index
    %c0_11 = arith.constant 0 : index
    %c0_12 = arith.constant 0 : index
    %9 = vector.load %arg4[%c0_10, %c0_11, %c0_12] : memref<4x128x8xf32, #tpu.memory_space<vmem>>, vector<1x128x8xf32>
    %10 = vector.shape_cast %9 : vector<1x128x8xf32> to vector<128x8xf32>
    %cst_13 = arith.constant dense<0.000000e+00> : vector<8x8xf32>
    %11 = tpu.matmul %1, %10, %cst_13 {dimension_numbers = #tpu.dot_dimension_numbers<[1], [0], [0], [1], [0, 0, 1, 1], [], []>} : vector<8x128xf32>, vector<128x8xf32>, vector<8x8xf32> -> vector<8x8xf32>
    %cst_14 = arith.constant dense<0.000000e+00> : vector<8x8xf32>
    %12 = tpu.matmul %5, %8, %cst_14 {dimension_numbers = #tpu.dot_dimension_numbers<[1], [1], [0], [0], [0, 0, 1, 0], [], []>} : vector<8x8xf32>, vector<8x8xf32>, vector<8x8xf32> -> vector<8x8xf32>
    %cst_15 = arith.constant dense<0xFF800000> : vector<8xf32>
    %13 = vector.multi_reduction <maximumf>, %12, %cst_15 [1] : vector<8x8xf32> to vector<8xf32>
    %14 = vector.shape_cast %13 : vector<8xf32> to vector<8x1xf32>
    %15 = vector.broadcast %14 : vector<8x1xf32> to vector<8x8xf32>
    %16 = arith.subf %12, %15 : vector<8x8xf32>
    %17 = math.exp %16 : vector<8x8xf32>
    %cst_16 = arith.constant dense<0.000000e+00> : vector<8xf32>
    %18 = vector.multi_reduction <add>, %17, %cst_16 [1] : vector<8x8xf32> to vector<8xf32>
    %19 = vector.shape_cast %18 : vector<8xf32> to vector<8x1xf32>
    %20 = tpu.reciprocal %19 {approx = true} : vector<8x1xf32> -> vector<8x1xf32>
    %21 = vector.broadcast %20 : vector<8x1xf32> to vector<8x8xf32>
    %22 = arith.mulf %17, %21 : vector<8x8xf32>
    %cst_17 = arith.constant dense<0.000000e+00> : vector<8x8xf32>
    %23 = tpu.matmul %22, %11, %cst_17 {dimension_numbers = #tpu.dot_dimension_numbers<[1], [0], [0], [1], [0, 0, 1, 1], [], []>} : vector<8x8xf32>, vector<8x8xf32>, vector<8x8xf32> -> vector<8x8xf32>
    %c0_18 = arith.constant 0 : index
    %c0_19 = arith.constant 0 : index
    %c0_20 = arith.constant 0 : index
    %24 = vector.load %arg5[%c0_18, %c0_19, %c0_20] : memref<4x8x128xf32, #tpu.memory_space<vmem>>, vector<1x8x128xf32>
    %25 = vector.shape_cast %24 : vector<1x8x128xf32> to vector<8x128xf32>
    %cst_21 = arith.constant dense<0.000000e+00> : vector<8x128xf32>
    %26 = tpu.matmul %23, %25, %cst_21 {dimension_numbers = #tpu.dot_dimension_numbers<[1], [0], [0], [1], [0, 0, 1, 1], [], []>} : vector<8x8xf32>, vector<8x128xf32>, vector<8x128xf32> -> vector<8x128xf32>
    %27 = arith.addf %2, %26 : vector<8x128xf32>
    %c1 = arith.constant 1 : index
    %c0_22 = arith.constant 0 : index
    %c0_23 = arith.constant 0 : index
    %28 = vector.load %arg2[%c1, %c0_22, %c0_23] : memref<4x128x8xf32, #tpu.memory_space<vmem>>, vector<1x128x8xf32>
    %29 = vector.shape_cast %28 : vector<1x128x8xf32> to vector<128x8xf32>
    %cst_24 = arith.constant dense<0.000000e+00> : vector<8x8xf32>
    %30 = tpu.matmul %1, %29, %cst_24 {dimension_numbers = #tpu.dot_dimension_numbers<[1], [0], [0], [1], [0, 0, 1, 1], [], []>} : vector<8x128xf32>, vector<128x8xf32>, vector<8x8xf32> -> vector<8x8xf32>
    %c1_25 = arith.constant 1 : index
    %c0_26 = arith.constant 0 : index
    %c0_27 = arith.constant 0 : index
    %31 = vector.load %arg3[%c1_25, %c0_26, %c0_27] : memref<4x128x8xf32, #tpu.memory_space<vmem>>, vector<1x128x8xf32>
    %32 = vector.shape_cast %31 : vector<1x128x8xf32> to vector<128x8xf32>
    %cst_28 = arith.constant dense<0.000000e+00> : vector<8x8xf32>
    %33 = tpu.matmul %1, %32, %cst_28 {dimension_numbers = #tpu.dot_dimension_numbers<[1], [0], [0], [1], [0, 0, 1, 1], [], []>} : vector<8x128xf32>, vector<128x8xf32>, vector<8x8xf32> -> vector<8x8xf32>
    %c1_29 = arith.constant 1 : index
    %c0_30 = arith.constant 0 : index
    %c0_31 = arith.constant 0 : index
    %34 = vector.load %arg4[%c1_29, %c0_30, %c0_31] : memref<4x128x8xf32, #tpu.memory_space<vmem>>, vector<1x128x8xf32>
    %35 = vector.shape_cast %34 : vector<1x128x8xf32> to vector<128x8xf32>
    %cst_32 = arith.constant dense<0.000000e+00> : vector<8x8xf32>
    %36 = tpu.matmul %1, %35, %cst_32 {dimension_numbers = #tpu.dot_dimension_numbers<[1], [0], [0], [1], [0, 0, 1, 1], [], []>} : vector<8x128xf32>, vector<128x8xf32>, vector<8x8xf32> -> vector<8x8xf32>
    %cst_33 = arith.constant dense<0.000000e+00> : vector<8x8xf32>
    %37 = tpu.matmul %30, %33, %cst_33 {dimension_numbers = #tpu.dot_dimension_numbers<[1], [1], [0], [0], [0, 0, 1, 0], [], []>} : vector<8x8xf32>, vector<8x8xf32>, vector<8x8xf32> -> vector<8x8xf32>
    %cst_34 = arith.constant dense<0xFF800000> : vector<8xf32>
    %38 = vector.multi_reduction <maximumf>, %37, %cst_34 [1] : vector<8x8xf32> to vector<8xf32>
    %39 = vector.shape_cast %38 : vector<8xf32> to vector<8x1xf32>
    %40 = vector.broadcast %39 : vector<8x1xf32> to vector<8x8xf32>
    %41 = arith.subf %37, %40 : vector<8x8xf32>
    %42 = math.exp %41 : vector<8x8xf32>
    %cst_35 = arith.constant dense<0.000000e+00> : vector<8xf32>
    %43 = vector.multi_reduction <add>, %42, %cst_35 [1] : vector<8x8xf32> to vector<8xf32>
    %44 = vector.shape_cast %43 : vector<8xf32> to vector<8x1xf32>
    %45 = tpu.reciprocal %44 {approx = true} : vector<8x1xf32> -> vector<8x1xf32>
    %46 = vector.broadcast %45 : vector<8x1xf32> to vector<8x8xf32>
    %47 = arith.mulf %42, %46 : vector<8x8xf32>
    %cst_36 = arith.constant dense<0.000000e+00> : vector<8x8xf32>
    %48 = tpu.matmul %47, %36, %cst_36 {dimension_numbers = #tpu.dot_dimension_numbers<[1], [0], [0], [1], [0, 0, 1, 1], [], []>} : vector<8x8xf32>, vector<8x8xf32>, vector<8x8xf32> -> vector<8x8xf32>
    %c1_37 = arith.constant 1 : index
    %c0_38 = arith.constant 0 : index
    %c0_39 = arith.constant 0 : index
    %49 = vector.load %arg5[%c1_37, %c0_38, %c0_39] : memref<4x8x128xf32, #tpu.memory_space<vmem>>, vector<1x8x128xf32>
    %50 = vector.shape_cast %49 : vector<1x8x128xf32> to vector<8x128xf32>
    %cst_40 = arith.constant dense<0.000000e+00> : vector<8x128xf32>
    %51 = tpu.matmul %48, %50, %cst_40 {dimension_numbers = #tpu.dot_dimension_numbers<[1], [0], [0], [1], [0, 0, 1, 1], [], []>} : vector<8x8xf32>, vector<8x128xf32>, vector<8x128xf32> -> vector<8x128xf32>
    %52 = arith.addf %27, %51 : vector<8x128xf32>
    %c2 = arith.constant 2 : index
    %c0_41 = arith.constant 0 : index
    %c0_42 = arith.constant 0 : index
    %53 = vector.load %arg2[%c2, %c0_41, %c0_42] : memref<4x128x8xf32, #tpu.memory_space<vmem>>, vector<1x128x8xf32>
    %54 = vector.shape_cast %53 : vector<1x128x8xf32> to vector<128x8xf32>
    %cst_43 = arith.constant dense<0.000000e+00> : vector<8x8xf32>
    %55 = tpu.matmul %1, %54, %cst_43 {dimension_numbers = #tpu.dot_dimension_numbers<[1], [0], [0], [1], [0, 0, 1, 1], [], []>} : vector<8x128xf32>, vector<128x8xf32>, vector<8x8xf32> -> vector<8x8xf32>
    %c2_44 = arith.constant 2 : index
    %c0_45 = arith.constant 0 : index
    %c0_46 = arith.constant 0 : index
    %56 = vector.load %arg3[%c2_44, %c0_45, %c0_46] : memref<4x128x8xf32, #tpu.memory_space<vmem>>, vector<1x128x8xf32>
    %57 = vector.shape_cast %56 : vector<1x128x8xf32> to vector<128x8xf32>
    %cst_47 = arith.constant dense<0.000000e+00> : vector<8x8xf32>
    %58 = tpu.matmul %1, %57, %cst_47 {dimension_numbers = #tpu.dot_dimension_numbers<[1], [0], [0], [1], [0, 0, 1, 1], [], []>} : vector<8x128xf32>, vector<128x8xf32>, vector<8x8xf32> -> vector<8x8xf32>
    %c2_48 = arith.constant 2 : index
    %c0_49 = arith.constant 0 : index
    %c0_50 = arith.constant 0 : index
    %59 = vector.load %arg4[%c2_48, %c0_49, %c0_50] : memref<4x128x8xf32, #tpu.memory_space<vmem>>, vector<1x128x8xf32>
    %60 = vector.shape_cast %59 : vector<1x128x8xf32> to vector<128x8xf32>
    %cst_51 = arith.constant dense<0.000000e+00> : vector<8x8xf32>
    %61 = tpu.matmul %1, %60, %cst_51 {dimension_numbers = #tpu.dot_dimension_numbers<[1], [0], [0], [1], [0, 0, 1, 1], [], []>} : vector<8x128xf32>, vector<128x8xf32>, vector<8x8xf32> -> vector<8x8xf32>
    %cst_52 = arith.constant dense<0.000000e+00> : vector<8x8xf32>
    %62 = tpu.matmul %55, %58, %cst_52 {dimension_numbers = #tpu.dot_dimension_numbers<[1], [1], [0], [0], [0, 0, 1, 0], [], []>} : vector<8x8xf32>, vector<8x8xf32>, vector<8x8xf32> -> vector<8x8xf32>
    %cst_53 = arith.constant dense<0xFF800000> : vector<8xf32>
    %63 = vector.multi_reduction <maximumf>, %62, %cst_53 [1] : vector<8x8xf32> to vector<8xf32>
    %64 = vector.shape_cast %63 : vector<8xf32> to vector<8x1xf32>
    %65 = vector.broadcast %64 : vector<8x1xf32> to vector<8x8xf32>
    %66 = arith.subf %62, %65 : vector<8x8xf32>
    %67 = math.exp %66 : vector<8x8xf32>
    %cst_54 = arith.constant dense<0.000000e+00> : vector<8xf32>
    %68 = vector.multi_reduction <add>, %67, %cst_54 [1] : vector<8x8xf32> to vector<8xf32>
    %69 = vector.shape_cast %68 : vector<8xf32> to vector<8x1xf32>
    %70 = tpu.reciprocal %69 {approx = true} : vector<8x1xf32> -> vector<8x1xf32>
    %71 = vector.broadcast %70 : vector<8x1xf32> to vector<8x8xf32>
    %72 = arith.mulf %67, %71 : vector<8x8xf32>
    %cst_55 = arith.constant dense<0.000000e+00> : vector<8x8xf32>
    %73 = tpu.matmul %72, %61, %cst_55 {dimension_numbers = #tpu.dot_dimension_numbers<[1], [0], [0], [1], [0, 0, 1, 1], [], []>} : vector<8x8xf32>, vector<8x8xf32>, vector<8x8xf32> -> vector<8x8xf32>
    %c2_56 = arith.constant 2 : index
    %c0_57 = arith.constant 0 : index
    %c0_58 = arith.constant 0 : index
    %74 = vector.load %arg5[%c2_56, %c0_57, %c0_58] : memref<4x8x128xf32, #tpu.memory_space<vmem>>, vector<1x8x128xf32>
    %75 = vector.shape_cast %74 : vector<1x8x128xf32> to vector<8x128xf32>
    %cst_59 = arith.constant dense<0.000000e+00> : vector<8x128xf32>
    %76 = tpu.matmul %73, %75, %cst_59 {dimension_numbers = #tpu.dot_dimension_numbers<[1], [0], [0], [1], [0, 0, 1, 1], [], []>} : vector<8x8xf32>, vector<8x128xf32>, vector<8x128xf32> -> vector<8x128xf32>
    %77 = arith.addf %52, %76 : vector<8x128xf32>
    %c3 = arith.constant 3 : index
    %c0_60 = arith.constant 0 : index
    %c0_61 = arith.constant 0 : index
    %78 = vector.load %arg2[%c3, %c0_60, %c0_61] : memref<4x128x8xf32, #tpu.memory_space<vmem>>, vector<1x128x8xf32>
    %79 = vector.shape_cast %78 : vector<1x128x8xf32> to vector<128x8xf32>
    %cst_62 = arith.constant dense<0.000000e+00> : vector<8x8xf32>
    %80 = tpu.matmul %1, %79, %cst_62 {dimension_numbers = #tpu.dot_dimension_numbers<[1], [0], [0], [1], [0, 0, 1, 1], [], []>} : vector<8x128xf32>, vector<128x8xf32>, vector<8x8xf32> -> vector<8x8xf32>
    %c3_63 = arith.constant 3 : index
    %c0_64 = arith.constant 0 : index
    %c0_65 = arith.constant 0 : index
    %81 = vector.load %arg3[%c3_63, %c0_64, %c0_65] : memref<4x128x8xf32, #tpu.memory_space<vmem>>, vector<1x128x8xf32>
    %82 = vector.shape_cast %81 : vector<1x128x8xf32> to vector<128x8xf32>
    %cst_66 = arith.constant dense<0.000000e+00> : vector<8x8xf32>
    %83 = tpu.matmul %1, %82, %cst_66 {dimension_numbers = #tpu.dot_dimension_numbers<[1], [0], [0], [1], [0, 0, 1, 1], [], []>} : vector<8x128xf32>, vector<128x8xf32>, vector<8x8xf32> -> vector<8x8xf32>
    %c3_67 = arith.constant 3 : index
    %c0_68 = arith.constant 0 : index
    %c0_69 = arith.constant 0 : index
    %84 = vector.load %arg4[%c3_67, %c0_68, %c0_69] : memref<4x128x8xf32, #tpu.memory_space<vmem>>, vector<1x128x8xf32>
    %85 = vector.shape_cast %84 : vector<1x128x8xf32> to vector<128x8xf32>
    %cst_70 = arith.constant dense<0.000000e+00> : vector<8x8xf32>
    %86 = tpu.matmul %1, %85, %cst_70 {dimension_numbers = #tpu.dot_dimension_numbers<[1], [0], [0], [1], [0, 0, 1, 1], [], []>} : vector<8x128xf32>, vector<128x8xf32>, vector<8x8xf32> -> vector<8x8xf32>
    %cst_71 = arith.constant dense<0.000000e+00> : vector<8x8xf32>
    %87 = tpu.matmul %80, %83, %cst_71 {dimension_numbers = #tpu.dot_dimension_numbers<[1], [1], [0], [0], [0, 0, 1, 0], [], []>} : vector<8x8xf32>, vector<8x8xf32>, vector<8x8xf32> -> vector<8x8xf32>
    %cst_72 = arith.constant dense<0xFF800000> : vector<8xf32>
    %88 = vector.multi_reduction <maximumf>, %87, %cst_72 [1] : vector<8x8xf32> to vector<8xf32>
    %89 = vector.shape_cast %88 : vector<8xf32> to vector<8x1xf32>
    %90 = vector.broadcast %89 : vector<8x1xf32> to vector<8x8xf32>
    %91 = arith.subf %87, %90 : vector<8x8xf32>
    %92 = math.exp %91 : vector<8x8xf32>
    %cst_73 = arith.constant dense<0.000000e+00> : vector<8xf32>
    %93 = vector.multi_reduction <add>, %92, %cst_73 [1] : vector<8x8xf32> to vector<8xf32>
    %94 = vector.shape_cast %93 : vector<8xf32> to vector<8x1xf32>
    %95 = tpu.reciprocal %94 {approx = true} : vector<8x1xf32> -> vector<8x1xf32>
    %96 = vector.broadcast %95 : vector<8x1xf32> to vector<8x8xf32>
    %97 = arith.mulf %92, %96 : vector<8x8xf32>
    %cst_74 = arith.constant dense<0.000000e+00> : vector<8x8xf32>
    %98 = tpu.matmul %97, %86, %cst_74 {dimension_numbers = #tpu.dot_dimension_numbers<[1], [0], [0], [1], [0, 0, 1, 1], [], []>} : vector<8x8xf32>, vector<8x8xf32>, vector<8x8xf32> -> vector<8x8xf32>
    %c3_75 = arith.constant 3 : index
    %c0_76 = arith.constant 0 : index
    %c0_77 = arith.constant 0 : index
    %99 = vector.load %arg5[%c3_75, %c0_76, %c0_77] : memref<4x8x128xf32, #tpu.memory_space<vmem>>, vector<1x8x128xf32>
    %100 = vector.shape_cast %99 : vector<1x8x128xf32> to vector<8x128xf32>
    %cst_78 = arith.constant dense<0.000000e+00> : vector<8x128xf32>
    %101 = tpu.matmul %98, %100, %cst_78 {dimension_numbers = #tpu.dot_dimension_numbers<[1], [0], [0], [1], [0, 0, 1, 1], [], []>} : vector<8x8xf32>, vector<8x128xf32>, vector<8x128xf32> -> vector<8x128xf32>
    %102 = arith.addf %77, %101 : vector<8x128xf32>
    %103 = arith.addf %1, %102 : vector<8x128xf32>
    %c0_79 = arith.constant 0 : index
    %c0_80 = arith.constant 0 : index
    %104 = vector.load %arg6[%c0_79, %c0_80] : memref<1x128xf32, #tpu.memory_space<vmem>>, vector<1x128xf32>
    %c0_81 = arith.constant 0 : index
    %c0_82 = arith.constant 0 : index
    %105 = vector.load %arg7[%c0_81, %c0_82] : memref<1x128xf32, #tpu.memory_space<vmem>>, vector<1x128xf32>
    %106 = tpu.iota {dimensions = array<i32: 1>} : vector<1x128xi32>
    %c12_i32 = arith.constant 12 : i32
    %107 = vector.broadcast %c12_i32 : i32 to vector<1x128xi32>
    %108 = arith.cmpi slt, %106, %107 : vector<1x128xi32>
    %109 = arith.extui %108 : vector<1x128xi1> to vector<1x128xi32>
    %110 = arith.sitofp %109 : vector<1x128xi32> to vector<1x128xf32>
    %cst_83 = arith.constant dense<0.000000e+00> : vector<8xf32>
    %111 = vector.multi_reduction <add>, %103, %cst_83 [1] : vector<8x128xf32> to vector<8xf32>
    %112 = vector.shape_cast %111 : vector<8xf32> to vector<8x1xf32>
    %cst_84 = arith.constant 0.0833333358 : f32
    %113 = vector.broadcast %cst_84 : f32 to vector<8x1xf32>
    %114 = arith.mulf %112, %113 : vector<8x1xf32>
    %115 = vector.broadcast %114 : vector<8x1xf32> to vector<8x128xf32>
    %116 = arith.subf %103, %115 : vector<8x128xf32>
    %117 = vector.broadcast %110 : vector<1x128xf32> to vector<8x128xf32>
    %118 = arith.mulf %116, %117 : vector<8x128xf32>
    %119 = arith.mulf %118, %118 : vector<8x128xf32>
    %cst_85 = arith.constant dense<0.000000e+00> : vector<8xf32>
    %120 = vector.multi_reduction <add>, %119, %cst_85 [1] : vector<8x128xf32> to vector<8xf32>
    %121 = vector.shape_cast %120 : vector<8xf32> to vector<8x1xf32>
    %cst_86 = arith.constant 0.0833333358 : f32
    %122 = vector.broadcast %cst_86 : f32 to vector<8x1xf32>
    %123 = arith.mulf %121, %122 : vector<8x1xf32>
    %cst_87 = arith.constant 9.99999974E-6 : f32
    %124 = vector.broadcast %cst_87 : f32 to vector<8x1xf32>
    %125 = arith.addf %123, %124 : vector<8x1xf32>
    %126 = math.rsqrt %125 : vector<8x1xf32>
    %127 = vector.broadcast %126 : vector<8x1xf32> to vector<8x128xf32>
    %128 = arith.mulf %118, %127 : vector<8x128xf32>
    %129 = vector.broadcast %104 : vector<1x128xf32> to vector<8x128xf32>
    %130 = arith.mulf %128, %129 : vector<8x128xf32>
    %131 = vector.broadcast %105 : vector<1x128xf32> to vector<8x128xf32>
    %132 = arith.addf %130, %131 : vector<8x128xf32>
    %c0_88 = arith.constant 0 : index
    %c0_89 = arith.constant 0 : index
    %133 = vector.load %arg8[%c0_88, %c0_89] : memref<128x128xf32, #tpu.memory_space<vmem>>, vector<128x128xf32>
    %cst_90 = arith.constant dense<0.000000e+00> : vector<8x128xf32>
    %134 = tpu.matmul %132, %133, %cst_90 {dimension_numbers = #tpu.dot_dimension_numbers<[1], [0], [0], [1], [0, 0, 1, 1], [], []>} : vector<8x128xf32>, vector<128x128xf32>, vector<8x128xf32> -> vector<8x128xf32>
    %c0_91 = arith.constant 0 : index
    %c0_92 = arith.constant 0 : index
    %135 = vector.load %arg9[%c0_91, %c0_92] : memref<1x128xf32, #tpu.memory_space<vmem>>, vector<1x128xf32>
    %136 = vector.broadcast %135 : vector<1x128xf32> to vector<8x128xf32>
    %137 = arith.addf %134, %136 : vector<8x128xf32>
    %cst_93 = arith.constant 0.000000e+00 : f32
    %138 = vector.broadcast %cst_93 : f32 to vector<8x128xf32>
    %139 = arith.maximumf %137, %138 : vector<8x128xf32>
    %c0_94 = arith.constant 0 : index
    %c0_95 = arith.constant 0 : index
    %140 = vector.load %arg10[%c0_94, %c0_95] : memref<128x128xf32, #tpu.memory_space<vmem>>, vector<128x128xf32>
    %cst_96 = arith.constant dense<0.000000e+00> : vector<8x128xf32>
    %141 = tpu.matmul %139, %140, %cst_96 {dimension_numbers = #tpu.dot_dimension_numbers<[1], [0], [0], [1], [0, 0, 1, 1], [], []>} : vector<8x128xf32>, vector<128x128xf32>, vector<8x128xf32> -> vector<8x128xf32>
    %c0_97 = arith.constant 0 : index
    %c0_98 = arith.constant 0 : index
    %142 = vector.load %arg11[%c0_97, %c0_98] : memref<1x128xf32, #tpu.memory_space<vmem>>, vector<1x128xf32>
    %143 = vector.broadcast %142 : vector<1x128xf32> to vector<8x128xf32>
    %144 = arith.addf %141, %143 : vector<8x128xf32>
    %145 = arith.addf %132, %144 : vector<8x128xf32>
    %c0_99 = arith.constant 0 : index
    %c0_100 = arith.constant 0 : index
    %146 = vector.load %arg12[%c0_99, %c0_100] : memref<1x128xf32, #tpu.memory_space<vmem>>, vector<1x128xf32>
    %c0_101 = arith.constant 0 : index
    %c0_102 = arith.constant 0 : index
    %147 = vector.load %arg13[%c0_101, %c0_102] : memref<1x128xf32, #tpu.memory_space<vmem>>, vector<1x128xf32>
    %148 = tpu.iota {dimensions = array<i32: 1>} : vector<1x128xi32>
    %c12_i32_103 = arith.constant 12 : i32
    %149 = vector.broadcast %c12_i32_103 : i32 to vector<1x128xi32>
    %150 = arith.cmpi slt, %148, %149 : vector<1x128xi32>
    %151 = arith.extui %150 : vector<1x128xi1> to vector<1x128xi32>
    %152 = arith.sitofp %151 : vector<1x128xi32> to vector<1x128xf32>
    %cst_104 = arith.constant dense<0.000000e+00> : vector<8xf32>
    %153 = vector.multi_reduction <add>, %145, %cst_104 [1] : vector<8x128xf32> to vector<8xf32>
    %154 = vector.shape_cast %153 : vector<8xf32> to vector<8x1xf32>
    %cst_105 = arith.constant 0.0833333358 : f32
    %155 = vector.broadcast %cst_105 : f32 to vector<8x1xf32>
    %156 = arith.mulf %154, %155 : vector<8x1xf32>
    %157 = vector.broadcast %156 : vector<8x1xf32> to vector<8x128xf32>
    %158 = arith.subf %145, %157 : vector<8x128xf32>
    %159 = vector.broadcast %152 : vector<1x128xf32> to vector<8x128xf32>
    %160 = arith.mulf %158, %159 : vector<8x128xf32>
    %161 = arith.mulf %160, %160 : vector<8x128xf32>
    %cst_106 = arith.constant dense<0.000000e+00> : vector<8xf32>
    %162 = vector.multi_reduction <add>, %161, %cst_106 [1] : vector<8x128xf32> to vector<8xf32>
    %163 = vector.shape_cast %162 : vector<8xf32> to vector<8x1xf32>
    %cst_107 = arith.constant 0.0833333358 : f32
    %164 = vector.broadcast %cst_107 : f32 to vector<8x1xf32>
    %165 = arith.mulf %163, %164 : vector<8x1xf32>
    %cst_108 = arith.constant 9.99999974E-6 : f32
    %166 = vector.broadcast %cst_108 : f32 to vector<8x1xf32>
    %167 = arith.addf %165, %166 : vector<8x1xf32>
    %168 = math.rsqrt %167 : vector<8x1xf32>
    %169 = vector.broadcast %168 : vector<8x1xf32> to vector<8x128xf32>
    %170 = arith.mulf %160, %169 : vector<8x128xf32>
    %171 = vector.broadcast %146 : vector<1x128xf32> to vector<8x128xf32>
    %172 = arith.mulf %170, %171 : vector<8x128xf32>
    %173 = vector.broadcast %147 : vector<1x128xf32> to vector<8x128xf32>
    %174 = arith.addf %172, %173 : vector<8x128xf32>
    %c0_109 = arith.constant 0 : index
    %c0_110 = arith.constant 0 : index
    %c0_111 = arith.constant 0 : index
    %175 = vector.load %arg14[%c0_109, %c0_110, %c0_111] : memref<1x8x128xf32, #tpu.memory_space<vmem>>, vector<1x8x128xf32>
    %176 = vector.shape_cast %175 : vector<1x8x128xf32> to vector<8x128xf32>
    %177 = vector.shape_cast %174 : vector<8x128xf32> to vector<1x8x128xf32>
    tpu.vector_store %arg14[%c0_109, %c0_110, %c0_111], %177 {strides = array<i32>} : memref<1x8x128xf32, #tpu.memory_space<vmem>>, vector<1x8x128xf32>,
    return
  }
  func.func @transform_0(%arg0: i32) -> (i32, i32, i32) {
    %c0_i32 = arith.constant 0 : i32
    %c0_i32_0 = arith.constant 0 : i32
    %c0_i32_1 = arith.constant 0 : i32
    return %arg0, %c0_i32, %c0_i32_0 : i32, i32, i32
  }
  func.func @transform_1(%arg0: i32) -> (i32, i32, i32) {
    %c0_i32 = arith.constant 0 : i32
    %c0_i32_0 = arith.constant 0 : i32
    %c0_i32_1 = arith.constant 0 : i32
    %c0_i32_2 = arith.constant 0 : i32
    return %c0_i32, %c0_i32_0, %c0_i32_1 : i32, i32, i32
  }
  func.func @transform_2(%arg0: i32) -> (i32, i32, i32) {
    %c0_i32 = arith.constant 0 : i32
    %c0_i32_0 = arith.constant 0 : i32
    %c0_i32_1 = arith.constant 0 : i32
    %c0_i32_2 = arith.constant 0 : i32
    return %c0_i32, %c0_i32_0, %c0_i32_1 : i32, i32, i32
  }
  func.func @transform_3(%arg0: i32) -> (i32, i32, i32) {
    %c0_i32 = arith.constant 0 : i32
    %c0_i32_0 = arith.constant 0 : i32
    %c0_i32_1 = arith.constant 0 : i32
    %c0_i32_2 = arith.constant 0 : i32
    return %c0_i32, %c0_i32_0, %c0_i32_1 : i32, i32, i32
  }
  func.func @transform_4(%arg0: i32) -> (i32, i32, i32) {
    %c0_i32 = arith.constant 0 : i32
    %c0_i32_0 = arith.constant 0 : i32
    %c0_i32_1 = arith.constant 0 : i32
    %c0_i32_2 = arith.constant 0 : i32
    return %c0_i32, %c0_i32_0, %c0_i32_1 : i32, i32, i32
  }
  func.func @transform_5(%arg0: i32) -> (i32, i32) {
    %c0_i32 = arith.constant 0 : i32
    %c0_i32_0 = arith.constant 0 : i32
    %c0_i32_1 = arith.constant 0 : i32
    return %c0_i32, %c0_i32_0 : i32, i32
  }
  func.func @transform_6(%arg0: i32) -> (i32, i32) {
    %c0_i32 = arith.constant 0 : i32
    %c0_i32_0 = arith.constant 0 : i32
    %c0_i32_1 = arith.constant 0 : i32
    return %c0_i32, %c0_i32_0 : i32, i32
  }
  func.func @transform_7(%arg0: i32) -> (i32, i32) {
    %c0_i32 = arith.constant 0 : i32
    %c0_i32_0 = arith.constant 0 : i32
    %c0_i32_1 = arith.constant 0 : i32
    return %c0_i32, %c0_i32_0 : i32, i32
  }
  func.func @transform_8(%arg0: i32) -> (i32, i32) {
    %c0_i32 = arith.constant 0 : i32
    %c0_i32_0 = arith.constant 0 : i32
    %c0_i32_1 = arith.constant 0 : i32
    return %c0_i32, %c0_i32_0 : i32, i32
  }
  func.func @transform_9(%arg0: i32) -> (i32, i32) {
    %c0_i32 = arith.constant 0 : i32
    %c0_i32_0 = arith.constant 0 : i32
    %c0_i32_1 = arith.constant 0 : i32
    return %c0_i32, %c0_i32_0 : i32, i32
  }
  func.func @transform_10(%arg0: i32) -> (i32, i32) {
    %c0_i32 = arith.constant 0 : i32
    %c0_i32_0 = arith.constant 0 : i32
    %c0_i32_1 = arith.constant 0 : i32
    return %c0_i32, %c0_i32_0 : i32, i32
  }
  func.func @transform_11(%arg0: i32) -> (i32, i32) {
    %c0_i32 = arith.constant 0 : i32
    %c0_i32_0 = arith.constant 0 : i32
    %c0_i32_1 = arith.constant 0 : i32
    return %c0_i32, %c0_i32_0 : i32, i32
  }
  func.func @transform_12(%arg0: i32) -> (i32, i32) {
    %c0_i32 = arith.constant 0 : i32
    %c0_i32_0 = arith.constant 0 : i32
    %c0_i32_1 = arith.constant 0 : i32
    return %c0_i32, %c0_i32_0 : i32, i32
  }
  func.func @transform_13(%arg0: i32) -> (i32, i32, i32) {
    %c0_i32 = arith.constant 0 : i32
    %c0_i32_0 = arith.constant 0 : i32
    %c0_i32_1 = arith.constant 0 : i32
    return %arg0, %c0_i32, %c0_i32_0 : i32, i32, i32
  }
}

module attributes {stable_mosaic.version = 11 : i64} {
  func.func @_cross_final_kernel(%arg0: i32, %arg1: memref<1x8x128xf32, #tpu.memory_space<vmem>>, %arg2: memref<1x8x128xf32, #tpu.memory_space<vmem>>, %arg3: memref<4x128x8xf32, #tpu.memory_space<vmem>>, %arg4: memref<4x128x8xf32, #tpu.memory_space<vmem>>, %arg5: memref<4x128x8xf32, #tpu.memory_space<vmem>>, %arg6: memref<4x8x128xf32, #tpu.memory_space<vmem>>, %arg7: memref<128x128xf32, #tpu.memory_space<vmem>>, %arg8: memref<1x128xf32, #tpu.memory_space<vmem>>, %arg9: memref<1x8x128xf32, #tpu.memory_space<vmem>>) attributes {dimension_semantics = [#tpu.dimension_semantics<parallel>], iteration_bounds = array<i64: 2>, scalar_prefetch = 0 : i64, scratch_operands = 0 : i64, tpu.core_type = #tpu.core_type<tc>, window_params = [{transform_indices = @transform_0, window_bounds = array<i64: 1, 8, 128>}, {transform_indices = @transform_1, window_bounds = array<i64: 1, 8, 128>}, {pipeline_mode = #tpu.pipeline_mode<synchronous>, transform_indices = @transform_2, window_bounds = array<i64: 4, 128, 8>}, {pipeline_mode = #tpu.pipeline_mode<synchronous>, transform_indices = @transform_3, window_bounds = array<i64: 4, 128, 8>}, {pipeline_mode = #tpu.pipeline_mode<synchronous>, transform_indices = @transform_4, window_bounds = array<i64: 4, 128, 8>}, {pipeline_mode = #tpu.pipeline_mode<synchronous>, transform_indices = @transform_5, window_bounds = array<i64: 4, 8, 128>}, {pipeline_mode = #tpu.pipeline_mode<synchronous>, transform_indices = @transform_6, window_bounds = array<i64: 128, 128>}, {pipeline_mode = #tpu.pipeline_mode<synchronous>, transform_indices = @transform_7, window_bounds = array<i64: 1, 128>}, {transform_indices = @transform_8, window_bounds = array<i64: 1, 8, 128>}]} {
    %c0 = arith.constant 0 : index
    %c0_0 = arith.constant 0 : index
    %c0_1 = arith.constant 0 : index
    %0 = vector.load %arg1[%c0, %c0_0, %c0_1] : memref<1x8x128xf32, #tpu.memory_space<vmem>>, vector<1x8x128xf32>
    %1 = vector.shape_cast %0 : vector<1x8x128xf32> to vector<8x128xf32>
    %c0_2 = arith.constant 0 : index
    %c0_3 = arith.constant 0 : index
    %c0_4 = arith.constant 0 : index
    %2 = vector.load %arg2[%c0_2, %c0_3, %c0_4] : memref<1x8x128xf32, #tpu.memory_space<vmem>>, vector<1x8x128xf32>
    %3 = vector.shape_cast %2 : vector<1x8x128xf32> to vector<8x128xf32>
    %cst = arith.constant 0.000000e+00 : f32
    %4 = vector.broadcast %cst : f32 to vector<8x128xf32>
    %c0_5 = arith.constant 0 : index
    %c0_6 = arith.constant 0 : index
    %c0_7 = arith.constant 0 : index
    %5 = vector.load %arg3[%c0_5, %c0_6, %c0_7] : memref<4x128x8xf32, #tpu.memory_space<vmem>>, vector<1x128x8xf32>
    %6 = vector.shape_cast %5 : vector<1x128x8xf32> to vector<128x8xf32>
    %cst_8 = arith.constant dense<0.000000e+00> : vector<8x8xf32>
    %7 = tpu.matmul %1, %6, %cst_8 {dimension_numbers = #tpu.dot_dimension_numbers<[1], [0], [0], [1], [0, 0, 1, 1], [], []>} : vector<8x128xf32>, vector<128x8xf32>, vector<8x8xf32> -> vector<8x8xf32>
    %c0_9 = arith.constant 0 : index
    %c0_10 = arith.constant 0 : index
    %c0_11 = arith.constant 0 : index
    %8 = vector.load %arg4[%c0_9, %c0_10, %c0_11] : memref<4x128x8xf32, #tpu.memory_space<vmem>>, vector<1x128x8xf32>
    %9 = vector.shape_cast %8 : vector<1x128x8xf32> to vector<128x8xf32>
    %cst_12 = arith.constant dense<0.000000e+00> : vector<8x8xf32>
    %10 = tpu.matmul %3, %9, %cst_12 {dimension_numbers = #tpu.dot_dimension_numbers<[1], [0], [0], [1], [0, 0, 1, 1], [], []>} : vector<8x128xf32>, vector<128x8xf32>, vector<8x8xf32> -> vector<8x8xf32>
    %c0_13 = arith.constant 0 : index
    %c0_14 = arith.constant 0 : index
    %c0_15 = arith.constant 0 : index
    %11 = vector.load %arg5[%c0_13, %c0_14, %c0_15] : memref<4x128x8xf32, #tpu.memory_space<vmem>>, vector<1x128x8xf32>
    %12 = vector.shape_cast %11 : vector<1x128x8xf32> to vector<128x8xf32>
    %cst_16 = arith.constant dense<0.000000e+00> : vector<8x8xf32>
    %13 = tpu.matmul %3, %12, %cst_16 {dimension_numbers = #tpu.dot_dimension_numbers<[1], [0], [0], [1], [0, 0, 1, 1], [], []>} : vector<8x128xf32>, vector<128x8xf32>, vector<8x8xf32> -> vector<8x8xf32>
    %cst_17 = arith.constant dense<0.000000e+00> : vector<8x8xf32>
    %14 = tpu.matmul %7, %10, %cst_17 {dimension_numbers = #tpu.dot_dimension_numbers<[1], [1], [0], [0], [0, 0, 1, 0], [], []>} : vector<8x8xf32>, vector<8x8xf32>, vector<8x8xf32> -> vector<8x8xf32>
    %cst_18 = arith.constant dense<0xFF800000> : vector<8xf32>
    %15 = vector.multi_reduction <maximumf>, %14, %cst_18 [1] : vector<8x8xf32> to vector<8xf32>
    %16 = vector.shape_cast %15 : vector<8xf32> to vector<8x1xf32>
    %17 = vector.broadcast %16 : vector<8x1xf32> to vector<8x8xf32>
    %18 = arith.subf %14, %17 : vector<8x8xf32>
    %19 = math.exp %18 : vector<8x8xf32>
    %cst_19 = arith.constant dense<0.000000e+00> : vector<8xf32>
    %20 = vector.multi_reduction <add>, %19, %cst_19 [1] : vector<8x8xf32> to vector<8xf32>
    %21 = vector.shape_cast %20 : vector<8xf32> to vector<8x1xf32>
    %22 = tpu.reciprocal %21 {approx = true} : vector<8x1xf32> -> vector<8x1xf32>
    %23 = vector.broadcast %22 : vector<8x1xf32> to vector<8x8xf32>
    %24 = arith.mulf %19, %23 : vector<8x8xf32>
    %cst_20 = arith.constant dense<0.000000e+00> : vector<8x8xf32>
    %25 = tpu.matmul %24, %13, %cst_20 {dimension_numbers = #tpu.dot_dimension_numbers<[1], [0], [0], [1], [0, 0, 1, 1], [], []>} : vector<8x8xf32>, vector<8x8xf32>, vector<8x8xf32> -> vector<8x8xf32>
    %c0_21 = arith.constant 0 : index
    %c0_22 = arith.constant 0 : index
    %c0_23 = arith.constant 0 : index
    %26 = vector.load %arg6[%c0_21, %c0_22, %c0_23] : memref<4x8x128xf32, #tpu.memory_space<vmem>>, vector<1x8x128xf32>
    %27 = vector.shape_cast %26 : vector<1x8x128xf32> to vector<8x128xf32>
    %cst_24 = arith.constant dense<0.000000e+00> : vector<8x128xf32>
    %28 = tpu.matmul %25, %27, %cst_24 {dimension_numbers = #tpu.dot_dimension_numbers<[1], [0], [0], [1], [0, 0, 1, 1], [], []>} : vector<8x8xf32>, vector<8x128xf32>, vector<8x128xf32> -> vector<8x128xf32>
    %29 = arith.addf %4, %28 : vector<8x128xf32>
    %c1 = arith.constant 1 : index
    %c0_25 = arith.constant 0 : index
    %c0_26 = arith.constant 0 : index
    %30 = vector.load %arg3[%c1, %c0_25, %c0_26] : memref<4x128x8xf32, #tpu.memory_space<vmem>>, vector<1x128x8xf32>
    %31 = vector.shape_cast %30 : vector<1x128x8xf32> to vector<128x8xf32>
    %cst_27 = arith.constant dense<0.000000e+00> : vector<8x8xf32>
    %32 = tpu.matmul %1, %31, %cst_27 {dimension_numbers = #tpu.dot_dimension_numbers<[1], [0], [0], [1], [0, 0, 1, 1], [], []>} : vector<8x128xf32>, vector<128x8xf32>, vector<8x8xf32> -> vector<8x8xf32>
    %c1_28 = arith.constant 1 : index
    %c0_29 = arith.constant 0 : index
    %c0_30 = arith.constant 0 : index
    %33 = vector.load %arg4[%c1_28, %c0_29, %c0_30] : memref<4x128x8xf32, #tpu.memory_space<vmem>>, vector<1x128x8xf32>
    %34 = vector.shape_cast %33 : vector<1x128x8xf32> to vector<128x8xf32>
    %cst_31 = arith.constant dense<0.000000e+00> : vector<8x8xf32>
    %35 = tpu.matmul %3, %34, %cst_31 {dimension_numbers = #tpu.dot_dimension_numbers<[1], [0], [0], [1], [0, 0, 1, 1], [], []>} : vector<8x128xf32>, vector<128x8xf32>, vector<8x8xf32> -> vector<8x8xf32>
    %c1_32 = arith.constant 1 : index
    %c0_33 = arith.constant 0 : index
    %c0_34 = arith.constant 0 : index
    %36 = vector.load %arg5[%c1_32, %c0_33, %c0_34] : memref<4x128x8xf32, #tpu.memory_space<vmem>>, vector<1x128x8xf32>
    %37 = vector.shape_cast %36 : vector<1x128x8xf32> to vector<128x8xf32>
    %cst_35 = arith.constant dense<0.000000e+00> : vector<8x8xf32>
    %38 = tpu.matmul %3, %37, %cst_35 {dimension_numbers = #tpu.dot_dimension_numbers<[1], [0], [0], [1], [0, 0, 1, 1], [], []>} : vector<8x128xf32>, vector<128x8xf32>, vector<8x8xf32> -> vector<8x8xf32>
    %cst_36 = arith.constant dense<0.000000e+00> : vector<8x8xf32>
    %39 = tpu.matmul %32, %35, %cst_36 {dimension_numbers = #tpu.dot_dimension_numbers<[1], [1], [0], [0], [0, 0, 1, 0], [], []>} : vector<8x8xf32>, vector<8x8xf32>, vector<8x8xf32> -> vector<8x8xf32>
    %cst_37 = arith.constant dense<0xFF800000> : vector<8xf32>
    %40 = vector.multi_reduction <maximumf>, %39, %cst_37 [1] : vector<8x8xf32> to vector<8xf32>
    %41 = vector.shape_cast %40 : vector<8xf32> to vector<8x1xf32>
    %42 = vector.broadcast %41 : vector<8x1xf32> to vector<8x8xf32>
    %43 = arith.subf %39, %42 : vector<8x8xf32>
    %44 = math.exp %43 : vector<8x8xf32>
    %cst_38 = arith.constant dense<0.000000e+00> : vector<8xf32>
    %45 = vector.multi_reduction <add>, %44, %cst_38 [1] : vector<8x8xf32> to vector<8xf32>
    %46 = vector.shape_cast %45 : vector<8xf32> to vector<8x1xf32>
    %47 = tpu.reciprocal %46 {approx = true} : vector<8x1xf32> -> vector<8x1xf32>
    %48 = vector.broadcast %47 : vector<8x1xf32> to vector<8x8xf32>
    %49 = arith.mulf %44, %48 : vector<8x8xf32>
    %cst_39 = arith.constant dense<0.000000e+00> : vector<8x8xf32>
    %50 = tpu.matmul %49, %38, %cst_39 {dimension_numbers = #tpu.dot_dimension_numbers<[1], [0], [0], [1], [0, 0, 1, 1], [], []>} : vector<8x8xf32>, vector<8x8xf32>, vector<8x8xf32> -> vector<8x8xf32>
    %c1_40 = arith.constant 1 : index
    %c0_41 = arith.constant 0 : index
    %c0_42 = arith.constant 0 : index
    %51 = vector.load %arg6[%c1_40, %c0_41, %c0_42] : memref<4x8x128xf32, #tpu.memory_space<vmem>>, vector<1x8x128xf32>
    %52 = vector.shape_cast %51 : vector<1x8x128xf32> to vector<8x128xf32>
    %cst_43 = arith.constant dense<0.000000e+00> : vector<8x128xf32>
    %53 = tpu.matmul %50, %52, %cst_43 {dimension_numbers = #tpu.dot_dimension_numbers<[1], [0], [0], [1], [0, 0, 1, 1], [], []>} : vector<8x8xf32>, vector<8x128xf32>, vector<8x128xf32> -> vector<8x128xf32>
    %54 = arith.addf %29, %53 : vector<8x128xf32>
    %c2 = arith.constant 2 : index
    %c0_44 = arith.constant 0 : index
    %c0_45 = arith.constant 0 : index
    %55 = vector.load %arg3[%c2, %c0_44, %c0_45] : memref<4x128x8xf32, #tpu.memory_space<vmem>>, vector<1x128x8xf32>
    %56 = vector.shape_cast %55 : vector<1x128x8xf32> to vector<128x8xf32>
    %cst_46 = arith.constant dense<0.000000e+00> : vector<8x8xf32>
    %57 = tpu.matmul %1, %56, %cst_46 {dimension_numbers = #tpu.dot_dimension_numbers<[1], [0], [0], [1], [0, 0, 1, 1], [], []>} : vector<8x128xf32>, vector<128x8xf32>, vector<8x8xf32> -> vector<8x8xf32>
    %c2_47 = arith.constant 2 : index
    %c0_48 = arith.constant 0 : index
    %c0_49 = arith.constant 0 : index
    %58 = vector.load %arg4[%c2_47, %c0_48, %c0_49] : memref<4x128x8xf32, #tpu.memory_space<vmem>>, vector<1x128x8xf32>
    %59 = vector.shape_cast %58 : vector<1x128x8xf32> to vector<128x8xf32>
    %cst_50 = arith.constant dense<0.000000e+00> : vector<8x8xf32>
    %60 = tpu.matmul %3, %59, %cst_50 {dimension_numbers = #tpu.dot_dimension_numbers<[1], [0], [0], [1], [0, 0, 1, 1], [], []>} : vector<8x128xf32>, vector<128x8xf32>, vector<8x8xf32> -> vector<8x8xf32>
    %c2_51 = arith.constant 2 : index
    %c0_52 = arith.constant 0 : index
    %c0_53 = arith.constant 0 : index
    %61 = vector.load %arg5[%c2_51, %c0_52, %c0_53] : memref<4x128x8xf32, #tpu.memory_space<vmem>>, vector<1x128x8xf32>
    %62 = vector.shape_cast %61 : vector<1x128x8xf32> to vector<128x8xf32>
    %cst_54 = arith.constant dense<0.000000e+00> : vector<8x8xf32>
    %63 = tpu.matmul %3, %62, %cst_54 {dimension_numbers = #tpu.dot_dimension_numbers<[1], [0], [0], [1], [0, 0, 1, 1], [], []>} : vector<8x128xf32>, vector<128x8xf32>, vector<8x8xf32> -> vector<8x8xf32>
    %cst_55 = arith.constant dense<0.000000e+00> : vector<8x8xf32>
    %64 = tpu.matmul %57, %60, %cst_55 {dimension_numbers = #tpu.dot_dimension_numbers<[1], [1], [0], [0], [0, 0, 1, 0], [], []>} : vector<8x8xf32>, vector<8x8xf32>, vector<8x8xf32> -> vector<8x8xf32>
    %cst_56 = arith.constant dense<0xFF800000> : vector<8xf32>
    %65 = vector.multi_reduction <maximumf>, %64, %cst_56 [1] : vector<8x8xf32> to vector<8xf32>
    %66 = vector.shape_cast %65 : vector<8xf32> to vector<8x1xf32>
    %67 = vector.broadcast %66 : vector<8x1xf32> to vector<8x8xf32>
    %68 = arith.subf %64, %67 : vector<8x8xf32>
    %69 = math.exp %68 : vector<8x8xf32>
    %cst_57 = arith.constant dense<0.000000e+00> : vector<8xf32>
    %70 = vector.multi_reduction <add>, %69, %cst_57 [1] : vector<8x8xf32> to vector<8xf32>
    %71 = vector.shape_cast %70 : vector<8xf32> to vector<8x1xf32>
    %72 = tpu.reciprocal %71 {approx = true} : vector<8x1xf32> -> vector<8x1xf32>
    %73 = vector.broadcast %72 : vector<8x1xf32> to vector<8x8xf32>
    %74 = arith.mulf %69, %73 : vector<8x8xf32>
    %cst_58 = arith.constant dense<0.000000e+00> : vector<8x8xf32>
    %75 = tpu.matmul %74, %63, %cst_58 {dimension_numbers = #tpu.dot_dimension_numbers<[1], [0], [0], [1], [0, 0, 1, 1], [], []>} : vector<8x8xf32>, vector<8x8xf32>, vector<8x8xf32> -> vector<8x8xf32>
    %c2_59 = arith.constant 2 : index
    %c0_60 = arith.constant 0 : index
    %c0_61 = arith.constant 0 : index
    %76 = vector.load %arg6[%c2_59, %c0_60, %c0_61] : memref<4x8x128xf32, #tpu.memory_space<vmem>>, vector<1x8x128xf32>
    %77 = vector.shape_cast %76 : vector<1x8x128xf32> to vector<8x128xf32>
    %cst_62 = arith.constant dense<0.000000e+00> : vector<8x128xf32>
    %78 = tpu.matmul %75, %77, %cst_62 {dimension_numbers = #tpu.dot_dimension_numbers<[1], [0], [0], [1], [0, 0, 1, 1], [], []>} : vector<8x8xf32>, vector<8x128xf32>, vector<8x128xf32> -> vector<8x128xf32>
    %79 = arith.addf %54, %78 : vector<8x128xf32>
    %c3 = arith.constant 3 : index
    %c0_63 = arith.constant 0 : index
    %c0_64 = arith.constant 0 : index
    %80 = vector.load %arg3[%c3, %c0_63, %c0_64] : memref<4x128x8xf32, #tpu.memory_space<vmem>>, vector<1x128x8xf32>
    %81 = vector.shape_cast %80 : vector<1x128x8xf32> to vector<128x8xf32>
    %cst_65 = arith.constant dense<0.000000e+00> : vector<8x8xf32>
    %82 = tpu.matmul %1, %81, %cst_65 {dimension_numbers = #tpu.dot_dimension_numbers<[1], [0], [0], [1], [0, 0, 1, 1], [], []>} : vector<8x128xf32>, vector<128x8xf32>, vector<8x8xf32> -> vector<8x8xf32>
    %c3_66 = arith.constant 3 : index
    %c0_67 = arith.constant 0 : index
    %c0_68 = arith.constant 0 : index
    %83 = vector.load %arg4[%c3_66, %c0_67, %c0_68] : memref<4x128x8xf32, #tpu.memory_space<vmem>>, vector<1x128x8xf32>
    %84 = vector.shape_cast %83 : vector<1x128x8xf32> to vector<128x8xf32>
    %cst_69 = arith.constant dense<0.000000e+00> : vector<8x8xf32>
    %85 = tpu.matmul %3, %84, %cst_69 {dimension_numbers = #tpu.dot_dimension_numbers<[1], [0], [0], [1], [0, 0, 1, 1], [], []>} : vector<8x128xf32>, vector<128x8xf32>, vector<8x8xf32> -> vector<8x8xf32>
    %c3_70 = arith.constant 3 : index
    %c0_71 = arith.constant 0 : index
    %c0_72 = arith.constant 0 : index
    %86 = vector.load %arg5[%c3_70, %c0_71, %c0_72] : memref<4x128x8xf32, #tpu.memory_space<vmem>>, vector<1x128x8xf32>
    %87 = vector.shape_cast %86 : vector<1x128x8xf32> to vector<128x8xf32>
    %cst_73 = arith.constant dense<0.000000e+00> : vector<8x8xf32>
    %88 = tpu.matmul %3, %87, %cst_73 {dimension_numbers = #tpu.dot_dimension_numbers<[1], [0], [0], [1], [0, 0, 1, 1], [], []>} : vector<8x128xf32>, vector<128x8xf32>, vector<8x8xf32> -> vector<8x8xf32>
    %cst_74 = arith.constant dense<0.000000e+00> : vector<8x8xf32>
    %89 = tpu.matmul %82, %85, %cst_74 {dimension_numbers = #tpu.dot_dimension_numbers<[1], [1], [0], [0], [0, 0, 1, 0], [], []>} : vector<8x8xf32>, vector<8x8xf32>, vector<8x8xf32> -> vector<8x8xf32>
    %cst_75 = arith.constant dense<0xFF800000> : vector<8xf32>
    %90 = vector.multi_reduction <maximumf>, %89, %cst_75 [1] : vector<8x8xf32> to vector<8xf32>
    %91 = vector.shape_cast %90 : vector<8xf32> to vector<8x1xf32>
    %92 = vector.broadcast %91 : vector<8x1xf32> to vector<8x8xf32>
    %93 = arith.subf %89, %92 : vector<8x8xf32>
    %94 = math.exp %93 : vector<8x8xf32>
    %cst_76 = arith.constant dense<0.000000e+00> : vector<8xf32>
    %95 = vector.multi_reduction <add>, %94, %cst_76 [1] : vector<8x8xf32> to vector<8xf32>
    %96 = vector.shape_cast %95 : vector<8xf32> to vector<8x1xf32>
    %97 = tpu.reciprocal %96 {approx = true} : vector<8x1xf32> -> vector<8x1xf32>
    %98 = vector.broadcast %97 : vector<8x1xf32> to vector<8x8xf32>
    %99 = arith.mulf %94, %98 : vector<8x8xf32>
    %cst_77 = arith.constant dense<0.000000e+00> : vector<8x8xf32>
    %100 = tpu.matmul %99, %88, %cst_77 {dimension_numbers = #tpu.dot_dimension_numbers<[1], [0], [0], [1], [0, 0, 1, 1], [], []>} : vector<8x8xf32>, vector<8x8xf32>, vector<8x8xf32> -> vector<8x8xf32>
    %c3_78 = arith.constant 3 : index
    %c0_79 = arith.constant 0 : index
    %c0_80 = arith.constant 0 : index
    %101 = vector.load %arg6[%c3_78, %c0_79, %c0_80] : memref<4x8x128xf32, #tpu.memory_space<vmem>>, vector<1x8x128xf32>
    %102 = vector.shape_cast %101 : vector<1x8x128xf32> to vector<8x128xf32>
    %cst_81 = arith.constant dense<0.000000e+00> : vector<8x128xf32>
    %103 = tpu.matmul %100, %102, %cst_81 {dimension_numbers = #tpu.dot_dimension_numbers<[1], [0], [0], [1], [0, 0, 1, 1], [], []>} : vector<8x8xf32>, vector<8x128xf32>, vector<8x128xf32> -> vector<8x128xf32>
    %104 = arith.addf %79, %103 : vector<8x128xf32>
    %c0_82 = arith.constant 0 : index
    %c0_83 = arith.constant 0 : index
    %105 = vector.load %arg7[%c0_82, %c0_83] : memref<128x128xf32, #tpu.memory_space<vmem>>, vector<128x128xf32>
    %cst_84 = arith.constant dense<0.000000e+00> : vector<8x128xf32>
    %106 = tpu.matmul %104, %105, %cst_84 {dimension_numbers = #tpu.dot_dimension_numbers<[1], [0], [0], [1], [0, 0, 1, 1], [], []>} : vector<8x128xf32>, vector<128x128xf32>, vector<8x128xf32> -> vector<8x128xf32>
    %c0_85 = arith.constant 0 : index
    %c0_86 = arith.constant 0 : index
    %107 = vector.load %arg8[%c0_85, %c0_86] : memref<1x128xf32, #tpu.memory_space<vmem>>, vector<1x128xf32>
    %108 = vector.broadcast %107 : vector<1x128xf32> to vector<8x128xf32>
    %109 = arith.addf %106, %108 : vector<8x128xf32>
    %c0_87 = arith.constant 0 : index
    %c0_88 = arith.constant 0 : index
    %c0_89 = arith.constant 0 : index
    %110 = vector.load %arg9[%c0_87, %c0_88, %c0_89] : memref<1x8x128xf32, #tpu.memory_space<vmem>>, vector<1x8x128xf32>
    %111 = vector.shape_cast %110 : vector<1x8x128xf32> to vector<8x128xf32>
    %112 = vector.shape_cast %109 : vector<8x128xf32> to vector<1x8x128xf32>
    tpu.vector_store %arg9[%c0_87, %c0_88, %c0_89], %112 {strides = array<i32>} : memref<1x8x128xf32, #tpu.memory_space<vmem>>, vector<1x8x128xf32>,
    return
  }
  func.func @transform_0(%arg0: i32) -> (i32, i32, i32) {
    %c0_i32 = arith.constant 0 : i32
    %c0_i32_0 = arith.constant 0 : i32
    %c0_i32_1 = arith.constant 0 : i32
    return %arg0, %c0_i32, %c0_i32_0 : i32, i32, i32
  }
  func.func @transform_1(%arg0: i32) -> (i32, i32, i32) {
    %c0_i32 = arith.constant 0 : i32
    %c0_i32_0 = arith.constant 0 : i32
    %c0_i32_1 = arith.constant 0 : i32
    return %arg0, %c0_i32, %c0_i32_0 : i32, i32, i32
  }
  func.func @transform_2(%arg0: i32) -> (i32, i32, i32) {
    %c0_i32 = arith.constant 0 : i32
    %c0_i32_0 = arith.constant 0 : i32
    %c0_i32_1 = arith.constant 0 : i32
    %c0_i32_2 = arith.constant 0 : i32
    return %c0_i32, %c0_i32_0, %c0_i32_1 : i32, i32, i32
  }
  func.func @transform_3(%arg0: i32) -> (i32, i32, i32) {
    %c0_i32 = arith.constant 0 : i32
    %c0_i32_0 = arith.constant 0 : i32
    %c0_i32_1 = arith.constant 0 : i32
    %c0_i32_2 = arith.constant 0 : i32
    return %c0_i32, %c0_i32_0, %c0_i32_1 : i32, i32, i32
  }
  func.func @transform_4(%arg0: i32) -> (i32, i32, i32) {
    %c0_i32 = arith.constant 0 : i32
    %c0_i32_0 = arith.constant 0 : i32
    %c0_i32_1 = arith.constant 0 : i32
    %c0_i32_2 = arith.constant 0 : i32
    return %c0_i32, %c0_i32_0, %c0_i32_1 : i32, i32, i32
  }
  func.func @transform_5(%arg0: i32) -> (i32, i32, i32) {
    %c0_i32 = arith.constant 0 : i32
    %c0_i32_0 = arith.constant 0 : i32
    %c0_i32_1 = arith.constant 0 : i32
    %c0_i32_2 = arith.constant 0 : i32
    return %c0_i32, %c0_i32_0, %c0_i32_1 : i32, i32, i32
  }
  func.func @transform_6(%arg0: i32) -> (i32, i32) {
    %c0_i32 = arith.constant 0 : i32
    %c0_i32_0 = arith.constant 0 : i32
    %c0_i32_1 = arith.constant 0 : i32
    return %c0_i32, %c0_i32_0 : i32, i32
  }
  func.func @transform_7(%arg0: i32) -> (i32, i32) {
    %c0_i32 = arith.constant 0 : i32
    %c0_i32_0 = arith.constant 0 : i32
    %c0_i32_1 = arith.constant 0 : i32
    return %c0_i32, %c0_i32_0 : i32, i32
  }
  func.func @transform_8(%arg0: i32) -> (i32, i32, i32) {
    %c0_i32 = arith.constant 0 : i32
    %c0_i32_0 = arith.constant 0 : i32
    %c0_i32_1 = arith.constant 0 : i32
    return %arg0, %c0_i32, %c0_i32_0 : i32, i32, i32
  }
}

</mosaic_0001>

<llo_original>
// kernel: transf_enc_dec_apply.3
$region0: #{transf_enc_dec_apply.3}
  #allocation0 [shape = 'u32[]', space=smem, size = 0x4, offset = 0x4, fixed_abs, tag = 'smem constant byte address 0x4 - core index']
  #allocation1 [shape = 'u32[144,128]{1,0:T(1,128)}', space=vmem, size = 0x12000, scoped, tag = 'internal scratch']
  %s0 = inlined_call_operand.vmem [shape: f32[2,8,128], index: 0, kind: input, shape index: {}]
  %s1 = inlined_call_operand.vmem [shape: f32[4,128,8], index: 1, kind: input, shape index: {}]
  %s2 = inlined_call_operand.vmem [shape: f32[4,128,8], index: 2, kind: input, shape index: {}]
  %s3 = inlined_call_operand.vmem [shape: f32[4,128,8], index: 3, kind: input, shape index: {}]
  %s4 = inlined_call_operand.vmem [shape: f32[4,8,128], index: 4, kind: input, shape index: {}]
  %s5 = inlined_call_operand.vmem [shape: f32[1,128], index: 5, kind: input, shape index: {}]
  %s6 = inlined_call_operand.vmem [shape: f32[1,128], index: 6, kind: input, shape index: {}]
  %s7 = inlined_call_operand.vmem [shape: f32[128,128], index: 7, kind: input, shape index: {}]
  %s8 = inlined_call_operand.vmem [shape: f32[1,128], index: 8, kind: input, shape index: {}]
  %s9 = inlined_call_operand.vmem [shape: f32[128,128], index: 9, kind: input, shape index: {}]
  %s10 = inlined_call_operand.vmem [shape: f32[1,128], index: 10, kind: input, shape index: {}]
  %s11 = inlined_call_operand.vmem [shape: f32[1,128], index: 11, kind: input, shape index: {}]
  %s12 = inlined_call_operand.vmem [shape: f32[1,128], index: 12, kind: input, shape index: {}]
  %s13 = inlined_call_operand.vmem [shape: f32[2,8,128], index: 13, kind: output, shape index: {}]
  %s14 = sld [smem:[#allocation0]]
  $region85: #{transf_enc_dec_apply.3} parent=0
    _
  %s16 = ssub.s32 1, %s14
  %s17 = scalar_select 0, %s16, %s14
  loop: start=0, step=1, limit=4
  $region2: #{transf_enc_dec_apply.3} parent=0 // loop_pre_header
    _
  $region3: #{transf_enc_dec_apply.3} parent=0 // loop_header
    %s19 = sphi 0, %s23
    %p20 = scmp.ge.s32.totalorder %s19, 4
    %s29 = sphi 0, %s31
    %s32 = sphi 0, %s29
    %s33 = sphi 0, %s32
    %s49 = sphi 0, %s33
    %s53 = sphi 0, %s53
    %s55 = sphi 0, %s53
    %s56 = sphi 0, %s55
    %s70 = sphi 0, %s56
    %s74 = sphi 0, %s74
    %s76 = sphi 0, %s74
    %s77 = sphi 0, %s76
    %s91 = sphi 0, %s77
    %s95 = sphi 0, %s95
    %s97 = sphi 0, %s95
    %s98 = sphi 0, %s97
    %s112 = sphi 0, %s98
    %s116 = sphi 0, %s116
    %s118 = sphi 0, %s116
    %s119 = sphi 0, %s118
    %s133 = sphi 0, %s119
    %s137 = sphi 0, %s137
    %s139 = sphi 0, %s137
    %s140 = sphi 0, %s139
    %s154 = sphi 0, %s140
    %s158 = sphi 0, %s158
    %s160 = sphi 0, %s158
    %s161 = sphi 0, %s160
    %s175 = sphi 0, %s161
    %s179 = sphi 0, %s179
    %s181 = sphi 0, %s179
    %s182 = sphi 0, %s181
    %s196 = sphi 0, %s182
    %s200 = sphi 0, %s200
    %s202 = sphi 0, %s200
    %s203 = sphi 0, %s202
    %s217 = sphi 0, %s203
    %s221 = sphi 0, %s221
    %s223 = sphi 0, %s221
    %s224 = sphi 0, %s223
    %s238 = sphi 0, %s224
    %s242 = sphi 0, %s242
    %s244 = sphi 0, %s242
    %s245 = sphi 0, %s244
    %s259 = sphi 0, %s245
    %s263 = sphi 0, %s263
    %s265 = sphi 0, %s263
    %s266 = sphi 0, %s265
    %s280 = sphi 0, %s266
    %s284 = sphi 0, %s284
    %s286 = sphi 0, %s284
    %s287 = sphi 0, %s286
    %s301 = sphi 0, %s287
    %s307 = sphi 0, %s309
    %s310 = sphi 0, %s307
    %s311 = sphi 0, %s310
    %s327 = sphi 0, %s311
  $region4: #{transf_enc_dec_apply.3} parent=0 // loop_header_branch
    %22 = sbr.rel (%p20) target = $region8
  $region5: #{transf_enc_dec_apply.3} parent=0 // loop_body
    %s24 = ssub.s32 %s19, 1
    %s25 = ssub.s32 %s19, 2
    %s26 = sadd.s32 %s19, 1
    %s27 = ssub.s32 %s19, %s26
    %p28 = scmp.eq.s32.totalorder %s27, 0
    %s30 = sadd.s32 %s29, 1
    %s31 = scalar_select %p28, %s29, %s30
    %p34 = pneg %p28
    %p35 = scmp.eq.s32.totalorder %s19, 1
    %p36 = por %p34, %p35
    %p37 = scmp.ne.s32.totalorder %s29, %s32
    %p38 = scmp.eq.s32.totalorder %s19, 0
    %p39 = por %p37, %p38
    %p40 = scmp.ne.s32.totalorder %s29, %s32
    %p41 = scmp.eq.s32.totalorder %s24, 1
    %p42 = por %p40, %p41
    %p43 = scmp.ne.s32.totalorder %s32, %s33
    %p44 = scmp.eq.s32.totalorder %s24, 0
    %p45 = por %p43, %p44
    %p46 = scmp.ne.s32.totalorder %s32, %s33
    %p47 = scmp.eq.s32.totalorder %s25, 1
    %p48 = por %p46, %p47
    %p50 = scmp.ne.s32.totalorder %s33, %s49
    %p51 = scmp.eq.s32.totalorder %s25, 0
    %p52 = por %p50, %p51
    %s54 = sadd.s32 %s53, 1
    %p57 = scmp.eq.s32.totalorder %s19, 1
    %p58 = scmp.ne.s32.totalorder %s53, %s55
    %p59 = scmp.eq.s32.totalorder %s19, 0
    %p60 = por %p58, %p59
    %p61 = scmp.ne.s32.totalorder %s53, %s55
    %p62 = scmp.eq.s32.totalorder %s24, 1
    %p63 = por %p61, %p62
    %p64 = scmp.ne.s32.totalorder %s55, %s56
    %p65 = scmp.eq.s32.totalorder %s24, 0
    %p66 = por %p64, %p65
    %p67 = scmp.ne.s32.totalorder %s55, %s56
    %p68 = scmp.eq.s32.totalorder %s25, 1
    %p69 = por %p67, %p68
    %p71 = scmp.ne.s32.totalorder %s56, %s70
    %p72 = scmp.eq.s32.totalorder %s25, 0
    %p73 = por %p71, %p72
    %s75 = sadd.s32 %s74, 1
    %p78 = scmp.eq.s32.totalorder %s19, 1
    %p79 = scmp.ne.s32.totalorder %s74, %s76
    %p80 = scmp.eq.s32.totalorder %s19, 0
    %p81 = por %p79, %p80
    %p82 = scmp.ne.s32.totalorder %s74, %s76
    %p83 = scmp.eq.s32.totalorder %s24, 1
    %p84 = por %p82, %p83
    %p85 = scmp.ne.s32.totalorder %s76, %s77
    %p86 = scmp.eq.s32.totalorder %s24, 0
    %p87 = por %p85, %p86
    %p88 = scmp.ne.s32.totalorder %s76, %s77
    %p89 = scmp.eq.s32.totalorder %s25, 1
    %p90 = por %p88, %p89
    %p92 = scmp.ne.s32.totalorder %s77, %s91
    %p93 = scmp.eq.s32.totalorder %s25, 0
    %p94 = por %p92, %p93
    %s96 = sadd.s32 %s95, 1
    %p99 = scmp.eq.s32.totalorder %s19, 1
    %p100 = scmp.ne.s32.totalorder %s95, %s97
    %p101 = scmp.eq.s32.totalorder %s19, 0
    %p102 = por %p100, %p101
    %p103 = scmp.ne.s32.totalorder %s95, %s97
    %p104 = scmp.eq.s32.totalorder %s24, 1
    %p105 = por %p103, %p104
    %p106 = scmp.ne.s32.totalorder %s97, %s98
    %p107 = scmp.eq.s32.totalorder %s24, 0
    %p108 = por %p106, %p107
    %p109 = scmp.ne.s32.totalorder %s97, %s98
    %p110 = scmp.eq.s32.totalorder %s25, 1
    %p111 = por %p109, %p110
    %p113 = scmp.ne.s32.totalorder %s98, %s112
    %p114 = scmp.eq.s32.totalorder %s25, 0
    %p115 = por %p113, %p114
    %s117 = sadd.s32 %s116, 1
    %p120 = scmp.eq.s32.totalorder %s19, 1
    %p121 = scmp.ne.s32.totalorder %s116, %s118
    %p122 = scmp.eq.s32.totalorder %s19, 0
    %p123 = por %p121, %p122
    %p124 = scmp.ne.s32.totalorder %s116, %s118
    %p125 = scmp.eq.s32.totalorder %s24, 1
    %p126 = por %p124, %p125
    %p127 = scmp.ne.s32.totalorder %s118, %s119
    %p128 = scmp.eq.s32.totalorder %s24, 0
    %p129 = por %p127, %p128
    %p130 = scmp.ne.s32.totalorder %s118, %s119
    %p131 = scmp.eq.s32.totalorder %s25, 1
    %p132 = por %p130, %p131
    %p134 = scmp.ne.s32.totalorder %s119, %s133
    %p135 = scmp.eq.s32.totalorder %s25, 0
    %p136 = por %p134, %p135
    %s138 = sadd.s32 %s137, 1
    %p141 = scmp.eq.s32.totalorder %s19, 1
    %p142 = scmp.ne.s32.totalorder %s137, %s139
    %p143 = scmp.eq.s32.totalorder %s19, 0
    %p144 = por %p142, %p143
    %p145 = scmp.ne.s32.totalorder %s137, %s139
    %p146 = scmp.eq.s32.totalorder %s24, 1
    %p147 = por %p145, %p146
    %p148 = scmp.ne.s32.totalorder %s139, %s140
    %p149 = scmp.eq.s32.totalorder %s24, 0
    %p150 = por %p148, %p149
    %p151 = scmp.ne.s32.totalorder %s139, %s140
    %p152 = scmp.eq.s32.totalorder %s25, 1
    %p153 = por %p151, %p152
    %p155 = scmp.ne.s32.totalorder %s140, %s154
    %p156 = scmp.eq.s32.totalorder %s25, 0
    %p157 = por %p155, %p156
    %s159 = sadd.s32 %s158, 1
    %p162 = scmp.eq.s32.totalorder %s19, 1
    %p163 = scmp.ne.s32.totalorder %s158, %s160
    %p164 = scmp.eq.s32.totalorder %s19, 0
    %p165 = por %p163, %p164
    %p166 = scmp.ne.s32.totalorder %s158, %s160
    %p167 = scmp.eq.s32.totalorder %s24, 1
    %p168 = por %p166, %p167
    %p169 = scmp.ne.s32.totalorder %s160, %s161
    %p170 = scmp.eq.s32.totalorder %s24, 0
    %p171 = por %p169, %p170
    %p172 = scmp.ne.s32.totalorder %s160, %s161
    %p173 = scmp.eq.s32.totalorder %s25, 1
    %p174 = por %p172, %p173
    %p176 = scmp.ne.s32.totalorder %s161, %s175
    %p177 = scmp.eq.s32.totalorder %s25, 0
    %p178 = por %p176, %p177
    %s180 = sadd.s32 %s179, 1
    %p183 = scmp.eq.s32.totalorder %s19, 1
    %p184 = scmp.ne.s32.totalorder %s179, %s181
    %p185 = scmp.eq.s32.totalorder %s19, 0
    %p186 = por %p184, %p185
    %p187 = scmp.ne.s32.totalorder %s179, %s181
    %p188 = scmp.eq.s32.totalorder %s24, 1
    %p189 = por %p187, %p188
    %p190 = scmp.ne.s32.totalorder %s181, %s182
    %p191 = scmp.eq.s32.totalorder %s24, 0
    %p192 = por %p190, %p191
    %p193 = scmp.ne.s32.totalorder %s181, %s182
    %p194 = scmp.eq.s32.totalorder %s25, 1
    %p195 = por %p193, %p194
    %p197 = scmp.ne.s32.totalorder %s182, %s196
    %p198 = scmp.eq.s32.totalorder %s25, 0
    %p199 = por %p197, %p198
    %s201 = sadd.s32 %s200, 1
    %p204 = scmp.eq.s32.totalorder %s19, 1
    %p205 = scmp.ne.s32.totalorder %s200, %s202
    %p206 = scmp.eq.s32.totalorder %s19, 0
    %p207 = por %p205, %p206
    %p208 = scmp.ne.s32.totalorder %s200, %s202
    %p209 = scmp.eq.s32.totalorder %s24, 1
    %p210 = por %p208, %p209
    %p211 = scmp.ne.s32.totalorder %s202, %s203
    %p212 = scmp.eq.s32.totalorder %s24, 0
    %p213 = por %p211, %p212
    %p214 = scmp.ne.s32.totalorder %s202, %s203
    %p215 = scmp.eq.s32.totalorder %s25, 1
    %p216 = por %p214, %p215
    %p218 = scmp.ne.s32.totalorder %s203, %s217
    %p219 = scmp.eq.s32.totalorder %s25, 0
    %p220 = por %p218, %p219
    %s222 = sadd.s32 %s221, 1
    %p225 = scmp.eq.s32.totalorder %s19, 1
    %p226 = scmp.ne.s32.totalorder %s221, %s223
    %p227 = scmp.eq.s32.totalorder %s19, 0
    %p228 = por %p226, %p227
    %p229 = scmp.ne.s32.totalorder %s221, %s223
    %p230 = scmp.eq.s32.totalorder %s24, 1
    %p231 = por %p229, %p230
    %p232 = scmp.ne.s32.totalorder %s223, %s224
    %p233 = scmp.eq.s32.totalorder %s24, 0
    %p234 = por %p232, %p233
    %p235 = scmp.ne.s32.totalorder %s223, %s224
    %p236 = scmp.eq.s32.totalorder %s25, 1
    %p237 = por %p235, %p236
    %p239 = scmp.ne.s32.totalorder %s224, %s238
    %p240 = scmp.eq.s32.totalorder %s25, 0
    %p241 = por %p239, %p240
    %s243 = sadd.s32 %s242, 1
    %p246 = scmp.eq.s32.totalorder %s19, 1
    %p247 = scmp.ne.s32.totalorder %s242, %s244
    %p248 = scmp.eq.s32.totalorder %s19, 0
    %p249 = por %p247, %p248
    %p250 = scmp.ne.s32.totalorder %s242, %s244
    %p251 = scmp.eq.s32.totalorder %s24, 1
    %p252 = por %p250, %p251
    %p253 = scmp.ne.s32.totalorder %s244, %s245
    %p254 = scmp.eq.s32.totalorder %s24, 0
    %p255 = por %p253, %p254
    %p256 = scmp.ne.s32.totalorder %s244, %s245
    %p257 = scmp.eq.s32.totalorder %s25, 1
    %p258 = por %p256, %p257
    %p260 = scmp.ne.s32.totalorder %s245, %s259
    %p261 = scmp.eq.s32.totalorder %s25, 0
    %p262 = por %p260, %p261
    %s264 = sadd.s32 %s263, 1
    %p267 = scmp.eq.s32.totalorder %s19, 1
    %p268 = scmp.ne.s32.totalorder %s263, %s265
    %p269 = scmp.eq.s32.totalorder %s19, 0
    %p270 = por %p268, %p269
    %p271 = scmp.ne.s32.totalorder %s263, %s265
    %p272 = scmp.eq.s32.totalorder %s24, 1
    %p273 = por %p271, %p272
    %p274 = scmp.ne.s32.totalorder %s265, %s266
    %p275 = scmp.eq.s32.totalorder %s24, 0
    %p276 = por %p274, %p275
    %p277 = scmp.ne.s32.totalorder %s265, %s266
    %p278 = scmp.eq.s32.totalorder %s25, 1
    %p279 = por %p277, %p278
    %p281 = scmp.ne.s32.totalorder %s266, %s280
    %p282 = scmp.eq.s32.totalorder %s25, 0
    %p283 = por %p281, %p282
    %s285 = sadd.s32 %s284, 1
    %p288 = scmp.eq.s32.totalorder %s19, 1
    %p289 = scmp.ne.s32.totalorder %s284, %s286
    %p290 = scmp.eq.s32.totalorder %s19, 0
    %p291 = por %p289, %p290
    %p292 = scmp.ne.s32.totalorder %s284, %s286
    %p293 = scmp.eq.s32.totalorder %s24, 1
    %p294 = por %p292, %p293
    %p295 = scmp.ne.s32.totalorder %s286, %s287
    %p296 = scmp.eq.s32.totalorder %s24, 0
    %p297 = por %p295, %p296
    %p298 = scmp.ne.s32.totalorder %s286, %s287
    %p299 = scmp.eq.s32.totalorder %s25, 1
    %p300 = por %p298, %p299
    %p302 = scmp.ne.s32.totalorder %s287, %s301
    %p303 = scmp.eq.s32.totalorder %s25, 0
    %p304 = por %p302, %p303
    %s305 = ssub.s32 %s19, %s26
    %p306 = scmp.eq.s32.totalorder %s305, 0
    %s308 = sadd.s32 %s307, 1
    %s309 = scalar_select %p306, %s307, %s308
    %p312 = pneg %p306
    %p313 = scmp.eq.s32.totalorder %s19, 1
    %p314 = por %p312, %p313
    %p315 = scmp.ne.s32.totalorder %s307, %s310
    %p316 = scmp.eq.s32.totalorder %s19, 0
    %p317 = por %p315, %p316
    %p318 = scmp.ne.s32.totalorder %s307, %s310
    %p319 = scmp.eq.s32.totalorder %s24, 1
    %p320 = por %p318, %p319
    %p321 = scmp.ne.s32.totalorder %s310, %s311
    %p322 = scmp.eq.s32.totalorder %s24, 0
    %p323 = por %p321, %p322
    %p324 = scmp.ne.s32.totalorder %s310, %s311
    %p325 = scmp.eq.s32.totalorder %s25, 1
    %p326 = por %p324, %p325
    %p328 = scmp.ne.s32.totalorder %s311, %s327
    %p329 = scmp.eq.s32.totalorder %s25, 0
    %p330 = por %p328, %p329
    %p331 = scmp.le.s32.totalorder 1, %s19
    %p332 = scmp.lt.s32.totalorder %s19, 3
    %p333 = pnand %p331, %p332
    %p334 = pneg %p333
    // Predicated region
    $region9: #{transf_enc_dec_apply.3} parent=5 // pred_check
      _
    $region10: #{transf_enc_dec_apply.3} parent=5 // pred_check_branch
      %336 = sbr.rel (%p333) target = $region12
    $region11: #{transf_enc_dec_apply.3} parent=5 // pred_region
      %s337 = ssub.s32 %s19, 1
      // Predicated region
      $region13: #{transf_enc_dec_apply.3} parent=11 // pred_check
        %p338 = pneg %p66
      $region14: #{transf_enc_dec_apply.3} parent=11 // pred_check_branch
        %340 = sbr.rel (%p338) target = $region16
      $region15: #{transf_enc_dec_apply.3} parent=11 // pred_region
        _
      $region16: #{transf_enc_dec_apply.3} parent=11 // pred_fallthru
        _
      // Predicated region
      $region17: #{transf_enc_dec_apply.3} parent=11 // pred_check
        %p341 = pneg %p87
      $region18: #{transf_enc_dec_apply.3} parent=11 // pred_check_branch
        %343 = sbr.rel (%p341) target = $region20
      $region19: #{transf_enc_dec_apply.3} parent=11 // pred_region
        _
      $region20: #{transf_enc_dec_apply.3} parent=11 // pred_fallthru
        _
      // Predicated region
      $region21: #{transf_enc_dec_apply.3} parent=11 // pred_check
        %p344 = pneg %p108
      $region22: #{transf_enc_dec_apply.3} parent=11 // pred_check_branch
        %346 = sbr.rel (%p344) target = $region24
      $region23: #{transf_enc_dec_apply.3} parent=11 // pred_region
        _
      $region24: #{transf_enc_dec_apply.3} parent=11 // pred_fallthru
        _
      // Predicated region
      $region25: #{transf_enc_dec_apply.3} parent=11 // pred_check
        %p347 = pneg %p129
      $region26: #{transf_enc_dec_apply.3} parent=11 // pred_check_branch
        %349 = sbr.rel (%p347) target = $region28
      $region27: #{transf_enc_dec_apply.3} parent=11 // pred_region
        _
      $region28: #{transf_enc_dec_apply.3} parent=11 // pred_fallthru
        _
      // Predicated region
      $region29: #{transf_enc_dec_apply.3} parent=11 // pred_check
        %p350 = pneg %p150
      $region30: #{transf_enc_dec_apply.3} parent=11 // pred_check_branch
        %352 = sbr.rel (%p350) target = $region32
      $region31: #{transf_enc_dec_apply.3} parent=11 // pred_region
        _
      $region32: #{transf_enc_dec_apply.3} parent=11 // pred_fallthru
        _
      // Predicated region
      $region33: #{transf_enc_dec_apply.3} parent=11 // pred_check
        %p353 = pneg %p171
      $region34: #{transf_enc_dec_apply.3} parent=11 // pred_check_branch
        %355 = sbr.rel (%p353) target = $region36
      $region35: #{transf_enc_dec_apply.3} parent=11 // pred_region
        _
      $region36: #{transf_enc_dec_apply.3} parent=11 // pred_fallthru
        _
      // Predicated region
      $region37: #{transf_enc_dec_apply.3} parent=11 // pred_check
        %p356 = pneg %p192
      $region38: #{transf_enc_dec_apply.3} parent=11 // pred_check_branch
        %358 = sbr.rel (%p356) target = $region40
      $region39: #{transf_enc_dec_apply.3} parent=11 // pred_region
        _
      $region40: #{transf_enc_dec_apply.3} parent=11 // pred_fallthru
        _
      // Predicated region
      $region41: #{transf_enc_dec_apply.3} parent=11 // pred_check
        %p359 = pneg %p213
      $region42: #{transf_enc_dec_apply.3} parent=11 // pred_check_branch
        %361 = sbr.rel (%p359) target = $region44
      $region43: #{transf_enc_dec_apply.3} parent=11 // pred_region
        _
      $region44: #{transf_enc_dec_apply.3} parent=11 // pred_fallthru
        _
      // Predicated region
      $region45: #{transf_enc_dec_apply.3} parent=11 // pred_check
        %p362 = pneg %p234
      $region46: #{transf_enc_dec_apply.3} parent=11 // pred_check_branch
        %364 = sbr.rel (%p362) target = $region48
      $region47: #{transf_enc_dec_apply.3} parent=11 // pred_region
        _
      $region48: #{transf_enc_dec_apply.3} parent=11 // pred_fallthru
        _
      // Predicated region
      $region49: #{transf_enc_dec_apply.3} parent=11 // pred_check
        %p365 = pneg %p255
      $region50: #{transf_enc_dec_apply.3} parent=11 // pred_check_branch
        %367 = sbr.rel (%p365) target = $region52
      $region51: #{transf_enc_dec_apply.3} parent=11 // pred_region
        _
      $region52: #{transf_enc_dec_apply.3} parent=11 // pred_fallthru
        _
      // Predicated region
      $region53: #{transf_enc_dec_apply.3} parent=11 // pred_check
        %p368 = pneg %p276
      $region54: #{transf_enc_dec_apply.3} parent=11 // pred_check_branch
        %370 = sbr.rel (%p368) target = $region56
      $region55: #{transf_enc_dec_apply.3} parent=11 // pred_region
        _
      $region56: #{transf_enc_dec_apply.3} parent=11 // pred_fallthru
        _
      // Predicated region
      $region57: #{transf_enc_dec_apply.3} parent=11 // pred_check
        %p371 = pneg %p297
      $region58: #{transf_enc_dec_apply.3} parent=11 // pred_check_branch
        %373 = sbr.rel (%p371) target = $region60
      $region59: #{transf_enc_dec_apply.3} parent=11 // pred_region
        _
      $region60: #{transf_enc_dec_apply.3} parent=11 // pred_fallthru
        _
    $region12: #{transf_enc_dec_apply.3} parent=5 // pred_fallthru
      _
    %p374 = scmp.lt.s32.totalorder %s19, 2
    // Predicated region
    $region61: #{transf_enc_dec_apply.3} parent=5 // pred_check
      %p375 = pneg %p374
    $region62: #{transf_enc_dec_apply.3} parent=5 // pred_check_branch
      %377 = sbr.rel (%p375) target = $region64
    $region63: #{transf_enc_dec_apply.3} parent=5 // pred_region
      // Predicated region
      $region65: #{transf_enc_dec_apply.3} parent=63 // pred_check
        %p378 = pneg %p39
      $region66: #{transf_enc_dec_apply.3} parent=63 // pred_check_branch
        %380 = sbr.rel (%p378) target = $region68
      $region67: #{transf_enc_dec_apply.3} parent=63 // pred_region
        %p381 = scmp.lt.s32.totalorder %s19, 1
        %s382 = scalar_select %p381, %s19, 1
        %s383 = smul.addr %s382, 8
        %s384 = scalar_lea.vmem %s0, %s383
      $region68: #{transf_enc_dec_apply.3} parent=63 // pred_fallthru
        _
    $region64: #{transf_enc_dec_apply.3} parent=5 // pred_fallthru
      _
    %p385 = scmp.le.s32.totalorder 1, %s19
    %p386 = scmp.lt.s32.totalorder %s19, 3
    %p387 = pnand %p385, %p386
    %p388 = pneg %p387
    // Predicated region
    $region69: #{transf_enc_dec_apply.3} parent=5 // pred_check
      _
    $region70: #{transf_enc_dec_apply.3} parent=5 // pred_check_branch
      %390 = sbr.rel (%p387) target = $region72
    $region71: #{transf_enc_dec_apply.3} parent=5 // pred_region
      %s391 = ssub.s32 %s19, 1
      %p392 = scmp.lt.s32.totalorder %s24, 1
      %s393 = scalar_select %p392, %s24, 1
      %s394 = smul.addr %s393, 8
      %s395 = scalar_lea.vmem %s0, %s394
      %p396 = pneg %p45
      %p397 = pneg %p42
      %p398 = pneg %p66
      %p399 = pneg %p63
      %p400 = pneg %p87
      %p401 = pneg %p84
      %p402 = pneg %p108
      %p403 = pneg %p105
      %p404 = pneg %p129
      %p405 = pneg %p126
      %p406 = pneg %p150
      %p407 = pneg %p147
      %p408 = pneg %p171
      %p409 = pneg %p168
      %p410 = pneg %p192
      %p411 = pneg %p189
      %p412 = pneg %p213
      %p413 = pneg %p210
      %p414 = pneg %p234
      %p415 = pneg %p231
      %p416 = pneg %p255
      %p417 = pneg %p252
      %p418 = pneg %p276
      %p419 = pneg %p273
      %p420 = pneg %p297
      %p421 = pneg %p294
      %p422 = pneg %p323
      %p423 = pneg %p320
      %p424 = scmp.lt.s32.totalorder %s24, 1
      %s425 = scalar_select %p424, %s24, 1
      %s426 = smul.addr %s425, 8
      %s427 = scalar_lea.vmem %s13, %s426
      %p428 = scmp.lt.s32.totalorder %s24, 1
      %s429 = scalar_select %p428, %s24, 1
      %s430 = smul.addr %s429, 8
      %s431 = scalar_lea.vmem %s0, %s430
      %p432 = scmp.lt.s32.totalorder %s24, 1
      %s433 = scalar_select %p432, %s24, 1
      %s434 = smul.addr %s433, 8
      %s435 = scalar_lea.vmem %s13, %s434
      %v436 = vld [vmem:[%s431] sm:$0xff]
      %v437 = vld [vmem:[%s1] sm:$0xff]
      %v438 = vld [vmem:[%s1 + $0x8] sm:$0xff]
      %v439 = vld [vmem:[%s1 + $0x10] sm:$0xff]
      %v440 = vld [vmem:[%s1 + $0x18] sm:$0xff]
      %v441 = vld [vmem:[%s1 + $0x20] sm:$0xff]
      %v442 = vld [vmem:[%s1 + $0x28] sm:$0xff]
      %v443 = vld [vmem:[%s1 + $0x30] sm:$0xff]
      %v444 = vld [vmem:[%s1 + $0x38] sm:$0xff]
      %v445 = vld [vmem:[%s1 + $0x40] sm:$0xff]
      %v446 = vld [vmem:[%s1 + $0x48] sm:$0xff]
      %v447 = vld [vmem:[%s1 + $0x50] sm:$0xff]
      %v448 = vld [vmem:[%s1 + $0x58] sm:$0xff]
      %v449 = vld [vmem:[%s1 + $0x60] sm:$0xff]
      %v450 = vld [vmem:[%s1 + $0x68] sm:$0xff]
      %v451 = vld [vmem:[%s1 + $0x70] sm:$0xff]
      %v452 = vld [vmem:[%s1 + $0x78] sm:$0xff]
      %453 = vmatprep.subr.mxu0 0.0
      %454 = vmatpush1.msra.mxu0 %v437
      %455 = vmatprep.subr.mxu0 0.0
      %456 = vmatpush1.msra.mxu0 %v438
      %457 = vmatprep.subr.mxu0 0.0
      %458 = vmatpush1.msra.mxu0 %v439
      %459 = vmatprep.subr.mxu0 0.0
      %460 = vmatpush1.msra.mxu0 %v440
      %461 = vmatprep.subr.mxu0 0.0
      %462 = vmatpush1.msra.mxu0 %v441
      %463 = vmatprep.subr.mxu0 0.0
      %464 = vmatpush1.msra.mxu0 %v442
      %465 = vmatprep.subr.mxu0 0.0
      %466 = vmatpush1.msra.mxu0 %v443
      %467 = vmatprep.subr.mxu0 0.0
      %468 = vmatpush1.msra.mxu0 %v444
      %469 = vmatprep.subr.mxu0 0.0
      %470 = vmatpush1.msra.mxu0 %v445
      %471 = vmatprep.subr.mxu0 0.0
      %472 = vmatpush1.msra.mxu0 %v446
      %473 = vmatprep.subr.mxu0 0.0
      %474 = vmatpush1.msra.mxu0 %v447
      %475 = vmatprep.subr.mxu0 0.0
      %476 = vmatpush1.msra.mxu0 %v448
      %477 = vmatprep.subr.mxu0 0.0
      %478 = vmatpush1.msra.mxu0 %v449
      %479 = vmatprep.subr.mxu0 0.0
      %480 = vmatpush1.msra.mxu0 %v450
      %481 = vmatprep.subr.mxu0 0.0
      %482 = vmatpush1.msra.mxu0 %v451
      %483 = vmatprep.subr.mxu0 0.0
      %484 = vmatpush1.msra.mxu0 %v452
      %485 = vmatprep.subr.mxu0 0.0
      %486 = vmatpush1.msra.mxu0 0.0
      %487 = vmatprep.subr.mxu0 0.0
      %488 = vmatpush1.msra.mxu0 0.0
      %489 = vmatprep.subr.mxu0 0.0
      %490 = vmatpush1.msra.mxu0 0.0
      %491 = vmatprep.subr.mxu0 0.0
      %492 = vmatpush1.msra.mxu0 0.0
      %493 = vmatprep.subr.mxu0 0.0
      %494 = vmatpush1.msra.mxu0 0.0
      %495 = vmatprep.subr.mxu0 0.0
      %496 = vmatpush1.msra.mxu0 0.0
      %497 = vmatprep.subr.mxu0 0.0
      %498 = vmatpush1.msra.mxu0 0.0
      %499 = vmatprep.subr.mxu0 0.0
      %500 = vmatpush1.msra.mxu0 0.0
      %501 = vmatprep.subr.mxu0 0.0
      %502 = vmatpush1.msra.mxu0 0.0
      %503 = vmatprep.subr.mxu0 0.0
      %504 = vmatpush1.msra.mxu0 0.0
      %505 = vmatprep.subr.mxu0 0.0
      %506 = vmatpush1.msra.mxu0 0.0
      %507 = vmatprep.subr.mxu0 0.0
      %508 = vmatpush1.msra.mxu0 0.0
      %509 = vmatprep.subr.mxu0 0.0
      %510 = vmatpush1.msra.mxu0 0.0
      %511 = vmatprep.subr.mxu0 0.0
      %512 = vmatpush1.msra.mxu0 0.0
      %513 = vmatprep.subr.mxu0 0.0
      %514 = vmatpush1.msra.mxu0 0.0
      %515 = vmatprep.subr.mxu0 0.0
      %516 = vmatpush1.msra.mxu0 0.0
      %517 = vmatprep.mubr.f32.mxu0 0.0
      %518 = vmatmul.mubr.f32.gmra.mrb[0].mxu0 %v436
      %v519 = vpop.f32.mrb[0].mxu0
      %v520 = vadd.f32 0.0, %v519
      %v521 = vpop.f32.mrb[0].mxu0
      %522 = vdwg.mxu0
      %v523 = vld [vmem:[%s2] sm:$0xff]
      %v524 = vld [vmem:[%s2 + $0x8] sm:$0xff]
      %v525 = vld [vmem:[%s2 + $0x10] sm:$0xff]
      %v526 = vld [vmem:[%s2 + $0x18] sm:$0xff]
      %v527 = vld [vmem:[%s2 + $0x20] sm:$0xff]
      %v528 = vld [vmem:[%s2 + $0x28] sm:$0xff]
      %v529 = vld [vmem:[%s2 + $0x30] sm:$0xff]
      %v530 = vld [vmem:[%s2 + $0x38] sm:$0xff]
      %v531 = vld [vmem:[%s2 + $0x40] sm:$0xff]
      %v532 = vld [vmem:[%s2 + $0x48] sm:$0xff]
      %v533 = vld [vmem:[%s2 + $0x50] sm:$0xff]
      %v534 = vld [vmem:[%s2 + $0x58] sm:$0xff]
      %v535 = vld [vmem:[%s2 + $0x60] sm:$0xff]
      %v536 = vld [vmem:[%s2 + $0x68] sm:$0xff]
      %v537 = vld [vmem:[%s2 + $0x70] sm:$0xff]
      %v538 = vld [vmem:[%s2 + $0x78] sm:$0xff]
      %539 = vmatprep.subr.mxu0 0.0
      %540 = vmatpush1.msra.mxu0 %v523
      %541 = vmatprep.subr.mxu0 0.0
      %542 = vmatpush1.msra.mxu0 %v524
      %543 = vmatprep.subr.mxu0 0.0
      %544 = vmatpush1.msra.mxu0 %v525
      %545 = vmatprep.subr.mxu0 0.0
      %546 = vmatpush1.msra.mxu0 %v526
      %547 = vmatprep.subr.mxu0 0.0
      %548 = vmatpush1.msra.mxu0 %v527
      %549 = vmatprep.subr.mxu0 0.0
      %550 = vmatpush1.msra.mxu0 %v528
      %551 = vmatprep.subr.mxu0 0.0
      %552 = vmatpush1.msra.mxu0 %v529
      %553 = vmatprep.subr.mxu0 0.0
      %554 = vmatpush1.msra.mxu0 %v530
      %555 = vmatprep.subr.mxu0 0.0
      %556 = vmatpush1.msra.mxu0 %v531
      %557 = vmatprep.subr.mxu0 0.0
      %558 = vmatpush1.msra.mxu0 %v532
      %559 = vmatprep.subr.mxu0 0.0
      %560 = vmatpush1.msra.mxu0 %v533
      %561 = vmatprep.subr.mxu0 0.0
      %562 = vmatpush1.msra.mxu0 %v534
      %563 = vmatprep.subr.mxu0 0.0
      %564 = vmatpush1.msra.mxu0 %v535
      %565 = vmatprep.subr.mxu0 0.0
      %566 = vmatpush1.msra.mxu0 %v536
      %567 = vmatprep.subr.mxu0 0.0
      %568 = vmatpush1.msra.mxu0 %v537
      %569 = vmatprep.subr.mxu0 0.0
      %570 = vmatpush1.msra.mxu0 %v538
      %571 = vmatprep.subr.mxu0 0.0
      %572 = vmatpush1.msra.mxu0 0.0
      %573 = vmatprep.subr.mxu0 0.0
      %574 = vmatpush1.msra.mxu0 0.0
      %575 = vmatprep.subr.mxu0 0.0
      %576 = vmatpush1.msra.mxu0 0.0
      %577 = vmatprep.subr.mxu0 0.0
      %578 = vmatpush1.msra.mxu0 0.0
      %579 = vmatprep.subr.mxu0 0.0
      %580 = vmatpush1.msra.mxu0 0.0
      %581 = vmatprep.subr.mxu0 0.0
      %582 = vmatpush1.msra.mxu0 0.0
      %583 = vmatprep.subr.mxu0 0.0
      %584 = vmatpush1.msra.mxu0 0.0
      %585 = vmatprep.subr.mxu0 0.0
      %586 = vmatpush1.msra.mxu0 0.0
      %587 = vmatprep.subr.mxu0 0.0
      %588 = vmatpush1.msra.mxu0 0.0
      %589 = vmatprep.subr.mxu0 0.0
      %590 = vmatpush1.msra.mxu0 0.0
      %591 = vmatprep.subr.mxu0 0.0
      %592 = vmatpush1.msra.mxu0 0.0
      %593 = vmatprep.subr.mxu0 0.0
      %594 = vmatpush1.msra.mxu0 0.0
      %595 = vmatprep.subr.mxu0 0.0
      %596 = vmatpush1.msra.mxu0 0.0
      %597 = vmatprep.subr.mxu0 0.0
      %598 = vmatpush1.msra.mxu0 0.0
      %599 = vmatprep.subr.mxu0 0.0
      %600 = vmatpush1.msra.mxu0 0.0
      %601 = vmatprep.subr.mxu0 0.0
      %602 = vmatpush1.msra.mxu0 0.0
      %603 = vmatprep.mubr.f32.mxu0 0.0
      %604 = vmatmul.mubr.f32.gmra.mrb[0].mxu0 %v436
      %v605 = vpop.f32.mrb[0].mxu0
      %v606 = vadd.f32 0.0, %v605
      %v607 = vpop.f32.mrb[0].mxu0
      %608 = vdwg.mxu0
      %v609 = vld [vmem:[%s3] sm:$0xff]
      %v610 = vld [vmem:[%s3 + $0x8] sm:$0xff]
      %v611 = vld [vmem:[%s3 + $0x10] sm:$0xff]
      %v612 = vld [vmem:[%s3 + $0x18] sm:$0xff]
      %v613 = vld [vmem:[%s3 + $0x20] sm:$0xff]
      %v614 = vld [vmem:[%s3 + $0x28] sm:$0xff]
      %v615 = vld [vmem:[%s3 + $0x30] sm:$0xff]
      %v616 = vld [vmem:[%s3 + $0x38] sm:$0xff]
      %v617 = vld [vmem:[%s3 + $0x40] sm:$0xff]
      %v618 = vld [vmem:[%s3 + $0x48] sm:$0xff]
      %v619 = vld [vmem:[%s3 + $0x50] sm:$0xff]
      %v620 = vld [vmem:[%s3 + $0x58] sm:$0xff]
      %v621 = vld [vmem:[%s3 + $0x60] sm:$0xff]
      %v622 = vld [vmem:[%s3 + $0x68] sm:$0xff]
      %v623 = vld [vmem:[%s3 + $0x70] sm:$0xff]
      %v624 = vld [vmem:[%s3 + $0x78] sm:$0xff]
      %625 = vmatprep.subr.mxu0 0.0
      %626 = vmatpush1.msra.mxu0 %v609
      %627 = vmatprep.subr.mxu0 0.0
      %628 = vmatpush1.msra.mxu0 %v610
      %629 = vmatprep.subr.mxu0 0.0
      %630 = vmatpush1.msra.mxu0 %v611
      %631 = vmatprep.subr.mxu0 0.0
      %632 = vmatpush1.msra.mxu0 %v612
      %633 = vmatprep.subr.mxu0 0.0
      %634 = vmatpush1.msra.mxu0 %v613
      %635 = vmatprep.subr.mxu0 0.0
      %636 = vmatpush1.msra.mxu0 %v614
      %637 = vmatprep.subr.mxu0 0.0
      %638 = vmatpush1.msra.mxu0 %v615
      %639 = vmatprep.subr.mxu0 0.0
      %640 = vmatpush1.msra.mxu0 %v616
      %641 = vmatprep.subr.mxu0 0.0
      %642 = vmatpush1.msra.mxu0 %v617
      %643 = vmatprep.subr.mxu0 0.0
      %644 = vmatpush1.msra.mxu0 %v618
      %645 = vmatprep.subr.mxu0 0.0
      %646 = vmatpush1.msra.mxu0 %v619
      %647 = vmatprep.subr.mxu0 0.0
      %648 = vmatpush1.msra.mxu0 %v620
      %649 = vmatprep.subr.mxu0 0.0
      %650 = vmatpush1.msra.mxu0 %v621
      %651 = vmatprep.subr.mxu0 0.0
      %652 = vmatpush1.msra.mxu0 %v622
      %653 = vmatprep.subr.mxu0 0.0
      %654 = vmatpush1.msra.mxu0 %v623
      %655 = vmatprep.subr.mxu0 0.0
      %656 = vmatpush1.msra.mxu0 %v624
      %657 = vmatprep.subr.mxu0 0.0
      %658 = vmatpush1.msra.mxu0 0.0
      %659 = vmatprep.subr.mxu0 0.0
      %660 = vmatpush1.msra.mxu0 0.0
      %661 = vmatprep.subr.mxu0 0.0
      %662 = vmatpush1.msra.mxu0 0.0
      %663 = vmatprep.subr.mxu0 0.0
      %664 = vmatpush1.msra.mxu0 0.0
      %665 = vmatprep.subr.mxu0 0.0
      %666 = vmatpush1.msra.mxu0 0.0
      %667 = vmatprep.subr.mxu0 0.0
      %668 = vmatpush1.msra.mxu0 0.0
      %669 = vmatprep.subr.mxu0 0.0
      %670 = vmatpush1.msra.mxu0 0.0
      %671 = vmatprep.subr.mxu0 0.0
      %672 = vmatpush1.msra.mxu0 0.0
      %673 = vmatprep.subr.mxu0 0.0
      %674 = vmatpush1.msra.mxu0 0.0
      %675 = vmatprep.subr.mxu0 0.0
      %676 = vmatpush1.msra.mxu0 0.0
      %677 = vmatprep.subr.mxu0 0.0
      %678 = vmatpush1.msra.mxu0 0.0
      %679 = vmatprep.subr.mxu0 0.0
      %680 = vmatpush1.msra.mxu0 0.0
      %681 = vmatprep.subr.mxu0 0.0
      %682 = vmatpush1.msra.mxu0 0.0
      %683 = vmatprep.subr.mxu0 0.0
      %684 = vmatpush1.msra.mxu0 0.0
      %685 = vmatprep.subr.mxu0 0.0
      %686 = vmatpush1.msra.mxu0 0.0
      %687 = vmatprep.subr.mxu0 0.0
      %688 = vmatpush1.msra.mxu0 0.0
      %689 = vmatprep.mubr.f32.mxu0 0.0
      %690 = vmatmul.mubr.f32.gmra.mrb[0].mxu0 %v436
      %v691 = vpop.f32.mrb[0].mxu0
      %v692 = vadd.f32 0.0, %v691
      %v693 = vpop.f32.mrb[0].mxu0
      %694 = vdwg.mxu0
      %vm695 = vcmask 64512
      %v697 = vsel %vm695, %v520, 0
      %v700 = vsel %vm695, %v606, 0
      %702 = vmatprep.subr.mxu0 0.0
      %703 = vmatpush1.xpose.msra.mxu0 %v700
      %704 = vmatprep.subr.mxu0 0.0
      %705 = vmatpush1.xpose.msra.mxu0 0.0
      %706 = vmatprep.subr.mxu0 0.0
      %707 = vmatpush1.xpose.msra.mxu0 0.0
      %708 = vmatprep.subr.mxu0 0.0
      %709 = vmatpush1.xpose.msra.mxu0 0.0
      %710 = vmatprep.subr.mxu0 0.0
      %711 = vmatpush1.xpose.msra.mxu0 0.0
      %712 = vmatprep.subr.mxu0 0.0
      %713 = vmatpush1.xpose.msra.mxu0 0.0
      %714 = vmatprep.subr.mxu0 0.0
      %715 = vmatpush1.xpose.msra.mxu0 0.0
      %716 = vmatprep.subr.mxu0 0.0
      %717 = vmatpush1.xpose.msra.mxu0 0.0
      %718 = vmatprep.subr.mxu0 0.0
      %719 = vmatpush1.xpose.msra.mxu0 0.0
      %720 = vmatprep.subr.mxu0 0.0
      %721 = vmatpush1.xpose.msra.mxu0 0.0
      %722 = vmatprep.subr.mxu0 0.0
      %723 = vmatpush1.xpose.msra.mxu0 0.0
      %724 = vmatprep.subr.mxu0 0.0
      %725 = vmatpush1.xpose.msra.mxu0 0.0
      %726 = vmatprep.subr.mxu0 0.0
      %727 = vmatpush1.xpose.msra.mxu0 0.0
      %728 = vmatprep.subr.mxu0 0.0
      %729 = vmatpush1.xpose.msra.mxu0 0.0
      %730 = vmatprep.subr.mxu0 0.0
      %731 = vmatpush1.xpose.msra.mxu0 0.0
      %732 = vmatprep.subr.mxu0 0.0
      %733 = vmatpush1.xpose.msra.mxu0 0.0
      %734 = vmatprep.subr.mxu0 0.0
      %735 = vmatpush1.xpose.msra.mxu0 0.0
      %736 = vmatprep.subr.mxu0 0.0
      %737 = vmatpush1.xpose.msra.mxu0 0.0
      %738 = vmatprep.subr.mxu0 0.0
      %739 = vmatpush1.xpose.msra.mxu0 0.0
      %740 = vmatprep.subr.mxu0 0.0
      %741 = vmatpush1.xpose.msra.mxu0 0.0
      %742 = vmatprep.subr.mxu0 0.0
      %743 = vmatpush1.xpose.msra.mxu0 0.0
      %744 = vmatprep.subr.mxu0 0.0
      %745 = vmatpush1.xpose.msra.mxu0 0.0
      %746 = vmatprep.subr.mxu0 0.0
      %747 = vmatpush1.xpose.msra.mxu0 0.0
      %748 = vmatprep.subr.mxu0 0.0
      %749 = vmatpush1.xpose.msra.mxu0 0.0
      %750 = vmatprep.subr.mxu0 0.0
      %751 = vmatpush1.xpose.msra.mxu0 0.0
      %752 = vmatprep.subr.mxu0 0.0
      %753 = vmatpush1.xpose.msra.mxu0 0.0
      %754 = vmatprep.subr.mxu0 0.0
      %755 = vmatpush1.xpose.msra.mxu0 0.0
      %756 = vmatprep.subr.mxu0 0.0
      %757 = vmatpush1.xpose.msra.mxu0 0.0
      %758 = vmatprep.subr.mxu0 0.0
      %759 = vmatpush1.xpose.msra.mxu0 0.0
      %760 = vmatprep.subr.mxu0 0.0
      %761 = vmatpush1.xpose.msra.mxu0 0.0
      %762 = vmatprep.subr.mxu0 0.0
      %763 = vmatpush1.xpose.msra.mxu0 0.0
      %764 = vmatprep.subr.mxu0 0.0
      %765 = vmatpush1.xpose.msra.mxu0 0.0
      %766 = vmatprep.mubr.f32.mxu0 0.0
      %767 = vmatmul.mubr.f32.gmra.mrb[0].mxu0 %v697
      %v768 = vpop.f32.mrb[0].mxu0
      %v769 = vadd.f32 0.0, %v768
      %v770 = vpop.f32.mrb[0].mxu0
      %771 = vdwg.mxu0
      %v772 = vsel %vm695, %v769, -inf
      %773 = vmax.xlane.f32.xlu0 %v772
      %v774 = vpop.xlane.xlu0 %773
      %v775 = vsub.f32 %v769, %v774
      %v776 = vmul.f32 %v775, 1.442695
      %v777 = vpow.pop %v776
      %v778 = vsel %vm695, %v777, 0.0
      %779 = vadd.xlane.f32.xlu0 %v778
      %v780 = vpop.xlane.xlu0 %779
      %v781 = vrcp.pop %v780
      %v782 = vmul.f32 %v777, %v781
      %v784 = vsel %vm695, %v782, 0
      %786 = vmatprep.subr.mxu0 0.0
      %787 = vmatpush1.msra.mxu0 %v692
      %788 = vmatprep.subr.mxu0 0.0
      %789 = vmatpush1.msra.mxu0 0.0
      %790 = vmatprep.subr.mxu0 0.0
      %791 = vmatpush1.msra.mxu0 0.0
      %792 = vmatprep.subr.mxu0 0.0
      %793 = vmatpush1.msra.mxu0 0.0
      %794 = vmatprep.subr.mxu0 0.0
      %795 = vmatpush1.msra.mxu0 0.0
      %796 = vmatprep.subr.mxu0 0.0
      %797 = vmatpush1.msra.mxu0 0.0
      %798 = vmatprep.subr.mxu0 0.0
      %799 = vmatpush1.msra.mxu0 0.0
      %800 = vmatprep.subr.mxu0 0.0
      %801 = vmatpush1.msra.mxu0 0.0
      %802 = vmatprep.subr.mxu0 0.0
      %803 = vmatpush1.msra.mxu0 0.0
      %804 = vmatprep.subr.mxu0 0.0
      %805 = vmatpush1.msra.mxu0 0.0
      %806 = vmatprep.subr.mxu0 0.0
      %807 = vmatpush1.msra.mxu0 0.0
      %808 = vmatprep.subr.mxu0 0.0
      %809 = vmatpush1.msra.mxu0 0.0
      %810 = vmatprep.subr.mxu0 0.0
      %811 = vmatpush1.msra.mxu0 0.0
      %812 = vmatprep.subr.mxu0 0.0
      %813 = vmatpush1.msra.mxu0 0.0
      %814 = vmatprep.subr.mxu0 0.0
      %815 = vmatpush1.msra.mxu0 0.0
      %816 = vmatprep.subr.mxu0 0.0
      %817 = vmatpush1.msra.mxu0 0.0
      %818 = vmatprep.subr.mxu0 0.0
      %819 = vmatpush1.msra.mxu0 0.0
      %820 = vmatprep.subr.mxu0 0.0
      %821 = vmatpush1.msra.mxu0 0.0
      %822 = vmatprep.subr.mxu0 0.0
      %823 = vmatpush1.msra.mxu0 0.0
      %824 = vmatprep.subr.mxu0 0.0
      %825 = vmatpush1.msra.mxu0 0.0
      %826 = vmatprep.subr.mxu0 0.0
      %827 = vmatpush1.msra.mxu0 0.0
      %828 = vmatprep.subr.mxu0 0.0
      %829 = vmatpush1.msra.mxu0 0.0
      %830 = vmatprep.subr.mxu0 0.0
      %831 = vmatpush1.msra.mxu0 0.0
      %832 = vmatprep.subr.mxu0 0.0
      %833 = vmatpush1.msra.mxu0 0.0
      %834 = vmatprep.subr.mxu0 0.0
      %835 = vmatpush1.msra.mxu0 0.0
      %836 = vmatprep.subr.mxu0 0.0
      %837 = vmatpush1.msra.mxu0 0.0
      %838 = vmatprep.subr.mxu0 0.0
      %839 = vmatpush1.msra.mxu0 0.0
      %840 = vmatprep.subr.mxu0 0.0
      %841 = vmatpush1.msra.mxu0 0.0
      %842 = vmatprep.subr.mxu0 0.0
      %843 = vmatpush1.msra.mxu0 0.0
      %844 = vmatprep.subr.mxu0 0.0
      %845 = vmatpush1.msra.mxu0 0.0
      %846 = vmatprep.subr.mxu0 0.0
      %847 = vmatpush1.msra.mxu0 0.0
      %848 = vmatprep.subr.mxu0 0.0
      %849 = vmatpush1.msra.mxu0 0.0
      %850 = vmatprep.mubr.f32.mxu0 0.0
      %851 = vmatmul.mubr.f32.gmra.mrb[0].mxu0 %v784
      %v852 = vpop.f32.mrb[0].mxu0
      %v853 = vadd.f32 0.0, %v852
      %v854 = vpop.f32.mrb[0].mxu0
      %855 = vdwg.mxu0
      %v856 = vld [vmem:[%s4] sm:$0xff]
      %s857 = scalar_lea.vmem %s1, 128
      %v858 = vld [vmem:[%s857] sm:$0xff]
      %v859 = vld [vmem:[%s857 + $0x8] sm:$0xff]
      %v860 = vld [vmem:[%s857 + $0x10] sm:$0xff]
      %v861 = vld [vmem:[%s857 + $0x18] sm:$0xff]
      %v862 = vld [vmem:[%s857 + $0x20] sm:$0xff]
      %v863 = vld [vmem:[%s857 + $0x28] sm:$0xff]
      %v864 = vld [vmem:[%s857 + $0x30] sm:$0xff]
      %v865 = vld [vmem:[%s857 + $0x38] sm:$0xff]
      %v866 = vld [vmem:[%s857 + $0x40] sm:$0xff]
      %v867 = vld [vmem:[%s857 + $0x48] sm:$0xff]
      %v868 = vld [vmem:[%s857 + $0x50] sm:$0xff]
      %v869 = vld [vmem:[%s857 + $0x58] sm:$0xff]
      %v870 = vld [vmem:[%s857 + $0x60] sm:$0xff]
      %v871 = vld [vmem:[%s857 + $0x68] sm:$0xff]
      %v872 = vld [vmem:[%s857 + $0x70] sm:$0xff]
      %v873 = vld [vmem:[%s857 + $0x78] sm:$0xff]
      %874 = vmatprep.subr.mxu0 0.0
      %875 = vmatpush1.msra.mxu0 %v858
      %876 = vmatprep.subr.mxu0 0.0
      %877 = vmatpush1.msra.mxu0 %v859
      %878 = vmatprep.subr.mxu0 0.0
      %879 = vmatpush1.msra.mxu0 %v860
      %880 = vmatprep.subr.mxu0 0.0
      %881 = vmatpush1.msra.mxu0 %v861
      %882 = vmatprep.subr.mxu0 0.0
      %883 = vmatpush1.msra.mxu0 %v862
      %884 = vmatprep.subr.mxu0 0.0
      %885 = vmatpush1.msra.mxu0 %v863
      %886 = vmatprep.subr.mxu0 0.0
      %887 = vmatpush1.msra.mxu0 %v864
      %888 = vmatprep.subr.mxu0 0.0
      %889 = vmatpush1.msra.mxu0 %v865
      %890 = vmatprep.subr.mxu0 0.0
      %891 = vmatpush1.msra.mxu0 %v866
      %892 = vmatprep.subr.mxu0 0.0
      %893 = vmatpush1.msra.mxu0 %v867
      %894 = vmatprep.subr.mxu0 0.0
      %895 = vmatpush1.msra.mxu0 %v868
      %896 = vmatprep.subr.mxu0 0.0
      %897 = vmatpush1.msra.mxu0 %v869
      %898 = vmatprep.subr.mxu0 0.0
      %899 = vmatpush1.msra.mxu0 %v870
      %900 = vmatprep.subr.mxu0 0.0
      %901 = vmatpush1.msra.mxu0 %v871
      %902 = vmatprep.subr.mxu0 0.0
      %903 = vmatpush1.msra.mxu0 %v872
      %904 = vmatprep.subr.mxu0 0.0
      %905 = vmatpush1.msra.mxu0 %v873
      %906 = vmatprep.subr.mxu0 0.0
      %907 = vmatpush1.msra.mxu0 0.0
      %908 = vmatprep.subr.mxu0 0.0
      %909 = vmatpush1.msra.mxu0 0.0
      %910 = vmatprep.subr.mxu0 0.0
      %911 = vmatpush1.msra.mxu0 0.0
      %912 = vmatprep.subr.mxu0 0.0
      %913 = vmatpush1.msra.mxu0 0.0
      %914 = vmatprep.subr.mxu0 0.0
      %915 = vmatpush1.msra.mxu0 0.0
      %916 = vmatprep.subr.mxu0 0.0
      %917 = vmatpush1.msra.mxu0 0.0
      %918 = vmatprep.subr.mxu0 0.0
      %919 = vmatpush1.msra.mxu0 0.0
      %920 = vmatprep.subr.mxu0 0.0
      %921 = vmatpush1.msra.mxu0 0.0
      %922 = vmatprep.subr.mxu0 0.0
      %923 = vmatpush1.msra.mxu0 0.0
      %924 = vmatprep.subr.mxu0 0.0
      %925 = vmatpush1.msra.mxu0 0.0
      %926 = vmatprep.subr.mxu0 0.0
      %927 = vmatpush1.msra.mxu0 0.0
      %928 = vmatprep.subr.mxu0 0.0
      %929 = vmatpush1.msra.mxu0 0.0
      %930 = vmatprep.subr.mxu0 0.0
      %931 = vmatpush1.msra.mxu0 0.0
      %932 = vmatprep.subr.mxu0 0.0
      %933 = vmatpush1.msra.mxu0 0.0
      %934 = vmatprep.subr.mxu0 0.0
      %935 = vmatpush1.msra.mxu0 0.0
      %936 = vmatprep.subr.mxu0 0.0
      %937 = vmatpush1.msra.mxu0 0.0
      %938 = vmatprep.mubr.f32.mxu0 0.0
      %939 = vmatmul.mubr.f32.gmra.mrb[0].mxu0 %v436
      %v940 = vpop.f32.mrb[0].mxu0
      %v941 = vadd.f32 0.0, %v940
      %v942 = vpop.f32.mrb[0].mxu0
      %943 = vdwg.mxu0
      %s944 = scalar_lea.vmem %s2, 128
      %v945 = vld [vmem:[%s944] sm:$0xff]
      %v946 = vld [vmem:[%s944 + $0x8] sm:$0xff]
      %v947 = vld [vmem:[%s944 + $0x10] sm:$0xff]
      %v948 = vld [vmem:[%s944 + $0x18] sm:$0xff]
      %v949 = vld [vmem:[%s944 + $0x20] sm:$0xff]
      %v950 = vld [vmem:[%s944 + $0x28] sm:$0xff]
      %v951 = vld [vmem:[%s944 + $0x30] sm:$0xff]
      %v952 = vld [vmem:[%s944 + $0x38] sm:$0xff]
      %v953 = vld [vmem:[%s944 + $0x40] sm:$0xff]
      %v954 = vld [vmem:[%s944 + $0x48] sm:$0xff]
      %v955 = vld [vmem:[%s944 + $0x50] sm:$0xff]
      %v956 = vld [vmem:[%s944 + $0x58] sm:$0xff]
      %v957 = vld [vmem:[%s944 + $0x60] sm:$0xff]
      %v958 = vld [vmem:[%s944 + $0x68] sm:$0xff]
      %v959 = vld [vmem:[%s944 + $0x70] sm:$0xff]
      %v960 = vld [vmem:[%s944 + $0x78] sm:$0xff]
      %961 = vmatprep.subr.mxu0 0.0
      %962 = vmatpush1.msra.mxu0 %v945
      %963 = vmatprep.subr.mxu0 0.0
      %964 = vmatpush1.msra.mxu0 %v946
      %965 = vmatprep.subr.mxu0 0.0
      %966 = vmatpush1.msra.mxu0 %v947
      %967 = vmatprep.subr.mxu0 0.0
      %968 = vmatpush1.msra.mxu0 %v948
      %969 = vmatprep.subr.mxu0 0.0
      %970 = vmatpush1.msra.mxu0 %v949
      %971 = vmatprep.subr.mxu0 0.0
      %972 = vmatpush1.msra.mxu0 %v950
      %973 = vmatprep.subr.mxu0 0.0
      %974 = vmatpush1.msra.mxu0 %v951
      %975 = vmatprep.subr.mxu0 0.0
      %976 = vmatpush1.msra.mxu0 %v952
      %977 = vmatprep.subr.mxu0 0.0
      %978 = vmatpush1.msra.mxu0 %v953
      %979 = vmatprep.subr.mxu0 0.0
      %980 = vmatpush1.msra.mxu0 %v954
      %981 = vmatprep.subr.mxu0 0.0
      %982 = vmatpush1.msra.mxu0 %v955
      %983 = vmatprep.subr.mxu0 0.0
      %984 = vmatpush1.msra.mxu0 %v956
      %985 = vmatprep.subr.mxu0 0.0
      %986 = vmatpush1.msra.mxu0 %v957
      %987 = vmatprep.subr.mxu0 0.0
      %988 = vmatpush1.msra.mxu0 %v958
      %989 = vmatprep.subr.mxu0 0.0
      %990 = vmatpush1.msra.mxu0 %v959
      %991 = vmatprep.subr.mxu0 0.0
      %992 = vmatpush1.msra.mxu0 %v960
      %993 = vmatprep.subr.mxu0 0.0
      %994 = vmatpush1.msra.mxu0 0.0
      %995 = vmatprep.subr.mxu0 0.0
      %996 = vmatpush1.msra.mxu0 0.0
      %997 = vmatprep.subr.mxu0 0.0
      %998 = vmatpush1.msra.mxu0 0.0
      %999 = vmatprep.subr.mxu0 0.0
      %1000 = vmatpush1.msra.mxu0 0.0
      %1001 = vmatprep.subr.mxu0 0.0
      %1002 = vmatpush1.msra.mxu0 0.0
      %1003 = vmatprep.subr.mxu0 0.0
      %1004 = vmatpush1.msra.mxu0 0.0
      %1005 = vmatprep.subr.mxu0 0.0
      %1006 = vmatpush1.msra.mxu0 0.0
      %1007 = vmatprep.subr.mxu0 0.0
      %1008 = vmatpush1.msra.mxu0 0.0
      %1009 = vmatprep.subr.mxu0 0.0
      %1010 = vmatpush1.msra.mxu0 0.0
      %1011 = vmatprep.subr.mxu0 0.0
      %1012 = vmatpush1.msra.mxu0 0.0
      %1013 = vmatprep.subr.mxu0 0.0
      %1014 = vmatpush1.msra.mxu0 0.0
      %1015 = vmatprep.subr.mxu0 0.0
      %1016 = vmatpush1.msra.mxu0 0.0
      %1017 = vmatprep.subr.mxu0 0.0
      %1018 = vmatpush1.msra.mxu0 0.0
      %1019 = vmatprep.subr.mxu0 0.0
      %1020 = vmatpush1.msra.mxu0 0.0
      %1021 = vmatprep.subr.mxu0 0.0
      %1022 = vmatpush1.msra.mxu0 0.0
      %1023 = vmatprep.subr.mxu0 0.0
      %1024 = vmatpush1.msra.mxu0 0.0
      %1025 = vmatprep.mubr.f32.mxu0 0.0
      %1026 = vmatmul.mubr.f32.gmra.mrb[0].mxu0 %v436
      %v1027 = vpop.f32.mrb[0].mxu0
      %v1028 = vadd.f32 0.0, %v1027
      %v1029 = vpop.f32.mrb[0].mxu0
      %1030 = vdwg.mxu0
      %s1031 = scalar_lea.vmem %s3, 128
      %v1032 = vld [vmem:[%s1031] sm:$0xff]
      %v1033 = vld [vmem:[%s1031 + $0x8] sm:$0xff]
      %v1034 = vld [vmem:[%s1031 + $0x10] sm:$0xff]
      %v1035 = vld [vmem:[%s1031 + $0x18] sm:$0xff]
      %v1036 = vld [vmem:[%s1031 + $0x20] sm:$0xff]
      %v1037 = vld [vmem:[%s1031 + $0x28] sm:$0xff]
      %v1038 = vld [vmem:[%s1031 + $0x30] sm:$0xff]
      %v1039 = vld [vmem:[%s1031 + $0x38] sm:$0xff]
      %v1040 = vld [vmem:[%s1031 + $0x40] sm:$0xff]
      %v1041 = vld [vmem:[%s1031 + $0x48] sm:$0xff]
      %v1042 = vld [vmem:[%s1031 + $0x50] sm:$0xff]
      %v1043 = vld [vmem:[%s1031 + $0x58] sm:$0xff]
      %v1044 = vld [vmem:[%s1031 + $0x60] sm:$0xff]
      %v1045 = vld [vmem:[%s1031 + $0x68] sm:$0xff]
      %v1046 = vld [vmem:[%s1031 + $0x70] sm:$0xff]
      %v1047 = vld [vmem:[%s1031 + $0x78] sm:$0xff]
      %1048 = vmatprep.subr.mxu0 0.0
      %1049 = vmatpush1.msra.mxu0 %v1032
      %1050 = vmatprep.subr.mxu0 0.0
      %1051 = vmatpush1.msra.mxu0 %v1033
      %1052 = vmatprep.subr.mxu0 0.0
      %1053 = vmatpush1.msra.mxu0 %v1034
      %1054 = vmatprep.subr.mxu0 0.0
      %1055 = vmatpush1.msra.mxu0 %v1035
      %1056 = vmatprep.subr.mxu0 0.0
      %1057 = vmatpush1.msra.mxu0 %v1036
      %1058 = vmatprep.subr.mxu0 0.0
      %1059 = vmatpush1.msra.mxu0 %v1037
      %1060 = vmatprep.subr.mxu0 0.0
      %1061 = vmatpush1.msra.mxu0 %v1038
      %1062 = vmatprep.subr.mxu0 0.0
      %1063 = vmatpush1.msra.mxu0 %v1039
      %1064 = vmatprep.subr.mxu0 0.0
      %1065 = vmatpush1.msra.mxu0 %v1040
      %1066 = vmatprep.subr.mxu0 0.0
      %1067 = vmatpush1.msra.mxu0 %v1041
      %1068 = vmatprep.subr.mxu0 0.0
      %1069 = vmatpush1.msra.mxu0 %v1042
      %1070 = vmatprep.subr.mxu0 0.0
      %1071 = vmatpush1.msra.mxu0 %v1043
      %1072 = vmatprep.subr.mxu0 0.0
      %1073 = vmatpush1.msra.mxu0 %v1044
      %1074 = vmatprep.subr.mxu0 0.0
      %1075 = vmatpush1.msra.mxu0 %v1045
      %1076 = vmatprep.subr.mxu0 0.0
      %1077 = vmatpush1.msra.mxu0 %v1046
      %1078 = vmatprep.subr.mxu0 0.0
      %1079 = vmatpush1.msra.mxu0 %v1047
      %1080 = vmatprep.subr.mxu0 0.0
      %1081 = vmatpush1.msra.mxu0 0.0
      %1082 = vmatprep.subr.mxu0 0.0
      %1083 = vmatpush1.msra.mxu0 0.0
      %1084 = vmatprep.subr.mxu0 0.0
      %1085 = vmatpush1.msra.mxu0 0.0
      %1086 = vmatprep.subr.mxu0 0.0
      %1087 = vmatpush1.msra.mxu0 0.0
      %1088 = vmatprep.subr.mxu0 0.0
      %1089 = vmatpush1.msra.mxu0 0.0
      %1090 = vmatprep.subr.mxu0 0.0
      %1091 = vmatpush1.msra.mxu0 0.0
      %1092 = vmatprep.subr.mxu0 0.0
      %1093 = vmatpush1.msra.mxu0 0.0
      %1094 = vmatprep.subr.mxu0 0.0
      %1095 = vmatpush1.msra.mxu0 0.0
      %1096 = vmatprep.subr.mxu0 0.0
      %1097 = vmatpush1.msra.mxu0 0.0
      %1098 = vmatprep.subr.mxu0 0.0
      %1099 = vmatpush1.msra.mxu0 0.0
      %1100 = vmatprep.subr.mxu0 0.0
      %1101 = vmatpush1.msra.mxu0 0.0
      %1102 = vmatprep.subr.mxu0 0.0
      %1103 = vmatpush1.msra.mxu0 0.0
      %1104 = vmatprep.subr.mxu0 0.0
      %1105 = vmatpush1.msra.mxu0 0.0
      %1106 = vmatprep.subr.mxu0 0.0
      %1107 = vmatpush1.msra.mxu0 0.0
      %1108 = vmatprep.subr.mxu0 0.0
      %1109 = vmatpush1.msra.mxu0 0.0
      %1110 = vmatprep.subr.mxu0 0.0
      %1111 = vmatpush1.msra.mxu0 0.0
      %1112 = vmatprep.mubr.f32.mxu0 0.0
      %1113 = vmatmul.mubr.f32.gmra.mrb[0].mxu0 %v436
      %v1114 = vpop.f32.mrb[0].mxu0
      %v1115 = vadd.f32 0.0, %v1114
      %v1116 = vpop.f32.mrb[0].mxu0
      %1117 = vdwg.mxu0
      %v1119 = vsel %vm695, %v941, 0
      %v1122 = vsel %vm695, %v1028, 0
      %1124 = vmatprep.subr.mxu0 0.0
      %1125 = vmatpush1.xpose.msra.mxu0 %v1122
      %1126 = vmatprep.subr.mxu0 0.0
      %1127 = vmatpush1.xpose.msra.mxu0 0.0
      %1128 = vmatprep.subr.mxu0 0.0
      %1129 = vmatpush1.xpose.msra.mxu0 0.0
      %1130 = vmatprep.subr.mxu0 0.0
      %1131 = vmatpush1.xpose.msra.mxu0 0.0
      %1132 = vmatprep.subr.mxu0 0.0
      %1133 = vmatpush1.xpose.msra.mxu0 0.0
      %1134 = vmatprep.subr.mxu0 0.0
      %1135 = vmatpush1.xpose.msra.mxu0 0.0
      %1136 = vmatprep.subr.mxu0 0.0
      %1137 = vmatpush1.xpose.msra.mxu0 0.0
      %1138 = vmatprep.subr.mxu0 0.0
      %1139 = vmatpush1.xpose.msra.mxu0 0.0
      %1140 = vmatprep.subr.mxu0 0.0
      %1141 = vmatpush1.xpose.msra.mxu0 0.0
      %1142 = vmatprep.subr.mxu0 0.0
      %1143 = vmatpush1.xpose.msra.mxu0 0.0
      %1144 = vmatprep.subr.mxu0 0.0
      %1145 = vmatpush1.xpose.msra.mxu0 0.0
      %1146 = vmatprep.subr.mxu0 0.0
      %1147 = vmatpush1.xpose.msra.mxu0 0.0
      %1148 = vmatprep.subr.mxu0 0.0
      %1149 = vmatpush1.xpose.msra.mxu0 0.0
      %1150 = vmatprep.subr.mxu0 0.0
      %1151 = vmatpush1.xpose.msra.mxu0 0.0
      %1152 = vmatprep.subr.mxu0 0.0
      %1153 = vmatpush1.xpose.msra.mxu0 0.0
      %1154 = vmatprep.subr.mxu0 0.0
      %1155 = vmatpush1.xpose.msra.mxu0 0.0
      %1156 = vmatprep.subr.mxu0 0.0
      %1157 = vmatpush1.xpose.msra.mxu0 0.0
      %1158 = vmatprep.subr.mxu0 0.0
      %1159 = vmatpush1.xpose.msra.mxu0 0.0
      %1160 = vmatprep.subr.mxu0 0.0
      %1161 = vmatpush1.xpose.msra.mxu0 0.0
      %1162 = vmatprep.subr.mxu0 0.0
      %1163 = vmatpush1.xpose.msra.mxu0 0.0
      %1164 = vmatprep.subr.mxu0 0.0
      %1165 = vmatpush1.xpose.msra.mxu0 0.0
      %1166 = vmatprep.subr.mxu0 0.0
      %1167 = vmatpush1.xpose.msra.mxu0 0.0
      %1168 = vmatprep.subr.mxu0 0.0
      %1169 = vmatpush1.xpose.msra.mxu0 0.0
      %1170 = vmatprep.subr.mxu0 0.0
      %1171 = vmatpush1.xpose.msra.mxu0 0.0
      %1172 = vmatprep.subr.mxu0 0.0
      %1173 = vmatpush1.xpose.msra.mxu0 0.0
      %1174 = vmatprep.subr.mxu0 0.0
      %1175 = vmatpush1.xpose.msra.mxu0 0.0
      %1176 = vmatprep.subr.mxu0 0.0
      %1177 = vmatpush1.xpose.msra.mxu0 0.0
      %1178 = vmatprep.subr.mxu0 0.0
      %1179 = vmatpush1.xpose.msra.mxu0 0.0
      %1180 = vmatprep.subr.mxu0 0.0
      %1181 = vmatpush1.xpose.msra.mxu0 0.0
      %1182 = vmatprep.subr.mxu0 0.0
      %1183 = vmatpush1.xpose.msra.mxu0 0.0
      %1184 = vmatprep.subr.mxu0 0.0
      %1185 = vmatpush1.xpose.msra.mxu0 0.0
      %1186 = vmatprep.subr.mxu0 0.0
      %1187 = vmatpush1.xpose.msra.mxu0 0.0
      %1188 = vmatprep.mubr.f32.mxu0 0.0
      %1189 = vmatmul.mubr.f32.gmra.mrb[0].mxu0 %v1119
      %v1190 = vpop.f32.mrb[0].mxu0
      %v1191 = vadd.f32 0.0, %v1190
      %v1192 = vpop.f32.mrb[0].mxu0
      %1193 = vdwg.mxu0
      %v1194 = vsel %vm695, %v1191, -inf
      %1195 = vmax.xlane.f32.xlu0 %v1194
      %v1196 = vpop.xlane.xlu0 %1195
      %v1197 = vsub.f32 %v1191, %v1196
      %v1198 = vmul.f32 %v1197, 1.442695
      %v1199 = vpow.pop %v1198
      %v1200 = vsel %vm695, %v1199, 0.0
      %1201 = vadd.xlane.f32.xlu0 %v1200
      %v1202 = vpop.xlane.xlu0 %1201
      %v1203 = vrcp.pop %v1202
      %v1204 = vmul.f32 %v1199, %v1203
      %v1206 = vsel %vm695, %v1204, 0
      %1208 = vmatprep.subr.mxu0 0.0
      %1209 = vmatpush1.msra.mxu0 %v1115
      %1210 = vmatprep.subr.mxu0 0.0
      %1211 = vmatpush1.msra.mxu0 0.0
      %1212 = vmatprep.subr.mxu0 0.0
      %1213 = vmatpush1.msra.mxu0 0.0
      %1214 = vmatprep.subr.mxu0 0.0
      %1215 = vmatpush1.msra.mxu0 0.0
      %1216 = vmatprep.subr.mxu0 0.0
      %1217 = vmatpush1.msra.mxu0 0.0
      %1218 = vmatprep.subr.mxu0 0.0
      %1219 = vmatpush1.msra.mxu0 0.0
      %1220 = vmatprep.subr.mxu0 0.0
      %1221 = vmatpush1.msra.mxu0 0.0
      %1222 = vmatprep.subr.mxu0 0.0
      %1223 = vmatpush1.msra.mxu0 0.0
      %1224 = vmatprep.subr.mxu0 0.0
      %1225 = vmatpush1.msra.mxu0 0.0
      %1226 = vmatprep.subr.mxu0 0.0
      %1227 = vmatpush1.msra.mxu0 0.0
      %1228 = vmatprep.subr.mxu0 0.0
      %1229 = vmatpush1.msra.mxu0 0.0
      %1230 = vmatprep.subr.mxu0 0.0
      %1231 = vmatpush1.msra.mxu0 0.0
      %1232 = vmatprep.subr.mxu0 0.0
      %1233 = vmatpush1.msra.mxu0 0.0
      %1234 = vmatprep.subr.mxu0 0.0
      %1235 = vmatpush1.msra.mxu0 0.0
      %1236 = vmatprep.subr.mxu0 0.0
      %1237 = vmatpush1.msra.mxu0 0.0
      %1238 = vmatprep.subr.mxu0 0.0
      %1239 = vmatpush1.msra.mxu0 0.0
      %1240 = vmatprep.subr.mxu0 0.0
      %1241 = vmatpush1.msra.mxu0 0.0
      %1242 = vmatprep.subr.mxu0 0.0
      %1243 = vmatpush1.msra.mxu0 0.0
      %1244 = vmatprep.subr.mxu0 0.0
      %1245 = vmatpush1.msra.mxu0 0.0
      %1246 = vmatprep.subr.mxu0 0.0
      %1247 = vmatpush1.msra.mxu0 0.0
      %1248 = vmatprep.subr.mxu0 0.0
      %1249 = vmatpush1.msra.mxu0 0.0
      %1250 = vmatprep.subr.mxu0 0.0
      %1251 = vmatpush1.msra.mxu0 0.0
      %1252 = vmatprep.subr.mxu0 0.0
      %1253 = vmatpush1.msra.mxu0 0.0
      %1254 = vmatprep.subr.mxu0 0.0
      %1255 = vmatpush1.msra.mxu0 0.0
      %1256 = vmatprep.subr.mxu0 0.0
      %1257 = vmatpush1.msra.mxu0 0.0
      %1258 = vmatprep.subr.mxu0 0.0
      %1259 = vmatpush1.msra.mxu0 0.0
      %1260 = vmatprep.subr.mxu0 0.0
      %1261 = vmatpush1.msra.mxu0 0.0
      %1262 = vmatprep.subr.mxu0 0.0
      %1263 = vmatpush1.msra.mxu0 0.0
      %1264 = vmatprep.subr.mxu0 0.0
      %1265 = vmatpush1.msra.mxu0 0.0
      %1266 = vmatprep.subr.mxu0 0.0
      %1267 = vmatpush1.msra.mxu0 0.0
      %1268 = vmatprep.subr.mxu0 0.0
      %1269 = vmatpush1.msra.mxu0 0.0
      %1270 = vmatprep.subr.mxu0 0.0
      %1271 = vmatpush1.msra.mxu0 0.0
      %1272 = vmatprep.mubr.f32.mxu0 0.0
      %1273 = vmatmul.mubr.f32.gmra.mrb[0].mxu0 %v1206
      %v1274 = vpop.f32.mrb[0].mxu0
      %v1275 = vadd.f32 0.0, %v1274
      %v1276 = vpop.f32.mrb[0].mxu0
      %1277 = vdwg.mxu0
      %s1278 = scalar_lea.vmem %s4, 8
      %v1279 = vld [vmem:[%s1278] sm:$0xff]
      %v1281 = vsel %vm695, %v1275, 0
      %1283 = vmatprep.subr.mxu0 0.0
      %1284 = vmatpush1.msra.mxu0 %v1279
      %1285 = vmatprep.subr.mxu0 0.0
      %1286 = vmatpush1.msra.mxu0 0.0
      %1287 = vmatprep.subr.mxu0 0.0
      %1288 = vmatpush1.msra.mxu0 0.0
      %1289 = vmatprep.subr.mxu0 0.0
      %1290 = vmatpush1.msra.mxu0 0.0
      %1291 = vmatprep.subr.mxu0 0.0
      %1292 = vmatpush1.msra.mxu0 0.0
      %1293 = vmatprep.subr.mxu0 0.0
      %1294 = vmatpush1.msra.mxu0 0.0
      %1295 = vmatprep.subr.mxu0 0.0
      %1296 = vmatpush1.msra.mxu0 0.0
      %1297 = vmatprep.subr.mxu0 0.0
      %1298 = vmatpush1.msra.mxu0 0.0
      %1299 = vmatprep.subr.mxu0 0.0
      %1300 = vmatpush1.msra.mxu0 0.0
      %1301 = vmatprep.subr.mxu0 0.0
      %1302 = vmatpush1.msra.mxu0 0.0
      %1303 = vmatprep.subr.mxu0 0.0
      %1304 = vmatpush1.msra.mxu0 0.0
      %1305 = vmatprep.subr.mxu0 0.0
      %1306 = vmatpush1.msra.mxu0 0.0
      %1307 = vmatprep.subr.mxu0 0.0
      %1308 = vmatpush1.msra.mxu0 0.0
      %1309 = vmatprep.subr.mxu0 0.0
      %1310 = vmatpush1.msra.mxu0 0.0
      %1311 = vmatprep.subr.mxu0 0.0
      %1312 = vmatpush1.msra.mxu0 0.0
      %1313 = vmatprep.subr.mxu0 0.0
      %1314 = vmatpush1.msra.mxu0 0.0
      %1315 = vmatprep.subr.mxu0 0.0
      %1316 = vmatpush1.msra.mxu0 0.0
      %1317 = vmatprep.subr.mxu0 0.0
      %1318 = vmatpush1.msra.mxu0 0.0
      %1319 = vmatprep.subr.mxu0 0.0
      %1320 = vmatpush1.msra.mxu0 0.0
      %1321 = vmatprep.subr.mxu0 0.0
      %1322 = vmatpush1.msra.mxu0 0.0
      %1323 = vmatprep.subr.mxu0 0.0
      %1324 = vmatpush1.msra.mxu0 0.0
      %1325 = vmatprep.subr.mxu0 0.0
      %1326 = vmatpush1.msra.mxu0 0.0
      %1327 = vmatprep.subr.mxu0 0.0
      %1328 = vmatpush1.msra.mxu0 0.0
      %1329 = vmatprep.subr.mxu0 0.0
      %1330 = vmatpush1.msra.mxu0 0.0
      %1331 = vmatprep.subr.mxu0 0.0
      %1332 = vmatpush1.msra.mxu0 0.0
      %1333 = vmatprep.subr.mxu0 0.0
      %1334 = vmatpush1.msra.mxu0 0.0
      %1335 = vmatprep.subr.mxu0 0.0
      %1336 = vmatpush1.msra.mxu0 0.0
      %1337 = vmatprep.subr.mxu0 0.0
      %1338 = vmatpush1.msra.mxu0 0.0
      %1339 = vmatprep.subr.mxu0 0.0
      %1340 = vmatpush1.msra.mxu0 0.0
      %1341 = vmatprep.subr.mxu0 0.0
      %1342 = vmatpush1.msra.mxu0 0.0
      %1343 = vmatprep.subr.mxu0 0.0
      %1344 = vmatpush1.msra.mxu0 0.0
      %1345 = vmatprep.subr.mxu0 0.0
      %1346 = vmatpush1.msra.mxu0 0.0
      %1347 = vmatprep.mubr.f32.mxu0 0.0
      %1348 = vmatmul.mubr.f32.gmra.mrb[0].mxu0 %v1281
      %v1349 = vpop.f32.mrb[0].mxu0
      %v1350 = vadd.f32 0.0, %v1349
      %v1351 = vpop.f32.mrb[0].mxu0
      %1352 = vdwg.mxu0
      %v1354 = vsel %vm695, %v853, 0
      %1356 = vmatprep.subr.mxu0 0.0
      %1357 = vmatpush1.msra.mxu0 %v856
      %1358 = vmatprep.subr.mxu0 0.0
      %1359 = vmatpush1.msra.mxu0 0.0
      %1360 = vmatprep.subr.mxu0 0.0
      %1361 = vmatpush1.msra.mxu0 0.0
      %1362 = vmatprep.subr.mxu0 0.0
      %1363 = vmatpush1.msra.mxu0 0.0
      %1364 = vmatprep.subr.mxu0 0.0
      %1365 = vmatpush1.msra.mxu0 0.0
      %1366 = vmatprep.subr.mxu0 0.0
      %1367 = vmatpush1.msra.mxu0 0.0
      %1368 = vmatprep.subr.mxu0 0.0
      %1369 = vmatpush1.msra.mxu0 0.0
      %1370 = vmatprep.subr.mxu0 0.0
      %1371 = vmatpush1.msra.mxu0 0.0
      %1372 = vmatprep.subr.mxu0 0.0
      %1373 = vmatpush1.msra.mxu0 0.0
      %1374 = vmatprep.subr.mxu0 0.0
      %1375 = vmatpush1.msra.mxu0 0.0
      %1376 = vmatprep.subr.mxu0 0.0
      %1377 = vmatpush1.msra.mxu0 0.0
      %1378 = vmatprep.subr.mxu0 0.0
      %1379 = vmatpush1.msra.mxu0 0.0
      %1380 = vmatprep.subr.mxu0 0.0
      %1381 = vmatpush1.msra.mxu0 0.0
      %1382 = vmatprep.subr.mxu0 0.0
      %1383 = vmatpush1.msra.mxu0 0.0
      %1384 = vmatprep.subr.mxu0 0.0
      %1385 = vmatpush1.msra.mxu0 0.0
      %1386 = vmatprep.subr.mxu0 0.0
      %1387 = vmatpush1.msra.mxu0 0.0
      %1388 = vmatprep.subr.mxu0 0.0
      %1389 = vmatpush1.msra.mxu0 0.0
      %1390 = vmatprep.subr.mxu0 0.0
      %1391 = vmatpush1.msra.mxu0 0.0
      %1392 = vmatprep.subr.mxu0 0.0
      %1393 = vmatpush1.msra.mxu0 0.0
      %1394 = vmatprep.subr.mxu0 0.0
      %1395 = vmatpush1.msra.mxu0 0.0
      %1396 = vmatprep.subr.mxu0 0.0
      %1397 = vmatpush1.msra.mxu0 0.0
      %1398 = vmatprep.subr.mxu0 0.0
      %1399 = vmatpush1.msra.mxu0 0.0
      %1400 = vmatprep.subr.mxu0 0.0
      %1401 = vmatpush1.msra.mxu0 0.0
      %1402 = vmatprep.subr.mxu0 0.0
      %1403 = vmatpush1.msra.mxu0 0.0
      %1404 = vmatprep.subr.mxu0 0.0
      %1405 = vmatpush1.msra.mxu0 0.0
      %1406 = vmatprep.subr.mxu0 0.0
      %1407 = vmatpush1.msra.mxu0 0.0
      %1408 = vmatprep.subr.mxu0 0.0
      %1409 = vmatpush1.msra.mxu0 0.0
      %1410 = vmatprep.subr.mxu0 0.0
      %1411 = vmatpush1.msra.mxu0 0.0
      %1412 = vmatprep.subr.mxu0 0.0
      %1413 = vmatpush1.msra.mxu0 0.0
      %1414 = vmatprep.subr.mxu0 0.0
      %1415 = vmatpush1.msra.mxu0 0.0
      %1416 = vmatprep.subr.mxu0 0.0
      %1417 = vmatpush1.msra.mxu0 0.0
      %1418 = vmatprep.subr.mxu0 0.0
      %1419 = vmatpush1.msra.mxu0 0.0
      %1420 = vmatprep.mubr.f32.mxu0 0.0
      %1421 = vmatmul.mubr.f32.gmra.mrb[0].mxu0 %v1354
      %v1422 = vpop.f32.mrb[0].mxu0
      %v1423 = vadd.f32 %v1350, %v1422
      %v1424 = vpop.f32.mrb[0].mxu0
      %1425 = vdwg.mxu0
      %s1426 = scalar_lea.vmem %s1, 256
      %v1427 = vld [vmem:[%s1426] sm:$0xff]
      %v1428 = vld [vmem:[%s1426 + $0x8] sm:$0xff]
      %v1429 = vld [vmem:[%s1426 + $0x10] sm:$0xff]
      %v1430 = vld [vmem:[%s1426 + $0x18] sm:$0xff]
      %v1431 = vld [vmem:[%s1426 + $0x20] sm:$0xff]
      %v1432 = vld [vmem:[%s1426 + $0x28] sm:$0xff]
      %v1433 = vld [vmem:[%s1426 + $0x30] sm:$0xff]
      %v1434 = vld [vmem:[%s1426 + $0x38] sm:$0xff]
      %v1435 = vld [vmem:[%s1426 + $0x40] sm:$0xff]
      %v1436 = vld [vmem:[%s1426 + $0x48] sm:$0xff]
      %v1437 = vld [vmem:[%s1426 + $0x50] sm:$0xff]
      %v1438 = vld [vmem:[%s1426 + $0x58] sm:$0xff]
      %v1439 = vld [vmem:[%s1426 + $0x60] sm:$0xff]
      %v1440 = vld [vmem:[%s1426 + $0x68] sm:$0xff]
      %v1441 = vld [vmem:[%s1426 + $0x70] sm:$0xff]
      %v1442 = vld [vmem:[%s1426 + $0x78] sm:$0xff]
      %1443 = vmatprep.subr.mxu0 0.0
      %1444 = vmatpush1.msra.mxu0 %v1427
      %1445 = vmatprep.subr.mxu0 0.0
      %1446 = vmatpush1.msra.mxu0 %v1428
      %1447 = vmatprep.subr.mxu0 0.0
      %1448 = vmatpush1.msra.mxu0 %v1429
      %1449 = vmatprep.subr.mxu0 0.0
      %1450 = vmatpush1.msra.mxu0 %v1430
      %1451 = vmatprep.subr.mxu0 0.0
      %1452 = vmatpush1.msra.mxu0 %v1431
      %1453 = vmatprep.subr.mxu0 0.0
      %1454 = vmatpush1.msra.mxu0 %v1432
      %1455 = vmatprep.subr.mxu0 0.0
      %1456 = vmatpush1.msra.mxu0 %v1433
      %1457 = vmatprep.subr.mxu0 0.0
      %1458 = vmatpush1.msra.mxu0 %v1434
      %1459 = vmatprep.subr.mxu0 0.0
      %1460 = vmatpush1.msra.mxu0 %v1435
      %1461 = vmatprep.subr.mxu0 0.0
      %1462 = vmatpush1.msra.mxu0 %v1436
      %1463 = vmatprep.subr.mxu0 0.0
      %1464 = vmatpush1.msra.mxu0 %v1437
      %1465 = vmatprep.subr.mxu0 0.0
      %1466 = vmatpush1.msra.mxu0 %v1438
      %1467 = vmatprep.subr.mxu0 0.0
      %1468 = vmatpush1.msra.mxu0 %v1439
      %1469 = vmatprep.subr.mxu0 0.0
      %1470 = vmatpush1.msra.mxu0 %v1440
      %1471 = vmatprep.subr.mxu0 0.0
      %1472 = vmatpush1.msra.mxu0 %v1441
      %1473 = vmatprep.subr.mxu0 0.0
      %1474 = vmatpush1.msra.mxu0 %v1442
      %1475 = vmatprep.subr.mxu0 0.0
      %1476 = vmatpush1.msra.mxu0 0.0
      %1477 = vmatprep.subr.mxu0 0.0
      %1478 = vmatpush1.msra.mxu0 0.0
      %1479 = vmatprep.subr.mxu0 0.0
      %1480 = vmatpush1.msra.mxu0 0.0
      %1481 = vmatprep.subr.mxu0 0.0
      %1482 = vmatpush1.msra.mxu0 0.0
      %1483 = vmatprep.subr.mxu0 0.0
      %1484 = vmatpush1.msra.mxu0 0.0
      %1485 = vmatprep.subr.mxu0 0.0
      %1486 = vmatpush1.msra.mxu0 0.0
      %1487 = vmatprep.subr.mxu0 0.0
      %1488 = vmatpush1.msra.mxu0 0.0
      %1489 = vmatprep.subr.mxu0 0.0
      %1490 = vmatpush1.msra.mxu0 0.0
      %1491 = vmatprep.subr.mxu0 0.0
      %1492 = vmatpush1.msra.mxu0 0.0
      %1493 = vmatprep.subr.mxu0 0.0
      %1494 = vmatpush1.msra.mxu0 0.0
      %1495 = vmatprep.subr.mxu0 0.0
      %1496 = vmatpush1.msra.mxu0 0.0
      %1497 = vmatprep.subr.mxu0 0.0
      %1498 = vmatpush1.msra.mxu0 0.0
      %1499 = vmatprep.subr.mxu0 0.0
      %1500 = vmatpush1.msra.mxu0 0.0
      %1501 = vmatprep.subr.mxu0 0.0
      %1502 = vmatpush1.msra.mxu0 0.0
      %1503 = vmatprep.subr.mxu0 0.0
      %1504 = vmatpush1.msra.mxu0 0.0
      %1505 = vmatprep.subr.mxu0 0.0
      %1506 = vmatpush1.msra.mxu0 0.0
      %1507 = vmatprep.mubr.f32.mxu0 0.0
      %1508 = vmatmul.mubr.f32.gmra.mrb[0].mxu0 %v436
      %v1509 = vpop.f32.mrb[0].mxu0
      %v1510 = vadd.f32 0.0, %v1509
      %v1511 = vpop.f32.mrb[0].mxu0
      %1512 = vdwg.mxu0
      %s1513 = scalar_lea.vmem %s2, 256
      %v1514 = vld [vmem:[%s1513] sm:$0xff]
      %v1515 = vld [vmem:[%s1513 + $0x8] sm:$0xff]
      %v1516 = vld [vmem:[%s1513 + $0x10] sm:$0xff]
      %v1517 = vld [vmem:[%s1513 + $0x18] sm:$0xff]
      %v1518 = vld [vmem:[%s1513 + $0x20] sm:$0xff]
      %v1519 = vld [vmem:[%s1513 + $0x28] sm:$0xff]
      %v1520 = vld [vmem:[%s1513 + $0x30] sm:$0xff]
      %v1521 = vld [vmem:[%s1513 + $0x38] sm:$0xff]
      %v1522 = vld [vmem:[%s1513 + $0x40] sm:$0xff]
      %v1523 = vld [vmem:[%s1513 + $0x48] sm:$0xff]
      %v1524 = vld [vmem:[%s1513 + $0x50] sm:$0xff]
      %v1525 = vld [vmem:[%s1513 + $0x58] sm:$0xff]
      %v1526 = vld [vmem:[%s1513 + $0x60] sm:$0xff]
      %v1527 = vld [vmem:[%s1513 + $0x68] sm:$0xff]
      %v1528 = vld [vmem:[%s1513 + $0x70] sm:$0xff]
      %v1529 = vld [vmem:[%s1513 + $0x78] sm:$0xff]
      %1530 = vmatprep.subr.mxu0 0.0
      %1531 = vmatpush1.msra.mxu0 %v1514
      %1532 = vmatprep.subr.mxu0 0.0
      %1533 = vmatpush1.msra.mxu0 %v1515
      %1534 = vmatprep.subr.mxu0 0.0
      %1535 = vmatpush1.msra.mxu0 %v1516
      %1536 = vmatprep.subr.mxu0 0.0
      %1537 = vmatpush1.msra.mxu0 %v1517
      %1538 = vmatprep.subr.mxu0 0.0
      %1539 = vmatpush1.msra.mxu0 %v1518
      %1540 = vmatprep.subr.mxu0 0.0
      %1541 = vmatpush1.msra.mxu0 %v1519
      %1542 = vmatprep.subr.mxu0 0.0
      %1543 = vmatpush1.msra.mxu0 %v1520
      %1544 = vmatprep.subr.mxu0 0.0
      %1545 = vmatpush1.msra.mxu0 %v1521
      %1546 = vmatprep.subr.mxu0 0.0
      %1547 = vmatpush1.msra.mxu0 %v1522
      %1548 = vmatprep.subr.mxu0 0.0
      %1549 = vmatpush1.msra.mxu0 %v1523
      %1550 = vmatprep.subr.mxu0 0.0
      %1551 = vmatpush1.msra.mxu0 %v1524
      %1552 = vmatprep.subr.mxu0 0.0
      %1553 = vmatpush1.msra.mxu0 %v1525
      %1554 = vmatprep.subr.mxu0 0.0
      %1555 = vmatpush1.msra.mxu0 %v1526
      %1556 = vmatprep.subr.mxu0 0.0
      %1557 = vmatpush1.msra.mxu0 %v1527
      %1558 = vmatprep.subr.mxu0 0.0
      %1559 = vmatpush1.msra.mxu0 %v1528
      %1560 = vmatprep.subr.mxu0 0.0
      %1561 = vmatpush1.msra.mxu0 %v1529
      %1562 = vmatprep.subr.mxu0 0.0
      %1563 = vmatpush1.msra.mxu0 0.0
      %1564 = vmatprep.subr.mxu0 0.0
      %1565 = vmatpush1.msra.mxu0 0.0
      %1566 = vmatprep.subr.mxu0 0.0
      %1567 = vmatpush1.msra.mxu0 0.0
      %1568 = vmatprep.subr.mxu0 0.0
      %1569 = vmatpush1.msra.mxu0 0.0
      %1570 = vmatprep.subr.mxu0 0.0
      %1571 = vmatpush1.msra.mxu0 0.0
      %1572 = vmatprep.subr.mxu0 0.0
      %1573 = vmatpush1.msra.mxu0 0.0
      %1574 = vmatprep.subr.mxu0 0.0
      %1575 = vmatpush1.msra.mxu0 0.0
      %1576 = vmatprep.subr.mxu0 0.0
      %1577 = vmatpush1.msra.mxu0 0.0
      %1578 = vmatprep.subr.mxu0 0.0
      %1579 = vmatpush1.msra.mxu0 0.0
      %1580 = vmatprep.subr.mxu0 0.0
      %1581 = vmatpush1.msra.mxu0 0.0
      %1582 = vmatprep.subr.mxu0 0.0
      %1583 = vmatpush1.msra.mxu0 0.0
      %1584 = vmatprep.subr.mxu0 0.0
      %1585 = vmatpush1.msra.mxu0 0.0
      %1586 = vmatprep.subr.mxu0 0.0
      %1587 = vmatpush1.msra.mxu0 0.0
      %1588 = vmatprep.subr.mxu0 0.0
      %1589 = vmatpush1.msra.mxu0 0.0
      %1590 = vmatprep.subr.mxu0 0.0
      %1591 = vmatpush1.msra.mxu0 0.0
      %1592 = vmatprep.subr.mxu0 0.0
      %1593 = vmatpush1.msra.mxu0 0.0
      %1594 = vmatprep.mubr.f32.mxu0 0.0
      %1595 = vmatmul.mubr.f32.gmra.mrb[0].mxu0 %v436
      %v1596 = vpop.f32.mrb[0].mxu0
      %v1597 = vadd.f32 0.0, %v1596
      %v1598 = vpop.f32.mrb[0].mxu0
      %1599 = vdwg.mxu0
      %s1600 = scalar_lea.vmem %s3, 256
      %v1601 = vld [vmem:[%s1600] sm:$0xff]
      %v1602 = vld [vmem:[%s1600 + $0x8] sm:$0xff]
      %v1603 = vld [vmem:[%s1600 + $0x10] sm:$0xff]
      %v1604 = vld [vmem:[%s1600 + $0x18] sm:$0xff]
      %v1605 = vld [vmem:[%s1600 + $0x20] sm:$0xff]
      %v1606 = vld [vmem:[%s1600 + $0x28] sm:$0xff]
      %v1607 = vld [vmem:[%s1600 + $0x30] sm:$0xff]
      %v1608 = vld [vmem:[%s1600 + $0x38] sm:$0xff]
      %v1609 = vld [vmem:[%s1600 + $0x40] sm:$0xff]
      %v1610 = vld [vmem:[%s1600 + $0x48] sm:$0xff]
      %v1611 = vld [vmem:[%s1600 + $0x50] sm:$0xff]
      %v1612 = vld [vmem:[%s1600 + $0x58] sm:$0xff]
      %v1613 = vld [vmem:[%s1600 + $0x60] sm:$0xff]
      %v1614 = vld [vmem:[%s1600 + $0x68] sm:$0xff]
      %v1615 = vld [vmem:[%s1600 + $0x70] sm:$0xff]
      %v1616 = vld [vmem:[%s1600 + $0x78] sm:$0xff]
      %1617 = vmatprep.subr.mxu0 0.0
      %1618 = vmatpush1.msra.mxu0 %v1601
      %1619 = vmatprep.subr.mxu0 0.0
      %1620 = vmatpush1.msra.mxu0 %v1602
      %1621 = vmatprep.subr.mxu0 0.0
      %1622 = vmatpush1.msra.mxu0 %v1603
      %1623 = vmatprep.subr.mxu0 0.0
      %1624 = vmatpush1.msra.mxu0 %v1604
      %1625 = vmatprep.subr.mxu0 0.0
      %1626 = vmatpush1.msra.mxu0 %v1605
      %1627 = vmatprep.subr.mxu0 0.0
      %1628 = vmatpush1.msra.mxu0 %v1606
      %1629 = vmatprep.subr.mxu0 0.0
      %1630 = vmatpush1.msra.mxu0 %v1607
      %1631 = vmatprep.subr.mxu0 0.0
      %1632 = vmatpush1.msra.mxu0 %v1608
      %1633 = vmatprep.subr.mxu0 0.0
      %1634 = vmatpush1.msra.mxu0 %v1609
      %1635 = vmatprep.subr.mxu0 0.0
      %1636 = vmatpush1.msra.mxu0 %v1610
      %1637 = vmatprep.subr.mxu0 0.0
      %1638 = vmatpush1.msra.mxu0 %v1611
      %1639 = vmatprep.subr.mxu0 0.0
      %1640 = vmatpush1.msra.mxu0 %v1612
      %1641 = vmatprep.subr.mxu0 0.0
      %1642 = vmatpush1.msra.mxu0 %v1613
      %1643 = vmatprep.subr.mxu0 0.0
      %1644 = vmatpush1.msra.mxu0 %v1614
      %1645 = vmatprep.subr.mxu0 0.0
      %1646 = vmatpush1.msra.mxu0 %v1615
      %1647 = vmatprep.subr.mxu0 0.0
      %1648 = vmatpush1.msra.mxu0 %v1616
      %1649 = vmatprep.subr.mxu0 0.0
      %1650 = vmatpush1.msra.mxu0 0.0
      %1651 = vmatprep.subr.mxu0 0.0
      %1652 = vmatpush1.msra.mxu0 0.0
      %1653 = vmatprep.subr.mxu0 0.0
      %1654 = vmatpush1.msra.mxu0 0.0
      %1655 = vmatprep.subr.mxu0 0.0
      %1656 = vmatpush1.msra.mxu0 0.0
      %1657 = vmatprep.subr.mxu0 0.0
      %1658 = vmatpush1.msra.mxu0 0.0
      %1659 = vmatprep.subr.mxu0 0.0
      %1660 = vmatpush1.msra.mxu0 0.0
      %1661 = vmatprep.subr.mxu0 0.0
      %1662 = vmatpush1.msra.mxu0 0.0
      %1663 = vmatprep.subr.mxu0 0.0
      %1664 = vmatpush1.msra.mxu0 0.0
      %1665 = vmatprep.subr.mxu0 0.0
      %1666 = vmatpush1.msra.mxu0 0.0
      %1667 = vmatprep.subr.mxu0 0.0
      %1668 = vmatpush1.msra.mxu0 0.0
      %1669 = vmatprep.subr.mxu0 0.0
      %1670 = vmatpush1.msra.mxu0 0.0
      %1671 = vmatprep.subr.mxu0 0.0
      %1672 = vmatpush1.msra.mxu0 0.0
      %1673 = vmatprep.subr.mxu0 0.0
      %1674 = vmatpush1.msra.mxu0 0.0
      %1675 = vmatprep.subr.mxu0 0.0
      %1676 = vmatpush1.msra.mxu0 0.0
      %1677 = vmatprep.subr.mxu0 0.0
      %1678 = vmatpush1.msra.mxu0 0.0
      %1679 = vmatprep.subr.mxu0 0.0
      %1680 = vmatpush1.msra.mxu0 0.0
      %1681 = vmatprep.mubr.f32.mxu0 0.0
      %1682 = vmatmul.mubr.f32.gmra.mrb[0].mxu0 %v436
      %v1683 = vpop.f32.mrb[0].mxu0
      %v1684 = vadd.f32 0.0, %v1683
      %v1685 = vpop.f32.mrb[0].mxu0
      %1686 = vdwg.mxu0
      %v1688 = vsel %vm695, %v1510, 0
      %v1691 = vsel %vm695, %v1597, 0
      %1693 = vmatprep.subr.mxu0 0.0
      %1694 = vmatpush1.xpose.msra.mxu0 %v1691
      %1695 = vmatprep.subr.mxu0 0.0
      %1696 = vmatpush1.xpose.msra.mxu0 0.0
      %1697 = vmatprep.subr.mxu0 0.0
      %1698 = vmatpush1.xpose.msra.mxu0 0.0
      %1699 = vmatprep.subr.mxu0 0.0
      %1700 = vmatpush1.xpose.msra.mxu0 0.0
      %1701 = vmatprep.subr.mxu0 0.0
      %1702 = vmatpush1.xpose.msra.mxu0 0.0
      %1703 = vmatprep.subr.mxu0 0.0
      %1704 = vmatpush1.xpose.msra.mxu0 0.0
      %1705 = vmatprep.subr.mxu0 0.0
      %1706 = vmatpush1.xpose.msra.mxu0 0.0
      %1707 = vmatprep.subr.mxu0 0.0
      %1708 = vmatpush1.xpose.msra.mxu0 0.0
      %1709 = vmatprep.subr.mxu0 0.0
      %1710 = vmatpush1.xpose.msra.mxu0 0.0
      %1711 = vmatprep.subr.mxu0 0.0
      %1712 = vmatpush1.xpose.msra.mxu0 0.0
      %1713 = vmatprep.subr.mxu0 0.0
      %1714 = vmatpush1.xpose.msra.mxu0 0.0
      %1715 = vmatprep.subr.mxu0 0.0
      %1716 = vmatpush1.xpose.msra.mxu0 0.0
      %1717 = vmatprep.subr.mxu0 0.0
      %1718 = vmatpush1.xpose.msra.mxu0 0.0
      %1719 = vmatprep.subr.mxu0 0.0
      %1720 = vmatpush1.xpose.msra.mxu0 0.0
      %1721 = vmatprep.subr.mxu0 0.0
      %1722 = vmatpush1.xpose.msra.mxu0 0.0
      %1723 = vmatprep.subr.mxu0 0.0
      %1724 = vmatpush1.xpose.msra.mxu0 0.0
      %1725 = vmatprep.subr.mxu0 0.0
      %1726 = vmatpush1.xpose.msra.mxu0 0.0
      %1727 = vmatprep.subr.mxu0 0.0
      %1728 = vmatpush1.xpose.msra.mxu0 0.0
      %1729 = vmatprep.subr.mxu0 0.0
      %1730 = vmatpush1.xpose.msra.mxu0 0.0
      %1731 = vmatprep.subr.mxu0 0.0
      %1732 = vmatpush1.xpose.msra.mxu0 0.0
      %1733 = vmatprep.subr.mxu0 0.0
      %1734 = vmatpush1.xpose.msra.mxu0 0.0
      %1735 = vmatprep.subr.mxu0 0.0
      %1736 = vmatpush1.xpose.msra.mxu0 0.0
      %1737 = vmatprep.subr.mxu0 0.0
      %1738 = vmatpush1.xpose.msra.mxu0 0.0
      %1739 = vmatprep.subr.mxu0 0.0
      %1740 = vmatpush1.xpose.msra.mxu0 0.0
      %1741 = vmatprep.subr.mxu0 0.0
      %1742 = vmatpush1.xpose.msra.mxu0 0.0
      %1743 = vmatprep.subr.mxu0 0.0
      %1744 = vmatpush1.xpose.msra.mxu0 0.0
      %1745 = vmatprep.subr.mxu0 0.0
      %1746 = vmatpush1.xpose.msra.mxu0 0.0
      %1747 = vmatprep.subr.mxu0 0.0
      %1748 = vmatpush1.xpose.msra.mxu0 0.0
      %1749 = vmatprep.subr.mxu0 0.0
      %1750 = vmatpush1.xpose.msra.mxu0 0.0
      %1751 = vmatprep.subr.mxu0 0.0
      %1752 = vmatpush1.xpose.msra.mxu0 0.0
      %1753 = vmatprep.subr.mxu0 0.0
      %1754 = vmatpush1.xpose.msra.mxu0 0.0
      %1755 = vmatprep.subr.mxu0 0.0
      %1756 = vmatpush1.xpose.msra.mxu0 0.0
      %1757 = vmatprep.mubr.f32.mxu0 0.0
      %1758 = vmatmul.mubr.f32.gmra.mrb[0].mxu0 %v1688
      %v1759 = vpop.f32.mrb[0].mxu0
      %v1760 = vadd.f32 0.0, %v1759
      %v1761 = vpop.f32.mrb[0].mxu0
      %1762 = vdwg.mxu0
      %v1763 = vsel %vm695, %v1760, -inf
      %1764 = vmax.xlane.f32.xlu0 %v1763
      %v1765 = vpop.xlane.xlu0 %1764
      %v1766 = vsub.f32 %v1760, %v1765
      %v1767 = vmul.f32 %v1766, 1.442695
      %v1768 = vpow.pop %v1767
      %v1769 = vsel %vm695, %v1768, 0.0
      %1770 = vadd.xlane.f32.xlu0 %v1769
      %v1771 = vpop.xlane.xlu0 %1770
      %v1772 = vrcp.pop %v1771
      %v1773 = vmul.f32 %v1768, %v1772
      %v1775 = vsel %vm695, %v1773, 0
      %1777 = vmatprep.subr.mxu0 0.0
      %1778 = vmatpush1.msra.mxu0 %v1684
      %1779 = vmatprep.subr.mxu0 0.0
      %1780 = vmatpush1.msra.mxu0 0.0
      %1781 = vmatprep.subr.mxu0 0.0
      %1782 = vmatpush1.msra.mxu0 0.0
      %1783 = vmatprep.subr.mxu0 0.0
      %1784 = vmatpush1.msra.mxu0 0.0
      %1785 = vmatprep.subr.mxu0 0.0
      %1786 = vmatpush1.msra.mxu0 0.0
      %1787 = vmatprep.subr.mxu0 0.0
      %1788 = vmatpush1.msra.mxu0 0.0
      %1789 = vmatprep.subr.mxu0 0.0
      %1790 = vmatpush1.msra.mxu0 0.0
      %1791 = vmatprep.subr.mxu0 0.0
      %1792 = vmatpush1.msra.mxu0 0.0
      %1793 = vmatprep.subr.mxu0 0.0
      %1794 = vmatpush1.msra.mxu0 0.0
      %1795 = vmatprep.subr.mxu0 0.0
      %1796 = vmatpush1.msra.mxu0 0.0
      %1797 = vmatprep.subr.mxu0 0.0
      %1798 = vmatpush1.msra.mxu0 0.0
      %1799 = vmatprep.subr.mxu0 0.0
      %1800 = vmatpush1.msra.mxu0 0.0
      %1801 = vmatprep.subr.mxu0 0.0
      %1802 = vmatpush1.msra.mxu0 0.0
      %1803 = vmatprep.subr.mxu0 0.0
      %1804 = vmatpush1.msra.mxu0 0.0
      %1805 = vmatprep.subr.mxu0 0.0
      %1806 = vmatpush1.msra.mxu0 0.0
      %1807 = vmatprep.subr.mxu0 0.0
      %1808 = vmatpush1.msra.mxu0 0.0
      %1809 = vmatprep.subr.mxu0 0.0
      %1810 = vmatpush1.msra.mxu0 0.0
      %1811 = vmatprep.subr.mxu0 0.0
      %1812 = vmatpush1.msra.mxu0 0.0
      %1813 = vmatprep.subr.mxu0 0.0
      %1814 = vmatpush1.msra.mxu0 0.0
      %1815 = vmatprep.subr.mxu0 0.0
      %1816 = vmatpush1.msra.mxu0 0.0
      %1817 = vmatprep.subr.mxu0 0.0
      %1818 = vmatpush1.msra.mxu0 0.0
      %1819 = vmatprep.subr.mxu0 0.0
      %1820 = vmatpush1.msra.mxu0 0.0
      %1821 = vmatprep.subr.mxu0 0.0
      %1822 = vmatpush1.msra.mxu0 0.0
      %1823 = vmatprep.subr.mxu0 0.0
      %1824 = vmatpush1.msra.mxu0 0.0
      %1825 = vmatprep.subr.mxu0 0.0
      %1826 = vmatpush1.msra.mxu0 0.0
      %1827 = vmatprep.subr.mxu0 0.0
      %1828 = vmatpush1.msra.mxu0 0.0
      %1829 = vmatprep.subr.mxu0 0.0
      %1830 = vmatpush1.msra.mxu0 0.0
      %1831 = vmatprep.subr.mxu0 0.0
      %1832 = vmatpush1.msra.mxu0 0.0
      %1833 = vmatprep.subr.mxu0 0.0
      %1834 = vmatpush1.msra.mxu0 0.0
      %1835 = vmatprep.subr.mxu0 0.0
      %1836 = vmatpush1.msra.mxu0 0.0
      %1837 = vmatprep.subr.mxu0 0.0
      %1838 = vmatpush1.msra.mxu0 0.0
      %1839 = vmatprep.subr.mxu0 0.0
      %1840 = vmatpush1.msra.mxu0 0.0
      %1841 = vmatprep.mubr.f32.mxu0 0.0
      %1842 = vmatmul.mubr.f32.gmra.mrb[0].mxu0 %v1775
      %v1843 = vpop.f32.mrb[0].mxu0
      %v1844 = vadd.f32 0.0, %v1843
      %v1845 = vpop.f32.mrb[0].mxu0
      %1846 = vdwg.mxu0
      %s1847 = scalar_lea.vmem %s4, 16
      %v1848 = vld [vmem:[%s1847] sm:$0xff]
      %v1850 = vsel %vm695, %v1844, 0
      %1852 = vmatprep.subr.mxu0 0.0
      %1853 = vmatpush1.msra.mxu0 %v1848
      %1854 = vmatprep.subr.mxu0 0.0
      %1855 = vmatpush1.msra.mxu0 0.0
      %1856 = vmatprep.subr.mxu0 0.0
      %1857 = vmatpush1.msra.mxu0 0.0
      %1858 = vmatprep.subr.mxu0 0.0
      %1859 = vmatpush1.msra.mxu0 0.0
      %1860 = vmatprep.subr.mxu0 0.0
      %1861 = vmatpush1.msra.mxu0 0.0
      %1862 = vmatprep.subr.mxu0 0.0
      %1863 = vmatpush1.msra.mxu0 0.0
      %1864 = vmatprep.subr.mxu0 0.0
      %1865 = vmatpush1.msra.mxu0 0.0
      %1866 = vmatprep.subr.mxu0 0.0
      %1867 = vmatpush1.msra.mxu0 0.0
      %1868 = vmatprep.subr.mxu0 0.0
      %1869 = vmatpush1.msra.mxu0 0.0
      %1870 = vmatprep.subr.mxu0 0.0
      %1871 = vmatpush1.msra.mxu0 0.0
      %1872 = vmatprep.subr.mxu0 0.0
      %1873 = vmatpush1.msra.mxu0 0.0
      %1874 = vmatprep.subr.mxu0 0.0
      %1875 = vmatpush1.msra.mxu0 0.0
      %1876 = vmatprep.subr.mxu0 0.0
      %1877 = vmatpush1.msra.mxu0 0.0
      %1878 = vmatprep.subr.mxu0 0.0
      %1879 = vmatpush1.msra.mxu0 0.0
      %1880 = vmatprep.subr.mxu0 0.0
      %1881 = vmatpush1.msra.mxu0 0.0
      %1882 = vmatprep.subr.mxu0 0.0
      %1883 = vmatpush1.msra.mxu0 0.0
      %1884 = vmatprep.subr.mxu0 0.0
      %1885 = vmatpush1.msra.mxu0 0.0
      %1886 = vmatprep.subr.mxu0 0.0
      %1887 = vmatpush1.msra.mxu0 0.0
      %1888 = vmatprep.subr.mxu0 0.0
      %1889 = vmatpush1.msra.mxu0 0.0
      %1890 = vmatprep.subr.mxu0 0.0
      %1891 = vmatpush1.msra.mxu0 0.0
      %1892 = vmatprep.subr.mxu0 0.0
      %1893 = vmatpush1.msra.mxu0 0.0
      %1894 = vmatprep.subr.mxu0 0.0
      %1895 = vmatpush1.msra.mxu0 0.0
      %1896 = vmatprep.subr.mxu0 0.0
      %1897 = vmatpush1.msra.mxu0 0.0
      %1898 = vmatprep.subr.mxu0 0.0
      %1899 = vmatpush1.msra.mxu0 0.0
      %1900 = vmatprep.subr.mxu0 0.0
      %1901 = vmatpush1.msra.mxu0 0.0
      %1902 = vmatprep.subr.mxu0 0.0
      %1903 = vmatpush1.msra.mxu0 0.0
      %1904 = vmatprep.subr.mxu0 0.0
      %1905 = vmatpush1.msra.mxu0 0.0
      %1906 = vmatprep.subr.mxu0 0.0
      %1907 = vmatpush1.msra.mxu0 0.0
      %1908 = vmatprep.subr.mxu0 0.0
      %1909 = vmatpush1.msra.mxu0 0.0
      %1910 = vmatprep.subr.mxu0 0.0
      %1911 = vmatpush1.msra.mxu0 0.0
      %1912 = vmatprep.subr.mxu0 0.0
      %1913 = vmatpush1.msra.mxu0 0.0
      %1914 = vmatprep.subr.mxu0 0.0
      %1915 = vmatpush1.msra.mxu0 0.0
      %1916 = vmatprep.mubr.f32.mxu0 0.0
      %1917 = vmatmul.mubr.f32.gmra.mrb[0].mxu0 %v1850
      %v1918 = vpop.f32.mrb[0].mxu0
      %v1919 = vadd.f32 0.0, %v1918
      %v1920 = vpop.f32.mrb[0].mxu0
      %1921 = vdwg.mxu0
      %v1922 = vadd.f32 %v1423, %v1919
      %s1923 = scalar_lea.vmem %s1, 384
      %v1924 = vld [vmem:[%s1923] sm:$0xff]
      %v1925 = vld [vmem:[%s1923 + $0x8] sm:$0xff]
      %v1926 = vld [vmem:[%s1923 + $0x10] sm:$0xff]
      %v1927 = vld [vmem:[%s1923 + $0x18] sm:$0xff]
      %v1928 = vld [vmem:[%s1923 + $0x20] sm:$0xff]
      %v1929 = vld [vmem:[%s1923 + $0x28] sm:$0xff]
      %v1930 = vld [vmem:[%s1923 + $0x30] sm:$0xff]
      %v1931 = vld [vmem:[%s1923 + $0x38] sm:$0xff]
      %v1932 = vld [vmem:[%s1923 + $0x40] sm:$0xff]
      %v1933 = vld [vmem:[%s1923 + $0x48] sm:$0xff]
      %v1934 = vld [vmem:[%s1923 + $0x50] sm:$0xff]
      %v1935 = vld [vmem:[%s1923 + $0x58] sm:$0xff]
      %v1936 = vld [vmem:[%s1923 + $0x60] sm:$0xff]
      %v1937 = vld [vmem:[%s1923 + $0x68] sm:$0xff]
      %v1938 = vld [vmem:[%s1923 + $0x70] sm:$0xff]
      %v1939 = vld [vmem:[%s1923 + $0x78] sm:$0xff]
      %1940 = vmatprep.subr.mxu0 0.0
      %1941 = vmatpush1.msra.mxu0 %v1924
      %1942 = vmatprep.subr.mxu0 0.0
      %1943 = vmatpush1.msra.mxu0 %v1925
      %1944 = vmatprep.subr.mxu0 0.0
      %1945 = vmatpush1.msra.mxu0 %v1926
      %1946 = vmatprep.subr.mxu0 0.0
      %1947 = vmatpush1.msra.mxu0 %v1927
      %1948 = vmatprep.subr.mxu0 0.0
      %1949 = vmatpush1.msra.mxu0 %v1928
      %1950 = vmatprep.subr.mxu0 0.0
      %1951 = vmatpush1.msra.mxu0 %v1929
      %1952 = vmatprep.subr.mxu0 0.0
      %1953 = vmatpush1.msra.mxu0 %v1930
      %1954 = vmatprep.subr.mxu0 0.0
      %1955 = vmatpush1.msra.mxu0 %v1931
      %1956 = vmatprep.subr.mxu0 0.0
      %1957 = vmatpush1.msra.mxu0 %v1932
      %1958 = vmatprep.subr.mxu0 0.0
      %1959 = vmatpush1.msra.mxu0 %v1933
      %1960 = vmatprep.subr.mxu0 0.0
      %1961 = vmatpush1.msra.mxu0 %v1934
      %1962 = vmatprep.subr.mxu0 0.0
      %1963 = vmatpush1.msra.mxu0 %v1935
      %1964 = vmatprep.subr.mxu0 0.0
      %1965 = vmatpush1.msra.mxu0 %v1936
      %1966 = vmatprep.subr.mxu0 0.0
      %1967 = vmatpush1.msra.mxu0 %v1937
      %1968 = vmatprep.subr.mxu0 0.0
      %1969 = vmatpush1.msra.mxu0 %v1938
      %1970 = vmatprep.subr.mxu0 0.0
      %1971 = vmatpush1.msra.mxu0 %v1939
      %1972 = vmatprep.subr.mxu0 0.0
      %1973 = vmatpush1.msra.mxu0 0.0
      %1974 = vmatprep.subr.mxu0 0.0
      %1975 = vmatpush1.msra.mxu0 0.0
      %1976 = vmatprep.subr.mxu0 0.0
      %1977 = vmatpush1.msra.mxu0 0.0
      %1978 = vmatprep.subr.mxu0 0.0
      %1979 = vmatpush1.msra.mxu0 0.0
      %1980 = vmatprep.subr.mxu0 0.0
      %1981 = vmatpush1.msra.mxu0 0.0
      %1982 = vmatprep.subr.mxu0 0.0
      %1983 = vmatpush1.msra.mxu0 0.0
      %1984 = vmatprep.subr.mxu0 0.0
      %1985 = vmatpush1.msra.mxu0 0.0
      %1986 = vmatprep.subr.mxu0 0.0
      %1987 = vmatpush1.msra.mxu0 0.0
      %1988 = vmatprep.subr.mxu0 0.0
      %1989 = vmatpush1.msra.mxu0 0.0
      %1990 = vmatprep.subr.mxu0 0.0
      %1991 = vmatpush1.msra.mxu0 0.0
      %1992 = vmatprep.subr.mxu0 0.0
      %1993 = vmatpush1.msra.mxu0 0.0
      %1994 = vmatprep.subr.mxu0 0.0
      %1995 = vmatpush1.msra.mxu0 0.0
      %1996 = vmatprep.subr.mxu0 0.0
      %1997 = vmatpush1.msra.mxu0 0.0
      %1998 = vmatprep.subr.mxu0 0.0
      %1999 = vmatpush1.msra.mxu0 0.0
      %2000 = vmatprep.subr.mxu0 0.0
      %2001 = vmatpush1.msra.mxu0 0.0
      %2002 = vmatprep.subr.mxu0 0.0
      %2003 = vmatpush1.msra.mxu0 0.0
      %2004 = vmatprep.mubr.f32.mxu0 0.0
      %2005 = vmatmul.mubr.f32.gmra.mrb[0].mxu0 %v436
      %v2006 = vpop.f32.mrb[0].mxu0
      %v2007 = vadd.f32 0.0, %v2006
      %v2008 = vpop.f32.mrb[0].mxu0
      %2009 = vdwg.mxu0
      %s2010 = scalar_lea.vmem %s2, 384
      %v2011 = vld [vmem:[%s2010] sm:$0xff]
      %v2012 = vld [vmem:[%s2010 + $0x8] sm:$0xff]
      %v2013 = vld [vmem:[%s2010 + $0x10] sm:$0xff]
      %v2014 = vld [vmem:[%s2010 + $0x18] sm:$0xff]
      %v2015 = vld [vmem:[%s2010 + $0x20] sm:$0xff]
      %v2016 = vld [vmem:[%s2010 + $0x28] sm:$0xff]
      %v2017 = vld [vmem:[%s2010 + $0x30] sm:$0xff]
      %v2018 = vld [vmem:[%s2010 + $0x38] sm:$0xff]
      %v2019 = vld [vmem:[%s2010 + $0x40] sm:$0xff]
      %v2020 = vld [vmem:[%s2010 + $0x48] sm:$0xff]
      %v2021 = vld [vmem:[%s2010 + $0x50] sm:$0xff]
      %v2022 = vld [vmem:[%s2010 + $0x58] sm:$0xff]
      %v2023 = vld [vmem:[%s2010 + $0x60] sm:$0xff]
      %v2024 = vld [vmem:[%s2010 + $0x68] sm:$0xff]
      %v2025 = vld [vmem:[%s2010 + $0x70] sm:$0xff]
      %v2026 = vld [vmem:[%s2010 + $0x78] sm:$0xff]
      %2027 = vmatprep.subr.mxu0 0.0
      %2028 = vmatpush1.msra.mxu0 %v2011
      %2029 = vmatprep.subr.mxu0 0.0
      %2030 = vmatpush1.msra.mxu0 %v2012
      %2031 = vmatprep.subr.mxu0 0.0
      %2032 = vmatpush1.msra.mxu0 %v2013
      %2033 = vmatprep.subr.mxu0 0.0
      %2034 = vmatpush1.msra.mxu0 %v2014
      %2035 = vmatprep.subr.mxu0 0.0
      %2036 = vmatpush1.msra.mxu0 %v2015
      %2037 = vmatprep.subr.mxu0 0.0
      %2038 = vmatpush1.msra.mxu0 %v2016
      %2039 = vmatprep.subr.mxu0 0.0
      %2040 = vmatpush1.msra.mxu0 %v2017
      %2041 = vmatprep.subr.mxu0 0.0
      %2042 = vmatpush1.msra.mxu0 %v2018
      %2043 = vmatprep.subr.mxu0 0.0
      %2044 = vmatpush1.msra.mxu0 %v2019
      %2045 = vmatprep.subr.mxu0 0.0
      %2046 = vmatpush1.msra.mxu0 %v2020
      %2047 = vmatprep.subr.mxu0 0.0
      %2048 = vmatpush1.msra.mxu0 %v2021
      %2049 = vmatprep.subr.mxu0 0.0
      %2050 = vmatpush1.msra.mxu0 %v2022
      %2051 = vmatprep.subr.mxu0 0.0
      %2052 = vmatpush1.msra.mxu0 %v2023
      %2053 = vmatprep.subr.mxu0 0.0
      %2054 = vmatpush1.msra.mxu0 %v2024
      %2055 = vmatprep.subr.mxu0 0.0
      %2056 = vmatpush1.msra.mxu0 %v2025
      %2057 = vmatprep.subr.mxu0 0.0
      %2058 = vmatpush1.msra.mxu0 %v2026
      %2059 = vmatprep.subr.mxu0 0.0
      %2060 = vmatpush1.msra.mxu0 0.0
      %2061 = vmatprep.subr.mxu0 0.0
      %2062 = vmatpush1.msra.mxu0 0.0
      %2063 = vmatprep.subr.mxu0 0.0
      %2064 = vmatpush1.msra.mxu0 0.0
      %2065 = vmatprep.subr.mxu0 0.0
      %2066 = vmatpush1.msra.mxu0 0.0
      %2067 = vmatprep.subr.mxu0 0.0
      %2068 = vmatpush1.msra.mxu0 0.0
      %2069 = vmatprep.subr.mxu0 0.0
      %2070 = vmatpush1.msra.mxu0 0.0
      %2071 = vmatprep.subr.mxu0 0.0
      %2072 = vmatpush1.msra.mxu0 0.0
      %2073 = vmatprep.subr.mxu0 0.0
      %2074 = vmatpush1.msra.mxu0 0.0
      %2075 = vmatprep.subr.mxu0 0.0
      %2076 = vmatpush1.msra.mxu0 0.0
      %2077 = vmatprep.subr.mxu0 0.0
      %2078 = vmatpush1.msra.mxu0 0.0
      %2079 = vmatprep.subr.mxu0 0.0
      %2080 = vmatpush1.msra.mxu0 0.0
      %2081 = vmatprep.subr.mxu0 0.0
      %2082 = vmatpush1.msra.mxu0 0.0
      %2083 = vmatprep.subr.mxu0 0.0
      %2084 = vmatpush1.msra.mxu0 0.0
      %2085 = vmatprep.subr.mxu0 0.0
      %2086 = vmatpush1.msra.mxu0 0.0
      %2087 = vmatprep.subr.mxu0 0.0
      %2088 = vmatpush1.msra.mxu0 0.0
      %2089 = vmatprep.subr.mxu0 0.0
      %2090 = vmatpush1.msra.mxu0 0.0
      %2091 = vmatprep.mubr.f32.mxu0 0.0
      %2092 = vmatmul.mubr.f32.gmra.mrb[0].mxu0 %v436
      %v2093 = vpop.f32.mrb[0].mxu0
      %v2094 = vadd.f32 0.0, %v2093
      %v2095 = vpop.f32.mrb[0].mxu0
      %2096 = vdwg.mxu0
      %s2097 = scalar_lea.vmem %s3, 384
      %v2098 = vld [vmem:[%s2097] sm:$0xff]
      %v2099 = vld [vmem:[%s2097 + $0x8] sm:$0xff]
      %v2100 = vld [vmem:[%s2097 + $0x10] sm:$0xff]
      %v2101 = vld [vmem:[%s2097 + $0x18] sm:$0xff]
      %v2102 = vld [vmem:[%s2097 + $0x20] sm:$0xff]
      %v2103 = vld [vmem:[%s2097 + $0x28] sm:$0xff]
      %v2104 = vld [vmem:[%s2097 + $0x30] sm:$0xff]
      %v2105 = vld [vmem:[%s2097 + $0x38] sm:$0xff]
      %v2106 = vld [vmem:[%s2097 + $0x40] sm:$0xff]
      %v2107 = vld [vmem:[%s2097 + $0x48] sm:$0xff]
      %v2108 = vld [vmem:[%s2097 + $0x50] sm:$0xff]
      %v2109 = vld [vmem:[%s2097 + $0x58] sm:$0xff]
      %v2110 = vld [vmem:[%s2097 + $0x60] sm:$0xff]
      %v2111 = vld [vmem:[%s2097 + $0x68] sm:$0xff]
      %v2112 = vld [vmem:[%s2097 + $0x70] sm:$0xff]
      %v2113 = vld [vmem:[%s2097 + $0x78] sm:$0xff]
      %2114 = vmatprep.subr.mxu0 0.0
      %2115 = vmatpush1.msra.mxu0 %v2098
      %2116 = vmatprep.subr.mxu0 0.0
      %2117 = vmatpush1.msra.mxu0 %v2099
      %2118 = vmatprep.subr.mxu0 0.0
      %2119 = vmatpush1.msra.mxu0 %v2100
      %2120 = vmatprep.subr.mxu0 0.0
      %2121 = vmatpush1.msra.mxu0 %v2101
      %2122 = vmatprep.subr.mxu0 0.0
      %2123 = vmatpush1.msra.mxu0 %v2102
      %2124 = vmatprep.subr.mxu0 0.0
      %2125 = vmatpush1.msra.mxu0 %v2103
      %2126 = vmatprep.subr.mxu0 0.0
      %2127 = vmatpush1.msra.mxu0 %v2104
      %2128 = vmatprep.subr.mxu0 0.0
      %2129 = vmatpush1.msra.mxu0 %v2105
      %2130 = vmatprep.subr.mxu0 0.0
      %2131 = vmatpush1.msra.mxu0 %v2106
      %2132 = vmatprep.subr.mxu0 0.0
      %2133 = vmatpush1.msra.mxu0 %v2107
      %2134 = vmatprep.subr.mxu0 0.0
      %2135 = vmatpush1.msra.mxu0 %v2108
      %2136 = vmatprep.subr.mxu0 0.0
      %2137 = vmatpush1.msra.mxu0 %v2109
      %2138 = vmatprep.subr.mxu0 0.0
      %2139 = vmatpush1.msra.mxu0 %v2110
      %2140 = vmatprep.subr.mxu0 0.0
      %2141 = vmatpush1.msra.mxu0 %v2111
      %2142 = vmatprep.subr.mxu0 0.0
      %2143 = vmatpush1.msra.mxu0 %v2112
      %2144 = vmatprep.subr.mxu0 0.0
      %2145 = vmatpush1.msra.mxu0 %v2113
      %2146 = vmatprep.subr.mxu0 0.0
      %2147 = vmatpush1.msra.mxu0 0.0
      %2148 = vmatprep.subr.mxu0 0.0
      %2149 = vmatpush1.msra.mxu0 0.0
      %2150 = vmatprep.subr.mxu0 0.0
      %2151 = vmatpush1.msra.mxu0 0.0
      %2152 = vmatprep.subr.mxu0 0.0
      %2153 = vmatpush1.msra.mxu0 0.0
      %2154 = vmatprep.subr.mxu0 0.0
      %2155 = vmatpush1.msra.mxu0 0.0
      %2156 = vmatprep.subr.mxu0 0.0
      %2157 = vmatpush1.msra.mxu0 0.0
      %2158 = vmatprep.subr.mxu0 0.0
      %2159 = vmatpush1.msra.mxu0 0.0
      %2160 = vmatprep.subr.mxu0 0.0
      %2161 = vmatpush1.msra.mxu0 0.0
      %2162 = vmatprep.subr.mxu0 0.0
      %2163 = vmatpush1.msra.mxu0 0.0
      %2164 = vmatprep.subr.mxu0 0.0
      %2165 = vmatpush1.msra.mxu0 0.0
      %2166 = vmatprep.subr.mxu0 0.0
      %2167 = vmatpush1.msra.mxu0 0.0
      %2168 = vmatprep.subr.mxu0 0.0
      %2169 = vmatpush1.msra.mxu0 0.0
      %2170 = vmatprep.subr.mxu0 0.0
      %2171 = vmatpush1.msra.mxu0 0.0
      %2172 = vmatprep.subr.mxu0 0.0
      %2173 = vmatpush1.msra.mxu0 0.0
      %2174 = vmatprep.subr.mxu0 0.0
      %2175 = vmatpush1.msra.mxu0 0.0
      %2176 = vmatprep.subr.mxu0 0.0
      %2177 = vmatpush1.msra.mxu0 0.0
      %2178 = vmatprep.mubr.f32.mxu0 0.0
      %2179 = vmatmul.mubr.f32.gmra.mrb[0].mxu0 %v436
      %v2180 = vpop.f32.mrb[0].mxu0
      %v2181 = vadd.f32 0.0, %v2180
      %v2182 = vpop.f32.mrb[0].mxu0
      %2183 = vdwg.mxu0
      %v2185 = vsel %vm695, %v2007, 0
      %v2188 = vsel %vm695, %v2094, 0
      %2190 = vmatprep.subr.mxu0 0.0
      %2191 = vmatpush1.xpose.msra.mxu0 %v2188
      %2192 = vmatprep.subr.mxu0 0.0
      %2193 = vmatpush1.xpose.msra.mxu0 0.0
      %2194 = vmatprep.subr.mxu0 0.0
      %2195 = vmatpush1.xpose.msra.mxu0 0.0
      %2196 = vmatprep.subr.mxu0 0.0
      %2197 = vmatpush1.xpose.msra.mxu0 0.0
      %2198 = vmatprep.subr.mxu0 0.0
      %2199 = vmatpush1.xpose.msra.mxu0 0.0
      %2200 = vmatprep.subr.mxu0 0.0
      %2201 = vmatpush1.xpose.msra.mxu0 0.0
      %2202 = vmatprep.subr.mxu0 0.0
      %2203 = vmatpush1.xpose.msra.mxu0 0.0
      %2204 = vmatprep.subr.mxu0 0.0
      %2205 = vmatpush1.xpose.msra.mxu0 0.0
      %2206 = vmatprep.subr.mxu0 0.0
      %2207 = vmatpush1.xpose.msra.mxu0 0.0
      %2208 = vmatprep.subr.mxu0 0.0
      %2209 = vmatpush1.xpose.msra.mxu0 0.0
      %2210 = vmatprep.subr.mxu0 0.0
      %2211 = vmatpush1.xpose.msra.mxu0 0.0
      %2212 = vmatprep.subr.mxu0 0.0
      %2213 = vmatpush1.xpose.msra.mxu0 0.0
      %2214 = vmatprep.subr.mxu0 0.0
      %2215 = vmatpush1.xpose.msra.mxu0 0.0
      %2216 = vmatprep.subr.mxu0 0.0
      %2217 = vmatpush1.xpose.msra.mxu0 0.0
      %2218 = vmatprep.subr.mxu0 0.0
      %2219 = vmatpush1.xpose.msra.mxu0 0.0
      %2220 = vmatprep.subr.mxu0 0.0
      %2221 = vmatpush1.xpose.msra.mxu0 0.0
      %2222 = vmatprep.subr.mxu0 0.0
      %2223 = vmatpush1.xpose.msra.mxu0 0.0
      %2224 = vmatprep.subr.mxu0 0.0
      %2225 = vmatpush1.xpose.msra.mxu0 0.0
      %2226 = vmatprep.subr.mxu0 0.0
      %2227 = vmatpush1.xpose.msra.mxu0 0.0
      %2228 = vmatprep.subr.mxu0 0.0
      %2229 = vmatpush1.xpose.msra.mxu0 0.0
      %2230 = vmatprep.subr.mxu0 0.0
      %2231 = vmatpush1.xpose.msra.mxu0 0.0
      %2232 = vmatprep.subr.mxu0 0.0
      %2233 = vmatpush1.xpose.msra.mxu0 0.0
      %2234 = vmatprep.subr.mxu0 0.0
      %2235 = vmatpush1.xpose.msra.mxu0 0.0
      %2236 = vmatprep.subr.mxu0 0.0
      %2237 = vmatpush1.xpose.msra.mxu0 0.0
      %2238 = vmatprep.subr.mxu0 0.0
      %2239 = vmatpush1.xpose.msra.mxu0 0.0
      %2240 = vmatprep.subr.mxu0 0.0
      %2241 = vmatpush1.xpose.msra.mxu0 0.0
      %2242 = vmatprep.subr.mxu0 0.0
      %2243 = vmatpush1.xpose.msra.mxu0 0.0
      %2244 = vmatprep.subr.mxu0 0.0
      %2245 = vmatpush1.xpose.msra.mxu0 0.0
      %2246 = vmatprep.subr.mxu0 0.0
      %2247 = vmatpush1.xpose.msra.mxu0 0.0
      %2248 = vmatprep.subr.mxu0 0.0
      %2249 = vmatpush1.xpose.msra.mxu0 0.0
      %2250 = vmatprep.subr.mxu0 0.0
      %2251 = vmatpush1.xpose.msra.mxu0 0.0
      %2252 = vmatprep.subr.mxu0 0.0
      %2253 = vmatpush1.xpose.msra.mxu0 0.0
      %2254 = vmatprep.mubr.f32.mxu0 0.0
      %2255 = vmatmul.mubr.f32.gmra.mrb[0].mxu0 %v2185
      %v2256 = vpop.f32.mrb[0].mxu0
      %v2257 = vadd.f32 0.0, %v2256
      %v2258 = vpop.f32.mrb[0].mxu0
      %2259 = vdwg.mxu0
      %v2260 = vsel %vm695, %v2257, -inf
      %2261 = vmax.xlane.f32.xlu0 %v2260
      %v2262 = vpop.xlane.xlu0 %2261
      %v2263 = vsub.f32 %v2257, %v2262
      %v2264 = vmul.f32 %v2263, 1.442695
      %v2265 = vpow.pop %v2264
      %v2266 = vsel %vm695, %v2265, 0.0
      %2267 = vadd.xlane.f32.xlu0 %v2266
      %v2268 = vpop.xlane.xlu0 %2267
      %v2269 = vrcp.pop %v2268
      %v2270 = vmul.f32 %v2265, %v2269
      %v2272 = vsel %vm695, %v2270, 0
      %2274 = vmatprep.subr.mxu0 0.0
      %2275 = vmatpush1.msra.mxu0 %v2181
      %2276 = vmatprep.subr.mxu0 0.0
      %2277 = vmatpush1.msra.mxu0 0.0
      %2278 = vmatprep.subr.mxu0 0.0
      %2279 = vmatpush1.msra.mxu0 0.0
      %2280 = vmatprep.subr.mxu0 0.0
      %2281 = vmatpush1.msra.mxu0 0.0
      %2282 = vmatprep.subr.mxu0 0.0
      %2283 = vmatpush1.msra.mxu0 0.0
      %2284 = vmatprep.subr.mxu0 0.0
      %2285 = vmatpush1.msra.mxu0 0.0
      %2286 = vmatprep.subr.mxu0 0.0
      %2287 = vmatpush1.msra.mxu0 0.0
      %2288 = vmatprep.subr.mxu0 0.0
      %2289 = vmatpush1.msra.mxu0 0.0
      %2290 = vmatprep.subr.mxu0 0.0
      %2291 = vmatpush1.msra.mxu0 0.0
      %2292 = vmatprep.subr.mxu0 0.0
      %2293 = vmatpush1.msra.mxu0 0.0
      %2294 = vmatprep.subr.mxu0 0.0
      %2295 = vmatpush1.msra.mxu0 0.0
      %2296 = vmatprep.subr.mxu0 0.0
      %2297 = vmatpush1.msra.mxu0 0.0
      %2298 = vmatprep.subr.mxu0 0.0
      %2299 = vmatpush1.msra.mxu0 0.0
      %2300 = vmatprep.subr.mxu0 0.0
      %2301 = vmatpush1.msra.mxu0 0.0
      %2302 = vmatprep.subr.mxu0 0.0
      %2303 = vmatpush1.msra.mxu0 0.0
      %2304 = vmatprep.subr.mxu0 0.0
      %2305 = vmatpush1.msra.mxu0 0.0
      %2306 = vmatprep.subr.mxu0 0.0
      %2307 = vmatpush1.msra.mxu0 0.0
      %2308 = vmatprep.subr.mxu0 0.0
      %2309 = vmatpush1.msra.mxu0 0.0
      %2310 = vmatprep.subr.mxu0 0.0
      %2311 = vmatpush1.msra.mxu0 0.0
      %2312 = vmatprep.subr.mxu0 0.0
      %2313 = vmatpush1.msra.mxu0 0.0
      %2314 = vmatprep.subr.mxu0 0.0
      %2315 = vmatpush1.msra.mxu0 0.0
      %2316 = vmatprep.subr.mxu0 0.0
      %2317 = vmatpush1.msra.mxu0 0.0
      %2318 = vmatprep.subr.mxu0 0.0
      %2319 = vmatpush1.msra.mxu0 0.0
      %2320 = vmatprep.subr.mxu0 0.0
      %2321 = vmatpush1.msra.mxu0 0.0
      %2322 = vmatprep.subr.mxu0 0.0
      %2323 = vmatpush1.msra.mxu0 0.0
      %2324 = vmatprep.subr.mxu0 0.0
      %2325 = vmatpush1.msra.mxu0 0.0
      %2326 = vmatprep.subr.mxu0 0.0
      %2327 = vmatpush1.msra.mxu0 0.0
      %2328 = vmatprep.subr.mxu0 0.0
      %2329 = vmatpush1.msra.mxu0 0.0
      %2330 = vmatprep.subr.mxu0 0.0
      %2331 = vmatpush1.msra.mxu0 0.0
      %2332 = vmatprep.subr.mxu0 0.0
      %2333 = vmatpush1.msra.mxu0 0.0
      %2334 = vmatprep.subr.mxu0 0.0
      %2335 = vmatpush1.msra.mxu0 0.0
      %2336 = vmatprep.subr.mxu0 0.0
      %2337 = vmatpush1.msra.mxu0 0.0
      %2338 = vmatprep.mubr.f32.mxu0 0.0
      %2339 = vmatmul.mubr.f32.gmra.mrb[0].mxu0 %v2272
      %v2340 = vpop.f32.mrb[0].mxu0
      %v2341 = vadd.f32 0.0, %v2340
      %v2342 = vpop.f32.mrb[0].mxu0
      %2343 = vdwg.mxu0
      %s2344 = scalar_lea.vmem %s4, 24
      %v2345 = vld [vmem:[%s2344] sm:$0xff]
      %v2347 = vsel %vm695, %v2341, 0
      %2349 = vmatprep.subr.mxu0 0.0
      %2350 = vmatpush1.msra.mxu0 %v2345
      %2351 = vmatprep.subr.mxu0 0.0
      %2352 = vmatpush1.msra.mxu0 0.0
      %2353 = vmatprep.subr.mxu0 0.0
      %2354 = vmatpush1.msra.mxu0 0.0
      %2355 = vmatprep.subr.mxu0 0.0
      %2356 = vmatpush1.msra.mxu0 0.0
      %2357 = vmatprep.subr.mxu0 0.0
      %2358 = vmatpush1.msra.mxu0 0.0
      %2359 = vmatprep.subr.mxu0 0.0
      %2360 = vmatpush1.msra.mxu0 0.0
      %2361 = vmatprep.subr.mxu0 0.0
      %2362 = vmatpush1.msra.mxu0 0.0
      %2363 = vmatprep.subr.mxu0 0.0
      %2364 = vmatpush1.msra.mxu0 0.0
      %2365 = vmatprep.subr.mxu0 0.0
      %2366 = vmatpush1.msra.mxu0 0.0
      %2367 = vmatprep.subr.mxu0 0.0
      %2368 = vmatpush1.msra.mxu0 0.0
      %2369 = vmatprep.subr.mxu0 0.0
      %2370 = vmatpush1.msra.mxu0 0.0
      %2371 = vmatprep.subr.mxu0 0.0
      %2372 = vmatpush1.msra.mxu0 0.0
      %2373 = vmatprep.subr.mxu0 0.0
      %2374 = vmatpush1.msra.mxu0 0.0
      %2375 = vmatprep.subr.mxu0 0.0
      %2376 = vmatpush1.msra.mxu0 0.0
      %2377 = vmatprep.subr.mxu0 0.0
      %2378 = vmatpush1.msra.mxu0 0.0
      %2379 = vmatprep.subr.mxu0 0.0
      %2380 = vmatpush1.msra.mxu0 0.0
      %2381 = vmatprep.subr.mxu0 0.0
      %2382 = vmatpush1.msra.mxu0 0.0
      %2383 = vmatprep.subr.mxu0 0.0
      %2384 = vmatpush1.msra.mxu0 0.0
      %2385 = vmatprep.subr.mxu0 0.0
      %2386 = vmatpush1.msra.mxu0 0.0
      %2387 = vmatprep.subr.mxu0 0.0
      %2388 = vmatpush1.msra.mxu0 0.0
      %2389 = vmatprep.subr.mxu0 0.0
      %2390 = vmatpush1.msra.mxu0 0.0
      %2391 = vmatprep.subr.mxu0 0.0
      %2392 = vmatpush1.msra.mxu0 0.0
      %2393 = vmatprep.subr.mxu0 0.0
      %2394 = vmatpush1.msra.mxu0 0.0
      %2395 = vmatprep.subr.mxu0 0.0
      %2396 = vmatpush1.msra.mxu0 0.0
      %2397 = vmatprep.subr.mxu0 0.0
      %2398 = vmatpush1.msra.mxu0 0.0
      %2399 = vmatprep.subr.mxu0 0.0
      %2400 = vmatpush1.msra.mxu0 0.0
      %2401 = vmatprep.subr.mxu0 0.0
      %2402 = vmatpush1.msra.mxu0 0.0
      %2403 = vmatprep.subr.mxu0 0.0
      %2404 = vmatpush1.msra.mxu0 0.0
      %2405 = vmatprep.subr.mxu0 0.0
      %2406 = vmatpush1.msra.mxu0 0.0
      %2407 = vmatprep.subr.mxu0 0.0
      %2408 = vmatpush1.msra.mxu0 0.0
      %2409 = vmatprep.subr.mxu0 0.0
      %2410 = vmatpush1.msra.mxu0 0.0
      %2411 = vmatprep.subr.mxu0 0.0
      %2412 = vmatpush1.msra.mxu0 0.0
      %2413 = vmatprep.mubr.f32.mxu0 0.0
      %2414 = vmatmul.mubr.f32.gmra.mrb[0].mxu0 %v2347
      %v2415 = vpop.f32.mrb[0].mxu0
      %v2416 = vadd.f32 0.0, %v2415
      %v2417 = vpop.f32.mrb[0].mxu0
      %2418 = vdwg.mxu0
      %v2419 = vadd.f32 %v1922, %v2416
      %v2420 = vadd.f32 %v436, %v2419
      %v2421 = vld [vmem:[%s5] sm:$0x1]
      %v2422 = vld [vmem:[%s6] sm:$0x1]
      %v2423 = vlaneseq
      %v2424 = vand.u32 %v2423, 127
      %vm2425 = vcmp.lt.s32.totalorder %v2424, 12
      %v2426 = vsel %vm2425, 1, 0
      %v2427 = vcvt.s32.f32 %v2426
      %2428 = vadd.xlane.f32.xlu0 %v2420
      %v2429 = vpop.xlane.xlu0 %2428
      %v2430 = vmul.f32 %v2429, 0.083333336
      %v2431 = vsub.f32 %v2420, %v2430
      %v2432 = vmul.f32 %v2431, %v2427
      %v2433 = vmul.f32 %v2432, %v2432
      %2434 = vadd.xlane.f32.xlu0 %v2433
      %v2435 = vpop.xlane.xlu0 %2434
      %v2436 = vmul.f32 %v2435, 0.083333336
      %v2437 = vadd.f32 %v2436, 1e-05
      %v2438 = vrsqrt.pop %v2437
      %v2439 = vmul.f32 %v2432, %v2438
      %v2441 = vlaneseq
      %v2442 = vshrl.u32 %v2441, 7
      %v2443 = vsub.s32 0, %v2442
      %v2444 = vrot.slane %v2421, %v2443
      %v2446 = vmul.f32 %v2439, %v2444
      %v2448 = vlaneseq
      %v2449 = vshrl.u32 %v2448, 7
      %v2450 = vsub.s32 0, %v2449
      %v2451 = vrot.slane %v2422, %v2450
      %v2453 = vadd.f32 %v2446, %v2451
      %v2454 = vld [vmem:[%s7] sm:$0xff]
      %v2455 = vld [vmem:[%s7 + $0x8] sm:$0xff]
      %v2456 = vld [vmem:[%s7 + $0x10] sm:$0xff]
      %v2457 = vld [vmem:[%s7 + $0x18] sm:$0xff]
      %v2458 = vld [vmem:[%s7 + $0x20] sm:$0xff]
      %v2459 = vld [vmem:[%s7 + $0x28] sm:$0xff]
      %v2460 = vld [vmem:[%s7 + $0x30] sm:$0xff]
      %v2461 = vld [vmem:[%s7 + $0x38] sm:$0xff]
      %v2462 = vld [vmem:[%s7 + $0x40] sm:$0xff]
      %v2463 = vld [vmem:[%s7 + $0x48] sm:$0xff]
      %v2464 = vld [vmem:[%s7 + $0x50] sm:$0xff]
      %v2465 = vld [vmem:[%s7 + $0x58] sm:$0xff]
      %v2466 = vld [vmem:[%s7 + $0x60] sm:$0xff]
      %v2467 = vld [vmem:[%s7 + $0x68] sm:$0xff]
      %v2468 = vld [vmem:[%s7 + $0x70] sm:$0xff]
      %v2469 = vld [vmem:[%s7 + $0x78] sm:$0xff]
      %v2470 = vld [vmem:[%s8] sm:$0x1]
      %v2472 = vlaneseq
      %v2473 = vshrl.u32 %v2472, 7
      %v2474 = vsub.s32 0, %v2473
      %v2475 = vrot.slane %v2470, %v2474
      %2477 = vmatprep.subr.mxu0 0.0
      %2478 = vmatpush1.msra.mxu0 %v2454
      %2479 = vmatprep.subr.mxu0 0.0
      %2480 = vmatpush1.msra.mxu0 %v2455
      %2481 = vmatprep.subr.mxu0 0.0
      %2482 = vmatpush1.msra.mxu0 %v2456
      %2483 = vmatprep.subr.mxu0 0.0
      %2484 = vmatpush1.msra.mxu0 %v2457
      %2485 = vmatprep.subr.mxu0 0.0
      %2486 = vmatpush1.msra.mxu0 %v2458
      %2487 = vmatprep.subr.mxu0 0.0
      %2488 = vmatpush1.msra.mxu0 %v2459
      %2489 = vmatprep.subr.mxu0 0.0
      %2490 = vmatpush1.msra.mxu0 %v2460
      %2491 = vmatprep.subr.mxu0 0.0
      %2492 = vmatpush1.msra.mxu0 %v2461
      %2493 = vmatprep.subr.mxu0 0.0
      %2494 = vmatpush1.msra.mxu0 %v2462
      %2495 = vmatprep.subr.mxu0 0.0
      %2496 = vmatpush1.msra.mxu0 %v2463
      %2497 = vmatprep.subr.mxu0 0.0
      %2498 = vmatpush1.msra.mxu0 %v2464
      %2499 = vmatprep.subr.mxu0 0.0
      %2500 = vmatpush1.msra.mxu0 %v2465
      %2501 = vmatprep.subr.mxu0 0.0
      %2502 = vmatpush1.msra.mxu0 %v2466
      %2503 = vmatprep.subr.mxu0 0.0
      %2504 = vmatpush1.msra.mxu0 %v2467
      %2505 = vmatprep.subr.mxu0 0.0
      %2506 = vmatpush1.msra.mxu0 %v2468
      %2507 = vmatprep.subr.mxu0 0.0
      %2508 = vmatpush1.msra.mxu0 %v2469
      %2509 = vmatprep.subr.mxu0 0.0
      %2510 = vmatpush1.msra.mxu0 0.0
      %2511 = vmatprep.subr.mxu0 0.0
      %2512 = vmatpush1.msra.mxu0 0.0
      %2513 = vmatprep.subr.mxu0 0.0
      %2514 = vmatpush1.msra.mxu0 0.0
      %2515 = vmatprep.subr.mxu0 0.0
      %2516 = vmatpush1.msra.mxu0 0.0
      %2517 = vmatprep.subr.mxu0 0.0
      %2518 = vmatpush1.msra.mxu0 0.0
      %2519 = vmatprep.subr.mxu0 0.0
      %2520 = vmatpush1.msra.mxu0 0.0
      %2521 = vmatprep.subr.mxu0 0.0
      %2522 = vmatpush1.msra.mxu0 0.0
      %2523 = vmatprep.subr.mxu0 0.0
      %2524 = vmatpush1.msra.mxu0 0.0
      %2525 = vmatprep.subr.mxu0 0.0
      %2526 = vmatpush1.msra.mxu0 0.0
      %2527 = vmatprep.subr.mxu0 0.0
      %2528 = vmatpush1.msra.mxu0 0.0
      %2529 = vmatprep.subr.mxu0 0.0
      %2530 = vmatpush1.msra.mxu0 0.0
      %2531 = vmatprep.subr.mxu0 0.0
      %2532 = vmatpush1.msra.mxu0 0.0
      %2533 = vmatprep.subr.mxu0 0.0
      %2534 = vmatpush1.msra.mxu0 0.0
      %2535 = vmatprep.subr.mxu0 0.0
      %2536 = vmatpush1.msra.mxu0 0.0
      %2537 = vmatprep.subr.mxu0 0.0
      %2538 = vmatpush1.msra.mxu0 0.0
      %2539 = vmatprep.subr.mxu0 0.0
      %2540 = vmatpush1.msra.mxu0 0.0
      %2541 = vmatprep.mubr.f32.mxu0 0.0
      %2542 = vmatmul.mubr.f32.gmra.mrb[0].mxu0 %v2453
      %v2543 = vpop.f32.mrb[0].mxu0
      %v2544 = vadd.f32 %v2475, %v2543
      %v2545 = vpop.f32.mrb[0].mxu0
      %2546 = vdwg.mxu0
      %v2547 = vmax.f32 %v2544, 0.0
      %v2548 = vld [vmem:[%s9] sm:$0xff]
      %v2549 = vld [vmem:[%s9 + $0x8] sm:$0xff]
      %v2550 = vld [vmem:[%s9 + $0x10] sm:$0xff]
      %v2551 = vld [vmem:[%s9 + $0x18] sm:$0xff]
      %v2552 = vld [vmem:[%s9 + $0x20] sm:$0xff]
      %v2553 = vld [vmem:[%s9 + $0x28] sm:$0xff]
      %v2554 = vld [vmem:[%s9 + $0x30] sm:$0xff]
      %v2555 = vld [vmem:[%s9 + $0x38] sm:$0xff]
      %v2556 = vld [vmem:[%s9 + $0x40] sm:$0xff]
      %v2557 = vld [vmem:[%s9 + $0x48] sm:$0xff]
      %v2558 = vld [vmem:[%s9 + $0x50] sm:$0xff]
      %v2559 = vld [vmem:[%s9 + $0x58] sm:$0xff]
      %v2560 = vld [vmem:[%s9 + $0x60] sm:$0xff]
      %v2561 = vld [vmem:[%s9 + $0x68] sm:$0xff]
      %v2562 = vld [vmem:[%s9 + $0x70] sm:$0xff]
      %v2563 = vld [vmem:[%s9 + $0x78] sm:$0xff]
      %v2564 = vld [vmem:[%s10] sm:$0x1]
      %v2566 = vlaneseq
      %v2567 = vshrl.u32 %v2566, 7
      %v2568 = vsub.s32 0, %v2567
      %v2569 = vrot.slane %v2564, %v2568
      %2571 = vmatprep.subr.mxu0 0.0
      %2572 = vmatpush1.msra.mxu0 %v2548
      %2573 = vmatprep.subr.mxu0 0.0
      %2574 = vmatpush1.msra.mxu0 %v2549
      %2575 = vmatprep.subr.mxu0 0.0
      %2576 = vmatpush1.msra.mxu0 %v2550
      %2577 = vmatprep.subr.mxu0 0.0
      %2578 = vmatpush1.msra.mxu0 %v2551
      %2579 = vmatprep.subr.mxu0 0.0
      %2580 = vmatpush1.msra.mxu0 %v2552
      %2581 = vmatprep.subr.mxu0 0.0
      %2582 = vmatpush1.msra.mxu0 %v2553
      %2583 = vmatprep.subr.mxu0 0.0
      %2584 = vmatpush1.msra.mxu0 %v2554
      %2585 = vmatprep.subr.mxu0 0.0
      %2586 = vmatpush1.msra.mxu0 %v2555
      %2587 = vmatprep.subr.mxu0 0.0
      %2588 = vmatpush1.msra.mxu0 %v2556
      %2589 = vmatprep.subr.mxu0 0.0
      %2590 = vmatpush1.msra.mxu0 %v2557
      %2591 = vmatprep.subr.mxu0 0.0
      %2592 = vmatpush1.msra.mxu0 %v2558
      %2593 = vmatprep.subr.mxu0 0.0
      %2594 = vmatpush1.msra.mxu0 %v2559
      %2595 = vmatprep.subr.mxu0 0.0
      %2596 = vmatpush1.msra.mxu0 %v2560
      %2597 = vmatprep.subr.mxu0 0.0
      %2598 = vmatpush1.msra.mxu0 %v2561
      %2599 = vmatprep.subr.mxu0 0.0
      %2600 = vmatpush1.msra.mxu0 %v2562
      %2601 = vmatprep.subr.mxu0 0.0
      %2602 = vmatpush1.msra.mxu0 %v2563
      %2603 = vmatprep.subr.mxu0 0.0
      %2604 = vmatpush1.msra.mxu0 0.0
      %2605 = vmatprep.subr.mxu0 0.0
      %2606 = vmatpush1.msra.mxu0 0.0
      %2607 = vmatprep.subr.mxu0 0.0
      %2608 = vmatpush1.msra.mxu0 0.0
      %2609 = vmatprep.subr.mxu0 0.0
      %2610 = vmatpush1.msra.mxu0 0.0
      %2611 = vmatprep.subr.mxu0 0.0
      %2612 = vmatpush1.msra.mxu0 0.0
      %2613 = vmatprep.subr.mxu0 0.0
      %2614 = vmatpush1.msra.mxu0 0.0
      %2615 = vmatprep.subr.mxu0 0.0
      %2616 = vmatpush1.msra.mxu0 0.0
      %2617 = vmatprep.subr.mxu0 0.0
      %2618 = vmatpush1.msra.mxu0 0.0
      %2619 = vmatprep.subr.mxu0 0.0
      %2620 = vmatpush1.msra.mxu0 0.0
      %2621 = vmatprep.subr.mxu0 0.0
      %2622 = vmatpush1.msra.mxu0 0.0
      %2623 = vmatprep.subr.mxu0 0.0
      %2624 = vmatpush1.msra.mxu0 0.0
      %2625 = vmatprep.subr.mxu0 0.0
      %2626 = vmatpush1.msra.mxu0 0.0
      %2627 = vmatprep.subr.mxu0 0.0
      %2628 = vmatpush1.msra.mxu0 0.0
      %2629 = vmatprep.subr.mxu0 0.0
      %2630 = vmatpush1.msra.mxu0 0.0
      %2631 = vmatprep.subr.mxu0 0.0
      %2632 = vmatpush1.msra.mxu0 0.0
      %2633 = vmatprep.subr.mxu0 0.0
      %2634 = vmatpush1.msra.mxu0 0.0
      %2635 = vmatprep.mubr.f32.mxu0 0.0
      %2636 = vmatmul.mubr.f32.gmra.mrb[0].mxu0 %v2547
      %v2637 = vpop.f32.mrb[0].mxu0
      %v2638 = vadd.f32 %v2569, %v2637
      %v2639 = vpop.f32.mrb[0].mxu0
      %2640 = vdwg.mxu0
      %v2641 = vadd.f32 %v2453, %v2638
      %v2642 = vld [vmem:[%s11] sm:$0x1]
      %v2643 = vld [vmem:[%s12] sm:$0x1]
      %2644 = vadd.xlane.f32.xlu0 %v2641
      %v2645 = vpop.xlane.xlu0 %2644
      %v2646 = vmul.f32 %v2645, 0.083333336
      %v2647 = vsub.f32 %v2641, %v2646
      %v2648 = vmul.f32 %v2647, %v2427
      %v2649 = vmul.f32 %v2648, %v2648
      %2650 = vadd.xlane.f32.xlu0 %v2649
      %v2651 = vpop.xlane.xlu0 %2650
      %v2652 = vmul.f32 %v2651, 0.083333336
      %v2653 = vadd.f32 %v2652, 1e-05
      %v2654 = vrsqrt.pop %v2653
      %v2655 = vmul.f32 %v2648, %v2654
      %v2657 = vlaneseq
      %v2658 = vshrl.u32 %v2657, 7
      %v2659 = vsub.s32 0, %v2658
      %v2660 = vrot.slane %v2642, %v2659
      %v2662 = vmul.f32 %v2655, %v2660
      %v2664 = vlaneseq
      %v2665 = vshrl.u32 %v2664, 7
      %v2666 = vsub.s32 0, %v2665
      %v2667 = vrot.slane %v2643, %v2666
      %v2669 = vadd.f32 %v2662, %v2667
      %2670 = vst [vmem:[%s435] sm:$0xff] %v2669
      %p2671 = scmp.lt.s32.totalorder %s24, 1
      %s2672 = scalar_select %p2671, %s24, 1
      %s2673 = smul.addr %s2672, 8
      %s2674 = scalar_lea.vmem %s13, %s2673
      // Predicated region
      $region73: #{transf_enc_dec_apply.3} parent=71 // pred_check
        %p2675 = pneg %p320
      $region74: #{transf_enc_dec_apply.3} parent=71 // pred_check_branch
        %2677 = sbr.rel (%p2675) target = $region76
      $region75: #{transf_enc_dec_apply.3} parent=71 // pred_region
        _
      $region76: #{transf_enc_dec_apply.3} parent=71 // pred_fallthru
        _
    $region72: #{transf_enc_dec_apply.3} parent=5 // pred_fallthru
      _
    %p2678 = scmp.le.s32.totalorder 2, %s19
    // Predicated region
    $region77: #{transf_enc_dec_apply.3} parent=5 // pred_check
      %p2679 = pneg %p2678
    $region78: #{transf_enc_dec_apply.3} parent=5 // pred_check_branch
      %2681 = sbr.rel (%p2679) target = $region80
    $region79: #{transf_enc_dec_apply.3} parent=5 // pred_region
      %s2682 = ssub.s32 %s19, 2
      // Predicated region
      $region81: #{transf_enc_dec_apply.3} parent=79 // pred_check
        %p2683 = pneg %p326
      $region82: #{transf_enc_dec_apply.3} parent=79 // pred_check_branch
        %2685 = sbr.rel (%p2683) target = $region84
      $region83: #{transf_enc_dec_apply.3} parent=79 // pred_region
        %p2686 = scmp.lt.s32.totalorder %s25, 1
        %s2687 = scalar_select %p2686, %s25, 1
        %s2688 = smul.addr %s2687, 8
        %s2689 = scalar_lea.vmem %s13, %s2688
      $region84: #{transf_enc_dec_apply.3} parent=79 // pred_fallthru
        _
    $region80: #{transf_enc_dec_apply.3} parent=5 // pred_fallthru
      _
  $region6: #{transf_enc_dec_apply.3} parent=0 // loop_footer
    %s23 = sadd.s32 1, %s19
  $region7: #{transf_enc_dec_apply.3} parent=0 // loop_footer_branch
    %18 = sbr.rel target = $region3
  $region8: #{transf_enc_dec_apply.3} parent=0 // loop_exit
    _

// kernel: transf_enc_dec_apply.5
$region0: #{transf_enc_dec_apply.5}
  #allocation0 [shape = 'u32[]', space=smem, size = 0x4, offset = 0x4, fixed_abs, tag = 'smem constant byte address 0x4 - core index']
  #allocation1 [shape = 'u32[144,128]{1,0:T(1,128)}', space=vmem, size = 0x12000, scoped, tag = 'internal scratch']
  %s0 = inlined_call_operand.vmem [shape: f32[2,8,128], index: 0, kind: input, shape index: {}]
  %s1 = inlined_call_operand.vmem [shape: f32[2,8,128], index: 1, kind: input, shape index: {}]
  %s2 = inlined_call_operand.vmem [shape: f32[4,128,8], index: 2, kind: input, shape index: {}]
  %s3 = inlined_call_operand.vmem [shape: f32[4,128,8], index: 3, kind: input, shape index: {}]
  %s4 = inlined_call_operand.vmem [shape: f32[4,128,8], index: 4, kind: input, shape index: {}]
  %s5 = inlined_call_operand.vmem [shape: f32[4,8,128], index: 5, kind: input, shape index: {}]
  %s6 = inlined_call_operand.vmem [shape: f32[128,128], index: 6, kind: input, shape index: {}]
  %s7 = inlined_call_operand.vmem [shape: f32[1,128], index: 7, kind: input, shape index: {}]
  %s8 = inlined_call_operand.vmem [shape: f32[2,8,128], index: 8, kind: output, shape index: {}]
  %s9 = sld [smem:[#allocation0]]
  $region65: #{transf_enc_dec_apply.5} parent=0
    _
  %s11 = ssub.s32 1, %s9
  %s12 = scalar_select 0, %s11, %s9
  loop: start=0, step=1, limit=4
  $region2: #{transf_enc_dec_apply.5} parent=0 // loop_pre_header
    _
  $region3: #{transf_enc_dec_apply.5} parent=0 // loop_header
    %s14 = sphi 0, %s18
    %p15 = scmp.ge.s32.totalorder %s14, 4
    %s24 = sphi 0, %s26
    %s27 = sphi 0, %s24
    %s28 = sphi 0, %s27
    %s44 = sphi 0, %s28
    %s50 = sphi 0, %s52
    %s53 = sphi 0, %s50
    %s54 = sphi 0, %s53
    %s70 = sphi 0, %s54
    %s74 = sphi 0, %s74
    %s76 = sphi 0, %s74
    %s77 = sphi 0, %s76
    %s91 = sphi 0, %s77
    %s95 = sphi 0, %s95
    %s97 = sphi 0, %s95
    %s98 = sphi 0, %s97
    %s112 = sphi 0, %s98
    %s116 = sphi 0, %s116
    %s118 = sphi 0, %s116
    %s119 = sphi 0, %s118
    %s133 = sphi 0, %s119
    %s137 = sphi 0, %s137
    %s139 = sphi 0, %s137
    %s140 = sphi 0, %s139
    %s154 = sphi 0, %s140
    %s158 = sphi 0, %s158
    %s160 = sphi 0, %s158
    %s161 = sphi 0, %s160
    %s175 = sphi 0, %s161
    %s179 = sphi 0, %s179
    %s181 = sphi 0, %s179
    %s182 = sphi 0, %s181
    %s196 = sphi 0, %s182
    %s202 = sphi 0, %s204
    %s205 = sphi 0, %s202
    %s206 = sphi 0, %s205
    %s222 = sphi 0, %s206
  $region4: #{transf_enc_dec_apply.5} parent=0 // loop_header_branch
    %17 = sbr.rel (%p15) target = $region8
  $region5: #{transf_enc_dec_apply.5} parent=0 // loop_body
    %s19 = ssub.s32 %s14, 1
    %s20 = ssub.s32 %s14, 2
    %s21 = sadd.s32 %s14, 1
    %s22 = ssub.s32 %s14, %s21
    %p23 = scmp.eq.s32.totalorder %s22, 0
    %s25 = sadd.s32 %s24, 1
    %s26 = scalar_select %p23, %s24, %s25
    %p29 = pneg %p23
    %p30 = scmp.eq.s32.totalorder %s14, 1
    %p31 = por %p29, %p30
    %p32 = scmp.ne.s32.totalorder %s24, %s27
    %p33 = scmp.eq.s32.totalorder %s14, 0
    %p34 = por %p32, %p33
    %p35 = scmp.ne.s32.totalorder %s24, %s27
    %p36 = scmp.eq.s32.totalorder %s19, 1
    %p37 = por %p35, %p36
    %p38 = scmp.ne.s32.totalorder %s27, %s28
    %p39 = scmp.eq.s32.totalorder %s19, 0
    %p40 = por %p38, %p39
    %p41 = scmp.ne.s32.totalorder %s27, %s28
    %p42 = scmp.eq.s32.totalorder %s20, 1
    %p43 = por %p41, %p42
    %p45 = scmp.ne.s32.totalorder %s28, %s44
    %p46 = scmp.eq.s32.totalorder %s20, 0
    %p47 = por %p45, %p46
    %s48 = ssub.s32 %s14, %s21
    %p49 = scmp.eq.s32.totalorder %s48, 0
    %s51 = sadd.s32 %s50, 1
    %s52 = scalar_select %p49, %s50, %s51
    %p55 = pneg %p49
    %p56 = scmp.eq.s32.totalorder %s14, 1
    %p57 = por %p55, %p56
    %p58 = scmp.ne.s32.totalorder %s50, %s53
    %p59 = scmp.eq.s32.totalorder %s14, 0
    %p60 = por %p58, %p59
    %p61 = scmp.ne.s32.totalorder %s50, %s53
    %p62 = scmp.eq.s32.totalorder %s19, 1
    %p63 = por %p61, %p62
    %p64 = scmp.ne.s32.totalorder %s53, %s54
    %p65 = scmp.eq.s32.totalorder %s19, 0
    %p66 = por %p64, %p65
    %p67 = scmp.ne.s32.totalorder %s53, %s54
    %p68 = scmp.eq.s32.totalorder %s20, 1
    %p69 = por %p67, %p68
    %p71 = scmp.ne.s32.totalorder %s54, %s70
    %p72 = scmp.eq.s32.totalorder %s20, 0
    %p73 = por %p71, %p72
    %s75 = sadd.s32 %s74, 1
    %p78 = scmp.eq.s32.totalorder %s14, 1
    %p79 = scmp.ne.s32.totalorder %s74, %s76
    %p80 = scmp.eq.s32.totalorder %s14, 0
    %p81 = por %p79, %p80
    %p82 = scmp.ne.s32.totalorder %s74, %s76
    %p83 = scmp.eq.s32.totalorder %s19, 1
    %p84 = por %p82, %p83
    %p85 = scmp.ne.s32.totalorder %s76, %s77
    %p86 = scmp.eq.s32.totalorder %s19, 0
    %p87 = por %p85, %p86
    %p88 = scmp.ne.s32.totalorder %s76, %s77
    %p89 = scmp.eq.s32.totalorder %s20, 1
    %p90 = por %p88, %p89
    %p92 = scmp.ne.s32.totalorder %s77, %s91
    %p93 = scmp.eq.s32.totalorder %s20, 0
    %p94 = por %p92, %p93
    %s96 = sadd.s32 %s95, 1
    %p99 = scmp.eq.s32.totalorder %s14, 1
    %p100 = scmp.ne.s32.totalorder %s95, %s97
    %p101 = scmp.eq.s32.totalorder %s14, 0
    %p102 = por %p100, %p101
    %p103 = scmp.ne.s32.totalorder %s95, %s97
    %p104 = scmp.eq.s32.totalorder %s19, 1
    %p105 = por %p103, %p104
    %p106 = scmp.ne.s32.totalorder %s97, %s98
    %p107 = scmp.eq.s32.totalorder %s19, 0
    %p108 = por %p106, %p107
    %p109 = scmp.ne.s32.totalorder %s97, %s98
    %p110 = scmp.eq.s32.totalorder %s20, 1
    %p111 = por %p109, %p110
    %p113 = scmp.ne.s32.totalorder %s98, %s112
    %p114 = scmp.eq.s32.totalorder %s20, 0
    %p115 = por %p113, %p114
    %s117 = sadd.s32 %s116, 1
    %p120 = scmp.eq.s32.totalorder %s14, 1
    %p121 = scmp.ne.s32.totalorder %s116, %s118
    %p122 = scmp.eq.s32.totalorder %s14, 0
    %p123 = por %p121, %p122
    %p124 = scmp.ne.s32.totalorder %s116, %s118
    %p125 = scmp.eq.s32.totalorder %s19, 1
    %p126 = por %p124, %p125
    %p127 = scmp.ne.s32.totalorder %s118, %s119
    %p128 = scmp.eq.s32.totalorder %s19, 0
    %p129 = por %p127, %p128
    %p130 = scmp.ne.s32.totalorder %s118, %s119
    %p131 = scmp.eq.s32.totalorder %s20, 1
    %p132 = por %p130, %p131
    %p134 = scmp.ne.s32.totalorder %s119, %s133
    %p135 = scmp.eq.s32.totalorder %s20, 0
    %p136 = por %p134, %p135
    %s138 = sadd.s32 %s137, 1
    %p141 = scmp.eq.s32.totalorder %s14, 1
    %p142 = scmp.ne.s32.totalorder %s137, %s139
    %p143 = scmp.eq.s32.totalorder %s14, 0
    %p144 = por %p142, %p143
    %p145 = scmp.ne.s32.totalorder %s137, %s139
    %p146 = scmp.eq.s32.totalorder %s19, 1
    %p147 = por %p145, %p146
    %p148 = scmp.ne.s32.totalorder %s139, %s140
    %p149 = scmp.eq.s32.totalorder %s19, 0
    %p150 = por %p148, %p149
    %p151 = scmp.ne.s32.totalorder %s139, %s140
    %p152 = scmp.eq.s32.totalorder %s20, 1
    %p153 = por %p151, %p152
    %p155 = scmp.ne.s32.totalorder %s140, %s154
    %p156 = scmp.eq.s32.totalorder %s20, 0
    %p157 = por %p155, %p156
    %s159 = sadd.s32 %s158, 1
    %p162 = scmp.eq.s32.totalorder %s14, 1
    %p163 = scmp.ne.s32.totalorder %s158, %s160
    %p164 = scmp.eq.s32.totalorder %s14, 0
    %p165 = por %p163, %p164
    %p166 = scmp.ne.s32.totalorder %s158, %s160
    %p167 = scmp.eq.s32.totalorder %s19, 1
    %p168 = por %p166, %p167
    %p169 = scmp.ne.s32.totalorder %s160, %s161
    %p170 = scmp.eq.s32.totalorder %s19, 0
    %p171 = por %p169, %p170
    %p172 = scmp.ne.s32.totalorder %s160, %s161
    %p173 = scmp.eq.s32.totalorder %s20, 1
    %p174 = por %p172, %p173
    %p176 = scmp.ne.s32.totalorder %s161, %s175
    %p177 = scmp.eq.s32.totalorder %s20, 0
    %p178 = por %p176, %p177
    %s180 = sadd.s32 %s179, 1
    %p183 = scmp.eq.s32.totalorder %s14, 1
    %p184 = scmp.ne.s32.totalorder %s179, %s181
    %p185 = scmp.eq.s32.totalorder %s14, 0
    %p186 = por %p184, %p185
    %p187 = scmp.ne.s32.totalorder %s179, %s181
    %p188 = scmp.eq.s32.totalorder %s19, 1
    %p189 = por %p187, %p188
    %p190 = scmp.ne.s32.totalorder %s181, %s182
    %p191 = scmp.eq.s32.totalorder %s19, 0
    %p192 = por %p190, %p191
    %p193 = scmp.ne.s32.totalorder %s181, %s182
    %p194 = scmp.eq.s32.totalorder %s20, 1
    %p195 = por %p193, %p194
    %p197 = scmp.ne.s32.totalorder %s182, %s196
    %p198 = scmp.eq.s32.totalorder %s20, 0
    %p199 = por %p197, %p198
    %s200 = ssub.s32 %s14, %s21
    %p201 = scmp.eq.s32.totalorder %s200, 0
    %s203 = sadd.s32 %s202, 1
    %s204 = scalar_select %p201, %s202, %s203
    %p207 = pneg %p201
    %p208 = scmp.eq.s32.totalorder %s14, 1
    %p209 = por %p207, %p208
    %p210 = scmp.ne.s32.totalorder %s202, %s205
    %p211 = scmp.eq.s32.totalorder %s14, 0
    %p212 = por %p210, %p211
    %p213 = scmp.ne.s32.totalorder %s202, %s205
    %p214 = scmp.eq.s32.totalorder %s19, 1
    %p215 = por %p213, %p214
    %p216 = scmp.ne.s32.totalorder %s205, %s206
    %p217 = scmp.eq.s32.totalorder %s19, 0
    %p218 = por %p216, %p217
    %p219 = scmp.ne.s32.totalorder %s205, %s206
    %p220 = scmp.eq.s32.totalorder %s20, 1
    %p221 = por %p219, %p220
    %p223 = scmp.ne.s32.totalorder %s206, %s222
    %p224 = scmp.eq.s32.totalorder %s20, 0
    %p225 = por %p223, %p224
    %p226 = scmp.le.s32.totalorder 1, %s14
    %p227 = scmp.lt.s32.totalorder %s14, 3
    %p228 = pnand %p226, %p227
    %p229 = pneg %p228
    // Predicated region
    $region9: #{transf_enc_dec_apply.5} parent=5 // pred_check
      _
    $region10: #{transf_enc_dec_apply.5} parent=5 // pred_check_branch
      %231 = sbr.rel (%p228) target = $region12
    $region11: #{transf_enc_dec_apply.5} parent=5 // pred_region
      %s232 = ssub.s32 %s14, 1
      // Predicated region
      $region13: #{transf_enc_dec_apply.5} parent=11 // pred_check
        %p233 = pneg %p87
      $region14: #{transf_enc_dec_apply.5} parent=11 // pred_check_branch
        %235 = sbr.rel (%p233) target = $region16
      $region15: #{transf_enc_dec_apply.5} parent=11 // pred_region
        _
      $region16: #{transf_enc_dec_apply.5} parent=11 // pred_fallthru
        _
      // Predicated region
      $region17: #{transf_enc_dec_apply.5} parent=11 // pred_check
        %p236 = pneg %p108
      $region18: #{transf_enc_dec_apply.5} parent=11 // pred_check_branch
        %238 = sbr.rel (%p236) target = $region20
      $region19: #{transf_enc_dec_apply.5} parent=11 // pred_region
        _
      $region20: #{transf_enc_dec_apply.5} parent=11 // pred_fallthru
        _
      // Predicated region
      $region21: #{transf_enc_dec_apply.5} parent=11 // pred_check
        %p239 = pneg %p129
      $region22: #{transf_enc_dec_apply.5} parent=11 // pred_check_branch
        %241 = sbr.rel (%p239) target = $region24
      $region23: #{transf_enc_dec_apply.5} parent=11 // pred_region
        _
      $region24: #{transf_enc_dec_apply.5} parent=11 // pred_fallthru
        _
      // Predicated region
      $region25: #{transf_enc_dec_apply.5} parent=11 // pred_check
        %p242 = pneg %p150
      $region26: #{transf_enc_dec_apply.5} parent=11 // pred_check_branch
        %244 = sbr.rel (%p242) target = $region28
      $region27: #{transf_enc_dec_apply.5} parent=11 // pred_region
        _
      $region28: #{transf_enc_dec_apply.5} parent=11 // pred_fallthru
        _
      // Predicated region
      $region29: #{transf_enc_dec_apply.5} parent=11 // pred_check
        %p245 = pneg %p171
      $region30: #{transf_enc_dec_apply.5} parent=11 // pred_check_branch
        %247 = sbr.rel (%p245) target = $region32
      $region31: #{transf_enc_dec_apply.5} parent=11 // pred_region
        _
      $region32: #{transf_enc_dec_apply.5} parent=11 // pred_fallthru
        _
      // Predicated region
      $region33: #{transf_enc_dec_apply.5} parent=11 // pred_check
        %p248 = pneg %p192
      $region34: #{transf_enc_dec_apply.5} parent=11 // pred_check_branch
        %250 = sbr.rel (%p248) target = $region36
      $region35: #{transf_enc_dec_apply.5} parent=11 // pred_region
        _
      $region36: #{transf_enc_dec_apply.5} parent=11 // pred_fallthru
        _
    $region12: #{transf_enc_dec_apply.5} parent=5 // pred_fallthru
      _
    %p251 = scmp.lt.s32.totalorder %s14, 2
    // Predicated region
    $region37: #{transf_enc_dec_apply.5} parent=5 // pred_check
      %p252 = pneg %p251
    $region38: #{transf_enc_dec_apply.5} parent=5 // pred_check_branch
      %254 = sbr.rel (%p252) target = $region40
    $region39: #{transf_enc_dec_apply.5} parent=5 // pred_region
      // Predicated region
      $region41: #{transf_enc_dec_apply.5} parent=39 // pred_check
        %p255 = pneg %p34
      $region42: #{transf_enc_dec_apply.5} parent=39 // pred_check_branch
        %257 = sbr.rel (%p255) target = $region44
      $region43: #{transf_enc_dec_apply.5} parent=39 // pred_region
        %p258 = scmp.lt.s32.totalorder %s14, 1
        %s259 = scalar_select %p258, %s14, 1
        %s260 = smul.addr %s259, 8
        %s261 = scalar_lea.vmem %s0, %s260
      $region44: #{transf_enc_dec_apply.5} parent=39 // pred_fallthru
        _
      // Predicated region
      $region45: #{transf_enc_dec_apply.5} parent=39 // pred_check
        %p262 = pneg %p60
      $region46: #{transf_enc_dec_apply.5} parent=39 // pred_check_branch
        %264 = sbr.rel (%p262) target = $region48
      $region47: #{transf_enc_dec_apply.5} parent=39 // pred_region
        %p265 = scmp.lt.s32.totalorder %s14, 1
        %s266 = scalar_select %p265, %s14, 1
        %s267 = smul.addr %s266, 8
        %s268 = scalar_lea.vmem %s1, %s267
      $region48: #{transf_enc_dec_apply.5} parent=39 // pred_fallthru
        _
    $region40: #{transf_enc_dec_apply.5} parent=5 // pred_fallthru
      _
    %p269 = scmp.le.s32.totalorder 1, %s14
    %p270 = scmp.lt.s32.totalorder %s14, 3
    %p271 = pnand %p269, %p270
    %p272 = pneg %p271
    // Predicated region
    $region49: #{transf_enc_dec_apply.5} parent=5 // pred_check
      _
    $region50: #{transf_enc_dec_apply.5} parent=5 // pred_check_branch
      %274 = sbr.rel (%p271) target = $region52
    $region51: #{transf_enc_dec_apply.5} parent=5 // pred_region
      %s275 = ssub.s32 %s14, 1
      %p276 = scmp.lt.s32.totalorder %s19, 1
      %s277 = scalar_select %p276, %s19, 1
      %s278 = smul.addr %s277, 8
      %s279 = scalar_lea.vmem %s0, %s278
      %p280 = pneg %p40
      %p281 = pneg %p37
      %p282 = scmp.lt.s32.totalorder %s19, 1
      %s283 = scalar_select %p282, %s19, 1
      %s284 = smul.addr %s283, 8
      %s285 = scalar_lea.vmem %s1, %s284
      %p286 = pneg %p66
      %p287 = pneg %p63
      %p288 = pneg %p87
      %p289 = pneg %p84
      %p290 = pneg %p108
      %p291 = pneg %p105
      %p292 = pneg %p129
      %p293 = pneg %p126
      %p294 = pneg %p150
      %p295 = pneg %p147
      %p296 = pneg %p171
      %p297 = pneg %p168
      %p298 = pneg %p192
      %p299 = pneg %p189
      %p300 = pneg %p218
      %p301 = pneg %p215
      %p302 = scmp.lt.s32.totalorder %s19, 1
      %s303 = scalar_select %p302, %s19, 1
      %s304 = smul.addr %s303, 8
      %s305 = scalar_lea.vmem %s8, %s304
      %p306 = scmp.lt.s32.totalorder %s19, 1
      %s307 = scalar_select %p306, %s19, 1
      %s308 = smul.addr %s307, 8
      %s309 = scalar_lea.vmem %s0, %s308
      %p310 = scmp.lt.s32.totalorder %s19, 1
      %s311 = scalar_select %p310, %s19, 1
      %s312 = smul.addr %s311, 8
      %s313 = scalar_lea.vmem %s1, %s312
      %p314 = scmp.lt.s32.totalorder %s19, 1
      %s315 = scalar_select %p314, %s19, 1
      %s316 = smul.addr %s315, 8
      %s317 = scalar_lea.vmem %s8, %s316
      %v318 = vld [vmem:[%s309] sm:$0xff]
      %v319 = vld [vmem:[%s313] sm:$0xff]
      %v320 = vld [vmem:[%s2] sm:$0xff]
      %v321 = vld [vmem:[%s2 + $0x8] sm:$0xff]
      %v322 = vld [vmem:[%s2 + $0x10] sm:$0xff]
      %v323 = vld [vmem:[%s2 + $0x18] sm:$0xff]
      %v324 = vld [vmem:[%s2 + $0x20] sm:$0xff]
      %v325 = vld [vmem:[%s2 + $0x28] sm:$0xff]
      %v326 = vld [vmem:[%s2 + $0x30] sm:$0xff]
      %v327 = vld [vmem:[%s2 + $0x38] sm:$0xff]
      %v328 = vld [vmem:[%s2 + $0x40] sm:$0xff]
      %v329 = vld [vmem:[%s2 + $0x48] sm:$0xff]
      %v330 = vld [vmem:[%s2 + $0x50] sm:$0xff]
      %v331 = vld [vmem:[%s2 + $0x58] sm:$0xff]
      %v332 = vld [vmem:[%s2 + $0x60] sm:$0xff]
      %v333 = vld [vmem:[%s2 + $0x68] sm:$0xff]
      %v334 = vld [vmem:[%s2 + $0x70] sm:$0xff]
      %v335 = vld [vmem:[%s2 + $0x78] sm:$0xff]
      %336 = vmatprep.subr.mxu0 0.0
      %337 = vmatpush1.msra.mxu0 %v320
      %338 = vmatprep.subr.mxu0 0.0
      %339 = vmatpush1.msra.mxu0 %v321
      %340 = vmatprep.subr.mxu0 0.0
      %341 = vmatpush1.msra.mxu0 %v322
      %342 = vmatprep.subr.mxu0 0.0
      %343 = vmatpush1.msra.mxu0 %v323
      %344 = vmatprep.subr.mxu0 0.0
      %345 = vmatpush1.msra.mxu0 %v324
      %346 = vmatprep.subr.mxu0 0.0
      %347 = vmatpush1.msra.mxu0 %v325
      %348 = vmatprep.subr.mxu0 0.0
      %349 = vmatpush1.msra.mxu0 %v326
      %350 = vmatprep.subr.mxu0 0.0
      %351 = vmatpush1.msra.mxu0 %v327
      %352 = vmatprep.subr.mxu0 0.0
      %353 = vmatpush1.msra.mxu0 %v328
      %354 = vmatprep.subr.mxu0 0.0
      %355 = vmatpush1.msra.mxu0 %v329
      %356 = vmatprep.subr.mxu0 0.0
      %357 = vmatpush1.msra.mxu0 %v330
      %358 = vmatprep.subr.mxu0 0.0
      %359 = vmatpush1.msra.mxu0 %v331
      %360 = vmatprep.subr.mxu0 0.0
      %361 = vmatpush1.msra.mxu0 %v332
      %362 = vmatprep.subr.mxu0 0.0
      %363 = vmatpush1.msra.mxu0 %v333
      %364 = vmatprep.subr.mxu0 0.0
      %365 = vmatpush1.msra.mxu0 %v334
      %366 = vmatprep.subr.mxu0 0.0
      %367 = vmatpush1.msra.mxu0 %v335
      %368 = vmatprep.subr.mxu0 0.0
      %369 = vmatpush1.msra.mxu0 0.0
      %370 = vmatprep.subr.mxu0 0.0
      %371 = vmatpush1.msra.mxu0 0.0
      %372 = vmatprep.subr.mxu0 0.0
      %373 = vmatpush1.msra.mxu0 0.0
      %374 = vmatprep.subr.mxu0 0.0
      %375 = vmatpush1.msra.mxu0 0.0
      %376 = vmatprep.subr.mxu0 0.0
      %377 = vmatpush1.msra.mxu0 0.0
      %378 = vmatprep.subr.mxu0 0.0
      %379 = vmatpush1.msra.mxu0 0.0
      %380 = vmatprep.subr.mxu0 0.0
      %381 = vmatpush1.msra.mxu0 0.0
      %382 = vmatprep.subr.mxu0 0.0
      %383 = vmatpush1.msra.mxu0 0.0
      %384 = vmatprep.subr.mxu0 0.0
      %385 = vmatpush1.msra.mxu0 0.0
      %386 = vmatprep.subr.mxu0 0.0
      %387 = vmatpush1.msra.mxu0 0.0
      %388 = vmatprep.subr.mxu0 0.0
      %389 = vmatpush1.msra.mxu0 0.0
      %390 = vmatprep.subr.mxu0 0.0
      %391 = vmatpush1.msra.mxu0 0.0
      %392 = vmatprep.subr.mxu0 0.0
      %393 = vmatpush1.msra.mxu0 0.0
      %394 = vmatprep.subr.mxu0 0.0
      %395 = vmatpush1.msra.mxu0 0.0
      %396 = vmatprep.subr.mxu0 0.0
      %397 = vmatpush1.msra.mxu0 0.0
      %398 = vmatprep.subr.mxu0 0.0
      %399 = vmatpush1.msra.mxu0 0.0
      %400 = vmatprep.mubr.f32.mxu0 0.0
      %401 = vmatmul.mubr.f32.gmra.mrb[0].mxu0 %v318
      %v402 = vpop.f32.mrb[0].mxu0
      %v403 = vadd.f32 0.0, %v402
      %v404 = vpop.f32.mrb[0].mxu0
      %405 = vdwg.mxu0
      %v406 = vld [vmem:[%s3] sm:$0xff]
      %v407 = vld [vmem:[%s3 + $0x8] sm:$0xff]
      %v408 = vld [vmem:[%s3 + $0x10] sm:$0xff]
      %v409 = vld [vmem:[%s3 + $0x18] sm:$0xff]
      %v410 = vld [vmem:[%s3 + $0x20] sm:$0xff]
      %v411 = vld [vmem:[%s3 + $0x28] sm:$0xff]
      %v412 = vld [vmem:[%s3 + $0x30] sm:$0xff]
      %v413 = vld [vmem:[%s3 + $0x38] sm:$0xff]
      %v414 = vld [vmem:[%s3 + $0x40] sm:$0xff]
      %v415 = vld [vmem:[%s3 + $0x48] sm:$0xff]
      %v416 = vld [vmem:[%s3 + $0x50] sm:$0xff]
      %v417 = vld [vmem:[%s3 + $0x58] sm:$0xff]
      %v418 = vld [vmem:[%s3 + $0x60] sm:$0xff]
      %v419 = vld [vmem:[%s3 + $0x68] sm:$0xff]
      %v420 = vld [vmem:[%s3 + $0x70] sm:$0xff]
      %v421 = vld [vmem:[%s3 + $0x78] sm:$0xff]
      %422 = vmatprep.subr.mxu0 0.0
      %423 = vmatpush1.msra.mxu0 %v406
      %424 = vmatprep.subr.mxu0 0.0
      %425 = vmatpush1.msra.mxu0 %v407
      %426 = vmatprep.subr.mxu0 0.0
      %427 = vmatpush1.msra.mxu0 %v408
      %428 = vmatprep.subr.mxu0 0.0
      %429 = vmatpush1.msra.mxu0 %v409
      %430 = vmatprep.subr.mxu0 0.0
      %431 = vmatpush1.msra.mxu0 %v410
      %432 = vmatprep.subr.mxu0 0.0
      %433 = vmatpush1.msra.mxu0 %v411
      %434 = vmatprep.subr.mxu0 0.0
      %435 = vmatpush1.msra.mxu0 %v412
      %436 = vmatprep.subr.mxu0 0.0
      %437 = vmatpush1.msra.mxu0 %v413
      %438 = vmatprep.subr.mxu0 0.0
      %439 = vmatpush1.msra.mxu0 %v414
      %440 = vmatprep.subr.mxu0 0.0
      %441 = vmatpush1.msra.mxu0 %v415
      %442 = vmatprep.subr.mxu0 0.0
      %443 = vmatpush1.msra.mxu0 %v416
      %444 = vmatprep.subr.mxu0 0.0
      %445 = vmatpush1.msra.mxu0 %v417
      %446 = vmatprep.subr.mxu0 0.0
      %447 = vmatpush1.msra.mxu0 %v418
      %448 = vmatprep.subr.mxu0 0.0
      %449 = vmatpush1.msra.mxu0 %v419
      %450 = vmatprep.subr.mxu0 0.0
      %451 = vmatpush1.msra.mxu0 %v420
      %452 = vmatprep.subr.mxu0 0.0
      %453 = vmatpush1.msra.mxu0 %v421
      %454 = vmatprep.subr.mxu0 0.0
      %455 = vmatpush1.msra.mxu0 0.0
      %456 = vmatprep.subr.mxu0 0.0
      %457 = vmatpush1.msra.mxu0 0.0
      %458 = vmatprep.subr.mxu0 0.0
      %459 = vmatpush1.msra.mxu0 0.0
      %460 = vmatprep.subr.mxu0 0.0
      %461 = vmatpush1.msra.mxu0 0.0
      %462 = vmatprep.subr.mxu0 0.0
      %463 = vmatpush1.msra.mxu0 0.0
      %464 = vmatprep.subr.mxu0 0.0
      %465 = vmatpush1.msra.mxu0 0.0
      %466 = vmatprep.subr.mxu0 0.0
      %467 = vmatpush1.msra.mxu0 0.0
      %468 = vmatprep.subr.mxu0 0.0
      %469 = vmatpush1.msra.mxu0 0.0
      %470 = vmatprep.subr.mxu0 0.0
      %471 = vmatpush1.msra.mxu0 0.0
      %472 = vmatprep.subr.mxu0 0.0
      %473 = vmatpush1.msra.mxu0 0.0
      %474 = vmatprep.subr.mxu0 0.0
      %475 = vmatpush1.msra.mxu0 0.0
      %476 = vmatprep.subr.mxu0 0.0
      %477 = vmatpush1.msra.mxu0 0.0
      %478 = vmatprep.subr.mxu0 0.0
      %479 = vmatpush1.msra.mxu0 0.0
      %480 = vmatprep.subr.mxu0 0.0
      %481 = vmatpush1.msra.mxu0 0.0
      %482 = vmatprep.subr.mxu0 0.0
      %483 = vmatpush1.msra.mxu0 0.0
      %484 = vmatprep.subr.mxu0 0.0
      %485 = vmatpush1.msra.mxu0 0.0
      %486 = vmatprep.mubr.f32.mxu0 0.0
      %487 = vmatmul.mubr.f32.gmra.mrb[0].mxu0 %v319
      %v488 = vpop.f32.mrb[0].mxu0
      %v489 = vadd.f32 0.0, %v488
      %v490 = vpop.f32.mrb[0].mxu0
      %491 = vdwg.mxu0
      %v492 = vld [vmem:[%s4] sm:$0xff]
      %v493 = vld [vmem:[%s4 + $0x8] sm:$0xff]
      %v494 = vld [vmem:[%s4 + $0x10] sm:$0xff]
      %v495 = vld [vmem:[%s4 + $0x18] sm:$0xff]
      %v496 = vld [vmem:[%s4 + $0x20] sm:$0xff]
      %v497 = vld [vmem:[%s4 + $0x28] sm:$0xff]
      %v498 = vld [vmem:[%s4 + $0x30] sm:$0xff]
      %v499 = vld [vmem:[%s4 + $0x38] sm:$0xff]
      %v500 = vld [vmem:[%s4 + $0x40] sm:$0xff]
      %v501 = vld [vmem:[%s4 + $0x48] sm:$0xff]
      %v502 = vld [vmem:[%s4 + $0x50] sm:$0xff]
      %v503 = vld [vmem:[%s4 + $0x58] sm:$0xff]
      %v504 = vld [vmem:[%s4 + $0x60] sm:$0xff]
      %v505 = vld [vmem:[%s4 + $0x68] sm:$0xff]
      %v506 = vld [vmem:[%s4 + $0x70] sm:$0xff]
      %v507 = vld [vmem:[%s4 + $0x78] sm:$0xff]
      %508 = vmatprep.subr.mxu0 0.0
      %509 = vmatpush1.msra.mxu0 %v492
      %510 = vmatprep.subr.mxu0 0.0
      %511 = vmatpush1.msra.mxu0 %v493
      %512 = vmatprep.subr.mxu0 0.0
      %513 = vmatpush1.msra.mxu0 %v494
      %514 = vmatprep.subr.mxu0 0.0
      %515 = vmatpush1.msra.mxu0 %v495
      %516 = vmatprep.subr.mxu0 0.0
      %517 = vmatpush1.msra.mxu0 %v496
      %518 = vmatprep.subr.mxu0 0.0
      %519 = vmatpush1.msra.mxu0 %v497
      %520 = vmatprep.subr.mxu0 0.0
      %521 = vmatpush1.msra.mxu0 %v498
      %522 = vmatprep.subr.mxu0 0.0
      %523 = vmatpush1.msra.mxu0 %v499
      %524 = vmatprep.subr.mxu0 0.0
      %525 = vmatpush1.msra.mxu0 %v500
      %526 = vmatprep.subr.mxu0 0.0
      %527 = vmatpush1.msra.mxu0 %v501
      %528 = vmatprep.subr.mxu0 0.0
      %529 = vmatpush1.msra.mxu0 %v502
      %530 = vmatprep.subr.mxu0 0.0
      %531 = vmatpush1.msra.mxu0 %v503
      %532 = vmatprep.subr.mxu0 0.0
      %533 = vmatpush1.msra.mxu0 %v504
      %534 = vmatprep.subr.mxu0 0.0
      %535 = vmatpush1.msra.mxu0 %v505
      %536 = vmatprep.subr.mxu0 0.0
      %537 = vmatpush1.msra.mxu0 %v506
      %538 = vmatprep.subr.mxu0 0.0
      %539 = vmatpush1.msra.mxu0 %v507
      %540 = vmatprep.subr.mxu0 0.0
      %541 = vmatpush1.msra.mxu0 0.0
      %542 = vmatprep.subr.mxu0 0.0
      %543 = vmatpush1.msra.mxu0 0.0
      %544 = vmatprep.subr.mxu0 0.0
      %545 = vmatpush1.msra.mxu0 0.0
      %546 = vmatprep.subr.mxu0 0.0
      %547 = vmatpush1.msra.mxu0 0.0
      %548 = vmatprep.subr.mxu0 0.0
      %549 = vmatpush1.msra.mxu0 0.0
      %550 = vmatprep.subr.mxu0 0.0
      %551 = vmatpush1.msra.mxu0 0.0
      %552 = vmatprep.subr.mxu0 0.0
      %553 = vmatpush1.msra.mxu0 0.0
      %554 = vmatprep.subr.mxu0 0.0
      %555 = vmatpush1.msra.mxu0 0.0
      %556 = vmatprep.subr.mxu0 0.0
      %557 = vmatpush1.msra.mxu0 0.0
      %558 = vmatprep.subr.mxu0 0.0
      %559 = vmatpush1.msra.mxu0 0.0
      %560 = vmatprep.subr.mxu0 0.0
      %561 = vmatpush1.msra.mxu0 0.0
      %562 = vmatprep.subr.mxu0 0.0
      %563 = vmatpush1.msra.mxu0 0.0
      %564 = vmatprep.subr.mxu0 0.0
      %565 = vmatpush1.msra.mxu0 0.0
      %566 = vmatprep.subr.mxu0 0.0
      %567 = vmatpush1.msra.mxu0 0.0
      %568 = vmatprep.subr.mxu0 0.0
      %569 = vmatpush1.msra.mxu0 0.0
      %570 = vmatprep.subr.mxu0 0.0
      %571 = vmatpush1.msra.mxu0 0.0
      %572 = vmatprep.mubr.f32.mxu0 0.0
      %573 = vmatmul.mubr.f32.gmra.mrb[0].mxu0 %v319
      %v574 = vpop.f32.mrb[0].mxu0
      %v575 = vadd.f32 0.0, %v574
      %v576 = vpop.f32.mrb[0].mxu0
      %577 = vdwg.mxu0
      %vm578 = vcmask 64512
      %v580 = vsel %vm578, %v403, 0
      %v583 = vsel %vm578, %v489, 0
      %585 = vmatprep.subr.mxu0 0.0
      %586 = vmatpush1.xpose.msra.mxu0 %v583
      %587 = vmatprep.subr.mxu0 0.0
      %588 = vmatpush1.xpose.msra.mxu0 0.0
      %589 = vmatprep.subr.mxu0 0.0
      %590 = vmatpush1.xpose.msra.mxu0 0.0
      %591 = vmatprep.subr.mxu0 0.0
      %592 = vmatpush1.xpose.msra.mxu0 0.0
      %593 = vmatprep.subr.mxu0 0.0
      %594 = vmatpush1.xpose.msra.mxu0 0.0
      %595 = vmatprep.subr.mxu0 0.0
      %596 = vmatpush1.xpose.msra.mxu0 0.0
      %597 = vmatprep.subr.mxu0 0.0
      %598 = vmatpush1.xpose.msra.mxu0 0.0
      %599 = vmatprep.subr.mxu0 0.0
      %600 = vmatpush1.xpose.msra.mxu0 0.0
      %601 = vmatprep.subr.mxu0 0.0
      %602 = vmatpush1.xpose.msra.mxu0 0.0
      %603 = vmatprep.subr.mxu0 0.0
      %604 = vmatpush1.xpose.msra.mxu0 0.0
      %605 = vmatprep.subr.mxu0 0.0
      %606 = vmatpush1.xpose.msra.mxu0 0.0
      %607 = vmatprep.subr.mxu0 0.0
      %608 = vmatpush1.xpose.msra.mxu0 0.0
      %609 = vmatprep.subr.mxu0 0.0
      %610 = vmatpush1.xpose.msra.mxu0 0.0
      %611 = vmatprep.subr.mxu0 0.0
      %612 = vmatpush1.xpose.msra.mxu0 0.0
      %613 = vmatprep.subr.mxu0 0.0
      %614 = vmatpush1.xpose.msra.mxu0 0.0
      %615 = vmatprep.subr.mxu0 0.0
      %616 = vmatpush1.xpose.msra.mxu0 0.0
      %617 = vmatprep.subr.mxu0 0.0
      %618 = vmatpush1.xpose.msra.mxu0 0.0
      %619 = vmatprep.subr.mxu0 0.0
      %620 = vmatpush1.xpose.msra.mxu0 0.0
      %621 = vmatprep.subr.mxu0 0.0
      %622 = vmatpush1.xpose.msra.mxu0 0.0
      %623 = vmatprep.subr.mxu0 0.0
      %624 = vmatpush1.xpose.msra.mxu0 0.0
      %625 = vmatprep.subr.mxu0 0.0
      %626 = vmatpush1.xpose.msra.mxu0 0.0
      %627 = vmatprep.subr.mxu0 0.0
      %628 = vmatpush1.xpose.msra.mxu0 0.0
      %629 = vmatprep.subr.mxu0 0.0
      %630 = vmatpush1.xpose.msra.mxu0 0.0
      %631 = vmatprep.subr.mxu0 0.0
      %632 = vmatpush1.xpose.msra.mxu0 0.0
      %633 = vmatprep.subr.mxu0 0.0
      %634 = vmatpush1.xpose.msra.mxu0 0.0
      %635 = vmatprep.subr.mxu0 0.0
      %636 = vmatpush1.xpose.msra.mxu0 0.0
      %637 = vmatprep.subr.mxu0 0.0
      %638 = vmatpush1.xpose.msra.mxu0 0.0
      %639 = vmatprep.subr.mxu0 0.0
      %640 = vmatpush1.xpose.msra.mxu0 0.0
      %641 = vmatprep.subr.mxu0 0.0
      %642 = vmatpush1.xpose.msra.mxu0 0.0
      %643 = vmatprep.subr.mxu0 0.0
      %644 = vmatpush1.xpose.msra.mxu0 0.0
      %645 = vmatprep.subr.mxu0 0.0
      %646 = vmatpush1.xpose.msra.mxu0 0.0
      %647 = vmatprep.subr.mxu0 0.0
      %648 = vmatpush1.xpose.msra.mxu0 0.0
      %649 = vmatprep.mubr.f32.mxu0 0.0
      %650 = vmatmul.mubr.f32.gmra.mrb[0].mxu0 %v580
      %v651 = vpop.f32.mrb[0].mxu0
      %v652 = vadd.f32 0.0, %v651
      %v653 = vpop.f32.mrb[0].mxu0
      %654 = vdwg.mxu0
      %v655 = vsel %vm578, %v652, -inf
      %656 = vmax.xlane.f32.xlu0 %v655
      %v657 = vpop.xlane.xlu0 %656
      %v658 = vsub.f32 %v652, %v657
      %v659 = vmul.f32 %v658, 1.442695
      %v660 = vpow.pop %v659
      %v661 = vsel %vm578, %v660, 0.0
      %662 = vadd.xlane.f32.xlu0 %v661
      %v663 = vpop.xlane.xlu0 %662
      %v664 = vrcp.pop %v663
      %v665 = vmul.f32 %v660, %v664
      %v667 = vsel %vm578, %v665, 0
      %669 = vmatprep.subr.mxu0 0.0
      %670 = vmatpush1.msra.mxu0 %v575
      %671 = vmatprep.subr.mxu0 0.0
      %672 = vmatpush1.msra.mxu0 0.0
      %673 = vmatprep.subr.mxu0 0.0
      %674 = vmatpush1.msra.mxu0 0.0
      %675 = vmatprep.subr.mxu0 0.0
      %676 = vmatpush1.msra.mxu0 0.0
      %677 = vmatprep.subr.mxu0 0.0
      %678 = vmatpush1.msra.mxu0 0.0
      %679 = vmatprep.subr.mxu0 0.0
      %680 = vmatpush1.msra.mxu0 0.0
      %681 = vmatprep.subr.mxu0 0.0
      %682 = vmatpush1.msra.mxu0 0.0
      %683 = vmatprep.subr.mxu0 0.0
      %684 = vmatpush1.msra.mxu0 0.0
      %685 = vmatprep.subr.mxu0 0.0
      %686 = vmatpush1.msra.mxu0 0.0
      %687 = vmatprep.subr.mxu0 0.0
      %688 = vmatpush1.msra.mxu0 0.0
      %689 = vmatprep.subr.mxu0 0.0
      %690 = vmatpush1.msra.mxu0 0.0
      %691 = vmatprep.subr.mxu0 0.0
      %692 = vmatpush1.msra.mxu0 0.0
      %693 = vmatprep.subr.mxu0 0.0
      %694 = vmatpush1.msra.mxu0 0.0
      %695 = vmatprep.subr.mxu0 0.0
      %696 = vmatpush1.msra.mxu0 0.0
      %697 = vmatprep.subr.mxu0 0.0
      %698 = vmatpush1.msra.mxu0 0.0
      %699 = vmatprep.subr.mxu0 0.0
      %700 = vmatpush1.msra.mxu0 0.0
      %701 = vmatprep.subr.mxu0 0.0
      %702 = vmatpush1.msra.mxu0 0.0
      %703 = vmatprep.subr.mxu0 0.0
      %704 = vmatpush1.msra.mxu0 0.0
      %705 = vmatprep.subr.mxu0 0.0
      %706 = vmatpush1.msra.mxu0 0.0
      %707 = vmatprep.subr.mxu0 0.0
      %708 = vmatpush1.msra.mxu0 0.0
      %709 = vmatprep.subr.mxu0 0.0
      %710 = vmatpush1.msra.mxu0 0.0
      %711 = vmatprep.subr.mxu0 0.0
      %712 = vmatpush1.msra.mxu0 0.0
      %713 = vmatprep.subr.mxu0 0.0
      %714 = vmatpush1.msra.mxu0 0.0
      %715 = vmatprep.subr.mxu0 0.0
      %716 = vmatpush1.msra.mxu0 0.0
      %717 = vmatprep.subr.mxu0 0.0
      %718 = vmatpush1.msra.mxu0 0.0
      %719 = vmatprep.subr.mxu0 0.0
      %720 = vmatpush1.msra.mxu0 0.0
      %721 = vmatprep.subr.mxu0 0.0
      %722 = vmatpush1.msra.mxu0 0.0
      %723 = vmatprep.subr.mxu0 0.0
      %724 = vmatpush1.msra.mxu0 0.0
      %725 = vmatprep.subr.mxu0 0.0
      %726 = vmatpush1.msra.mxu0 0.0
      %727 = vmatprep.subr.mxu0 0.0
      %728 = vmatpush1.msra.mxu0 0.0
      %729 = vmatprep.subr.mxu0 0.0
      %730 = vmatpush1.msra.mxu0 0.0
      %731 = vmatprep.subr.mxu0 0.0
      %732 = vmatpush1.msra.mxu0 0.0
      %733 = vmatprep.mubr.f32.mxu0 0.0
      %734 = vmatmul.mubr.f32.gmra.mrb[0].mxu0 %v667
      %v735 = vpop.f32.mrb[0].mxu0
      %v736 = vadd.f32 0.0, %v735
      %v737 = vpop.f32.mrb[0].mxu0
      %738 = vdwg.mxu0
      %v739 = vld [vmem:[%s5] sm:$0xff]
      %s740 = scalar_lea.vmem %s2, 128
      %v741 = vld [vmem:[%s740] sm:$0xff]
      %v742 = vld [vmem:[%s740 + $0x8] sm:$0xff]
      %v743 = vld [vmem:[%s740 + $0x10] sm:$0xff]
      %v744 = vld [vmem:[%s740 + $0x18] sm:$0xff]
      %v745 = vld [vmem:[%s740 + $0x20] sm:$0xff]
      %v746 = vld [vmem:[%s740 + $0x28] sm:$0xff]
      %v747 = vld [vmem:[%s740 + $0x30] sm:$0xff]
      %v748 = vld [vmem:[%s740 + $0x38] sm:$0xff]
      %v749 = vld [vmem:[%s740 + $0x40] sm:$0xff]
      %v750 = vld [vmem:[%s740 + $0x48] sm:$0xff]
      %v751 = vld [vmem:[%s740 + $0x50] sm:$0xff]
      %v752 = vld [vmem:[%s740 + $0x58] sm:$0xff]
      %v753 = vld [vmem:[%s740 + $0x60] sm:$0xff]
      %v754 = vld [vmem:[%s740 + $0x68] sm:$0xff]
      %v755 = vld [vmem:[%s740 + $0x70] sm:$0xff]
      %v756 = vld [vmem:[%s740 + $0x78] sm:$0xff]
      %757 = vmatprep.subr.mxu0 0.0
      %758 = vmatpush1.msra.mxu0 %v741
      %759 = vmatprep.subr.mxu0 0.0
      %760 = vmatpush1.msra.mxu0 %v742
      %761 = vmatprep.subr.mxu0 0.0
      %762 = vmatpush1.msra.mxu0 %v743
      %763 = vmatprep.subr.mxu0 0.0
      %764 = vmatpush1.msra.mxu0 %v744
      %765 = vmatprep.subr.mxu0 0.0
      %766 = vmatpush1.msra.mxu0 %v745
      %767 = vmatprep.subr.mxu0 0.0
      %768 = vmatpush1.msra.mxu0 %v746
      %769 = vmatprep.subr.mxu0 0.0
      %770 = vmatpush1.msra.mxu0 %v747
      %771 = vmatprep.subr.mxu0 0.0
      %772 = vmatpush1.msra.mxu0 %v748
      %773 = vmatprep.subr.mxu0 0.0
      %774 = vmatpush1.msra.mxu0 %v749
      %775 = vmatprep.subr.mxu0 0.0
      %776 = vmatpush1.msra.mxu0 %v750
      %777 = vmatprep.subr.mxu0 0.0
      %778 = vmatpush1.msra.mxu0 %v751
      %779 = vmatprep.subr.mxu0 0.0
      %780 = vmatpush1.msra.mxu0 %v752
      %781 = vmatprep.subr.mxu0 0.0
      %782 = vmatpush1.msra.mxu0 %v753
      %783 = vmatprep.subr.mxu0 0.0
      %784 = vmatpush1.msra.mxu0 %v754
      %785 = vmatprep.subr.mxu0 0.0
      %786 = vmatpush1.msra.mxu0 %v755
      %787 = vmatprep.subr.mxu0 0.0
      %788 = vmatpush1.msra.mxu0 %v756
      %789 = vmatprep.subr.mxu0 0.0
      %790 = vmatpush1.msra.mxu0 0.0
      %791 = vmatprep.subr.mxu0 0.0
      %792 = vmatpush1.msra.mxu0 0.0
      %793 = vmatprep.subr.mxu0 0.0
      %794 = vmatpush1.msra.mxu0 0.0
      %795 = vmatprep.subr.mxu0 0.0
      %796 = vmatpush1.msra.mxu0 0.0
      %797 = vmatprep.subr.mxu0 0.0
      %798 = vmatpush1.msra.mxu0 0.0
      %799 = vmatprep.subr.mxu0 0.0
      %800 = vmatpush1.msra.mxu0 0.0
      %801 = vmatprep.subr.mxu0 0.0
      %802 = vmatpush1.msra.mxu0 0.0
      %803 = vmatprep.subr.mxu0 0.0
      %804 = vmatpush1.msra.mxu0 0.0
      %805 = vmatprep.subr.mxu0 0.0
      %806 = vmatpush1.msra.mxu0 0.0
      %807 = vmatprep.subr.mxu0 0.0
      %808 = vmatpush1.msra.mxu0 0.0
      %809 = vmatprep.subr.mxu0 0.0
      %810 = vmatpush1.msra.mxu0 0.0
      %811 = vmatprep.subr.mxu0 0.0
      %812 = vmatpush1.msra.mxu0 0.0
      %813 = vmatprep.subr.mxu0 0.0
      %814 = vmatpush1.msra.mxu0 0.0
      %815 = vmatprep.subr.mxu0 0.0
      %816 = vmatpush1.msra.mxu0 0.0
      %817 = vmatprep.subr.mxu0 0.0
      %818 = vmatpush1.msra.mxu0 0.0
      %819 = vmatprep.subr.mxu0 0.0
      %820 = vmatpush1.msra.mxu0 0.0
      %821 = vmatprep.mubr.f32.mxu0 0.0
      %822 = vmatmul.mubr.f32.gmra.mrb[0].mxu0 %v318
      %v823 = vpop.f32.mrb[0].mxu0
      %v824 = vadd.f32 0.0, %v823
      %v825 = vpop.f32.mrb[0].mxu0
      %826 = vdwg.mxu0
      %s827 = scalar_lea.vmem %s3, 128
      %v828 = vld [vmem:[%s827] sm:$0xff]
      %v829 = vld [vmem:[%s827 + $0x8] sm:$0xff]
      %v830 = vld [vmem:[%s827 + $0x10] sm:$0xff]
      %v831 = vld [vmem:[%s827 + $0x18] sm:$0xff]
      %v832 = vld [vmem:[%s827 + $0x20] sm:$0xff]
      %v833 = vld [vmem:[%s827 + $0x28] sm:$0xff]
      %v834 = vld [vmem:[%s827 + $0x30] sm:$0xff]
      %v835 = vld [vmem:[%s827 + $0x38] sm:$0xff]
      %v836 = vld [vmem:[%s827 + $0x40] sm:$0xff]
      %v837 = vld [vmem:[%s827 + $0x48] sm:$0xff]
      %v838 = vld [vmem:[%s827 + $0x50] sm:$0xff]
      %v839 = vld [vmem:[%s827 + $0x58] sm:$0xff]
      %v840 = vld [vmem:[%s827 + $0x60] sm:$0xff]
      %v841 = vld [vmem:[%s827 + $0x68] sm:$0xff]
      %v842 = vld [vmem:[%s827 + $0x70] sm:$0xff]
      %v843 = vld [vmem:[%s827 + $0x78] sm:$0xff]
      %844 = vmatprep.subr.mxu0 0.0
      %845 = vmatpush1.msra.mxu0 %v828
      %846 = vmatprep.subr.mxu0 0.0
      %847 = vmatpush1.msra.mxu0 %v829
      %848 = vmatprep.subr.mxu0 0.0
      %849 = vmatpush1.msra.mxu0 %v830
      %850 = vmatprep.subr.mxu0 0.0
      %851 = vmatpush1.msra.mxu0 %v831
      %852 = vmatprep.subr.mxu0 0.0
      %853 = vmatpush1.msra.mxu0 %v832
      %854 = vmatprep.subr.mxu0 0.0
      %855 = vmatpush1.msra.mxu0 %v833
      %856 = vmatprep.subr.mxu0 0.0
      %857 = vmatpush1.msra.mxu0 %v834
      %858 = vmatprep.subr.mxu0 0.0
      %859 = vmatpush1.msra.mxu0 %v835
      %860 = vmatprep.subr.mxu0 0.0
      %861 = vmatpush1.msra.mxu0 %v836
      %862 = vmatprep.subr.mxu0 0.0
      %863 = vmatpush1.msra.mxu0 %v837
      %864 = vmatprep.subr.mxu0 0.0
      %865 = vmatpush1.msra.mxu0 %v838
      %866 = vmatprep.subr.mxu0 0.0
      %867 = vmatpush1.msra.mxu0 %v839
      %868 = vmatprep.subr.mxu0 0.0
      %869 = vmatpush1.msra.mxu0 %v840
      %870 = vmatprep.subr.mxu0 0.0
      %871 = vmatpush1.msra.mxu0 %v841
      %872 = vmatprep.subr.mxu0 0.0
      %873 = vmatpush1.msra.mxu0 %v842
      %874 = vmatprep.subr.mxu0 0.0
      %875 = vmatpush1.msra.mxu0 %v843
      %876 = vmatprep.subr.mxu0 0.0
      %877 = vmatpush1.msra.mxu0 0.0
      %878 = vmatprep.subr.mxu0 0.0
      %879 = vmatpush1.msra.mxu0 0.0
      %880 = vmatprep.subr.mxu0 0.0
      %881 = vmatpush1.msra.mxu0 0.0
      %882 = vmatprep.subr.mxu0 0.0
      %883 = vmatpush1.msra.mxu0 0.0
      %884 = vmatprep.subr.mxu0 0.0
      %885 = vmatpush1.msra.mxu0 0.0
      %886 = vmatprep.subr.mxu0 0.0
      %887 = vmatpush1.msra.mxu0 0.0
      %888 = vmatprep.subr.mxu0 0.0
      %889 = vmatpush1.msra.mxu0 0.0
      %890 = vmatprep.subr.mxu0 0.0
      %891 = vmatpush1.msra.mxu0 0.0
      %892 = vmatprep.subr.mxu0 0.0
      %893 = vmatpush1.msra.mxu0 0.0
      %894 = vmatprep.subr.mxu0 0.0
      %895 = vmatpush1.msra.mxu0 0.0
      %896 = vmatprep.subr.mxu0 0.0
      %897 = vmatpush1.msra.mxu0 0.0
      %898 = vmatprep.subr.mxu0 0.0
      %899 = vmatpush1.msra.mxu0 0.0
      %900 = vmatprep.subr.mxu0 0.0
      %901 = vmatpush1.msra.mxu0 0.0
      %902 = vmatprep.subr.mxu0 0.0
      %903 = vmatpush1.msra.mxu0 0.0
      %904 = vmatprep.subr.mxu0 0.0
      %905 = vmatpush1.msra.mxu0 0.0
      %906 = vmatprep.subr.mxu0 0.0
      %907 = vmatpush1.msra.mxu0 0.0
      %908 = vmatprep.mubr.f32.mxu0 0.0
      %909 = vmatmul.mubr.f32.gmra.mrb[0].mxu0 %v319
      %v910 = vpop.f32.mrb[0].mxu0
      %v911 = vadd.f32 0.0, %v910
      %v912 = vpop.f32.mrb[0].mxu0
      %913 = vdwg.mxu0
      %s914 = scalar_lea.vmem %s4, 128
      %v915 = vld [vmem:[%s914] sm:$0xff]
      %v916 = vld [vmem:[%s914 + $0x8] sm:$0xff]
      %v917 = vld [vmem:[%s914 + $0x10] sm:$0xff]
      %v918 = vld [vmem:[%s914 + $0x18] sm:$0xff]
      %v919 = vld [vmem:[%s914 + $0x20] sm:$0xff]
      %v920 = vld [vmem:[%s914 + $0x28] sm:$0xff]
      %v921 = vld [vmem:[%s914 + $0x30] sm:$0xff]
      %v922 = vld [vmem:[%s914 + $0x38] sm:$0xff]
      %v923 = vld [vmem:[%s914 + $0x40] sm:$0xff]
      %v924 = vld [vmem:[%s914 + $0x48] sm:$0xff]
      %v925 = vld [vmem:[%s914 + $0x50] sm:$0xff]
      %v926 = vld [vmem:[%s914 + $0x58] sm:$0xff]
      %v927 = vld [vmem:[%s914 + $0x60] sm:$0xff]
      %v928 = vld [vmem:[%s914 + $0x68] sm:$0xff]
      %v929 = vld [vmem:[%s914 + $0x70] sm:$0xff]
      %v930 = vld [vmem:[%s914 + $0x78] sm:$0xff]
      %931 = vmatprep.subr.mxu0 0.0
      %932 = vmatpush1.msra.mxu0 %v915
      %933 = vmatprep.subr.mxu0 0.0
      %934 = vmatpush1.msra.mxu0 %v916
      %935 = vmatprep.subr.mxu0 0.0
      %936 = vmatpush1.msra.mxu0 %v917
      %937 = vmatprep.subr.mxu0 0.0
      %938 = vmatpush1.msra.mxu0 %v918
      %939 = vmatprep.subr.mxu0 0.0
      %940 = vmatpush1.msra.mxu0 %v919
      %941 = vmatprep.subr.mxu0 0.0
      %942 = vmatpush1.msra.mxu0 %v920
      %943 = vmatprep.subr.mxu0 0.0
      %944 = vmatpush1.msra.mxu0 %v921
      %945 = vmatprep.subr.mxu0 0.0
      %946 = vmatpush1.msra.mxu0 %v922
      %947 = vmatprep.subr.mxu0 0.0
      %948 = vmatpush1.msra.mxu0 %v923
      %949 = vmatprep.subr.mxu0 0.0
      %950 = vmatpush1.msra.mxu0 %v924
      %951 = vmatprep.subr.mxu0 0.0
      %952 = vmatpush1.msra.mxu0 %v925
      %953 = vmatprep.subr.mxu0 0.0
      %954 = vmatpush1.msra.mxu0 %v926
      %955 = vmatprep.subr.mxu0 0.0
      %956 = vmatpush1.msra.mxu0 %v927
      %957 = vmatprep.subr.mxu0 0.0
      %958 = vmatpush1.msra.mxu0 %v928
      %959 = vmatprep.subr.mxu0 0.0
      %960 = vmatpush1.msra.mxu0 %v929
      %961 = vmatprep.subr.mxu0 0.0
      %962 = vmatpush1.msra.mxu0 %v930
      %963 = vmatprep.subr.mxu0 0.0
      %964 = vmatpush1.msra.mxu0 0.0
      %965 = vmatprep.subr.mxu0 0.0
      %966 = vmatpush1.msra.mxu0 0.0
      %967 = vmatprep.subr.mxu0 0.0
      %968 = vmatpush1.msra.mxu0 0.0
      %969 = vmatprep.subr.mxu0 0.0
      %970 = vmatpush1.msra.mxu0 0.0
      %971 = vmatprep.subr.mxu0 0.0
      %972 = vmatpush1.msra.mxu0 0.0
      %973 = vmatprep.subr.mxu0 0.0
      %974 = vmatpush1.msra.mxu0 0.0
      %975 = vmatprep.subr.mxu0 0.0
      %976 = vmatpush1.msra.mxu0 0.0
      %977 = vmatprep.subr.mxu0 0.0
      %978 = vmatpush1.msra.mxu0 0.0
      %979 = vmatprep.subr.mxu0 0.0
      %980 = vmatpush1.msra.mxu0 0.0
      %981 = vmatprep.subr.mxu0 0.0
      %982 = vmatpush1.msra.mxu0 0.0
      %983 = vmatprep.subr.mxu0 0.0
      %984 = vmatpush1.msra.mxu0 0.0
      %985 = vmatprep.subr.mxu0 0.0
      %986 = vmatpush1.msra.mxu0 0.0
      %987 = vmatprep.subr.mxu0 0.0
      %988 = vmatpush1.msra.mxu0 0.0
      %989 = vmatprep.subr.mxu0 0.0
      %990 = vmatpush1.msra.mxu0 0.0
      %991 = vmatprep.subr.mxu0 0.0
      %992 = vmatpush1.msra.mxu0 0.0
      %993 = vmatprep.subr.mxu0 0.0
      %994 = vmatpush1.msra.mxu0 0.0
      %995 = vmatprep.mubr.f32.mxu0 0.0
      %996 = vmatmul.mubr.f32.gmra.mrb[0].mxu0 %v319
      %v997 = vpop.f32.mrb[0].mxu0
      %v998 = vadd.f32 0.0, %v997
      %v999 = vpop.f32.mrb[0].mxu0
      %1000 = vdwg.mxu0
      %v1002 = vsel %vm578, %v824, 0
      %v1005 = vsel %vm578, %v911, 0
      %1007 = vmatprep.subr.mxu0 0.0
      %1008 = vmatpush1.xpose.msra.mxu0 %v1005
      %1009 = vmatprep.subr.mxu0 0.0
      %1010 = vmatpush1.xpose.msra.mxu0 0.0
      %1011 = vmatprep.subr.mxu0 0.0
      %1012 = vmatpush1.xpose.msra.mxu0 0.0
      %1013 = vmatprep.subr.mxu0 0.0
      %1014 = vmatpush1.xpose.msra.mxu0 0.0
      %1015 = vmatprep.subr.mxu0 0.0
      %1016 = vmatpush1.xpose.msra.mxu0 0.0
      %1017 = vmatprep.subr.mxu0 0.0
      %1018 = vmatpush1.xpose.msra.mxu0 0.0
      %1019 = vmatprep.subr.mxu0 0.0
      %1020 = vmatpush1.xpose.msra.mxu0 0.0
      %1021 = vmatprep.subr.mxu0 0.0
      %1022 = vmatpush1.xpose.msra.mxu0 0.0
      %1023 = vmatprep.subr.mxu0 0.0
      %1024 = vmatpush1.xpose.msra.mxu0 0.0
      %1025 = vmatprep.subr.mxu0 0.0
      %1026 = vmatpush1.xpose.msra.mxu0 0.0
      %1027 = vmatprep.subr.mxu0 0.0
      %1028 = vmatpush1.xpose.msra.mxu0 0.0
      %1029 = vmatprep.subr.mxu0 0.0
      %1030 = vmatpush1.xpose.msra.mxu0 0.0
      %1031 = vmatprep.subr.mxu0 0.0
      %1032 = vmatpush1.xpose.msra.mxu0 0.0
      %1033 = vmatprep.subr.mxu0 0.0
      %1034 = vmatpush1.xpose.msra.mxu0 0.0
      %1035 = vmatprep.subr.mxu0 0.0
      %1036 = vmatpush1.xpose.msra.mxu0 0.0
      %1037 = vmatprep.subr.mxu0 0.0
      %1038 = vmatpush1.xpose.msra.mxu0 0.0
      %1039 = vmatprep.subr.mxu0 0.0
      %1040 = vmatpush1.xpose.msra.mxu0 0.0
      %1041 = vmatprep.subr.mxu0 0.0
      %1042 = vmatpush1.xpose.msra.mxu0 0.0
      %1043 = vmatprep.subr.mxu0 0.0
      %1044 = vmatpush1.xpose.msra.mxu0 0.0
      %1045 = vmatprep.subr.mxu0 0.0
      %1046 = vmatpush1.xpose.msra.mxu0 0.0
      %1047 = vmatprep.subr.mxu0 0.0
      %1048 = vmatpush1.xpose.msra.mxu0 0.0
      %1049 = vmatprep.subr.mxu0 0.0
      %1050 = vmatpush1.xpose.msra.mxu0 0.0
      %1051 = vmatprep.subr.mxu0 0.0
      %1052 = vmatpush1.xpose.msra.mxu0 0.0
      %1053 = vmatprep.subr.mxu0 0.0
      %1054 = vmatpush1.xpose.msra.mxu0 0.0
      %1055 = vmatprep.subr.mxu0 0.0
      %1056 = vmatpush1.xpose.msra.mxu0 0.0
      %1057 = vmatprep.subr.mxu0 0.0
      %1058 = vmatpush1.xpose.msra.mxu0 0.0
      %1059 = vmatprep.subr.mxu0 0.0
      %1060 = vmatpush1.xpose.msra.mxu0 0.0
      %1061 = vmatprep.subr.mxu0 0.0
      %1062 = vmatpush1.xpose.msra.mxu0 0.0
      %1063 = vmatprep.subr.mxu0 0.0
      %1064 = vmatpush1.xpose.msra.mxu0 0.0
      %1065 = vmatprep.subr.mxu0 0.0
      %1066 = vmatpush1.xpose.msra.mxu0 0.0
      %1067 = vmatprep.subr.mxu0 0.0
      %1068 = vmatpush1.xpose.msra.mxu0 0.0
      %1069 = vmatprep.subr.mxu0 0.0
      %1070 = vmatpush1.xpose.msra.mxu0 0.0
      %1071 = vmatprep.mubr.f32.mxu0 0.0
      %1072 = vmatmul.mubr.f32.gmra.mrb[0].mxu0 %v1002
      %v1073 = vpop.f32.mrb[0].mxu0
      %v1074 = vadd.f32 0.0, %v1073
      %v1075 = vpop.f32.mrb[0].mxu0
      %1076 = vdwg.mxu0
      %v1077 = vsel %vm578, %v1074, -inf
      %1078 = vmax.xlane.f32.xlu0 %v1077
      %v1079 = vpop.xlane.xlu0 %1078
      %v1080 = vsub.f32 %v1074, %v1079
      %v1081 = vmul.f32 %v1080, 1.442695
      %v1082 = vpow.pop %v1081
      %v1083 = vsel %vm578, %v1082, 0.0
      %1084 = vadd.xlane.f32.xlu0 %v1083
      %v1085 = vpop.xlane.xlu0 %1084
      %v1086 = vrcp.pop %v1085
      %v1087 = vmul.f32 %v1082, %v1086
      %v1089 = vsel %vm578, %v1087, 0
      %1091 = vmatprep.subr.mxu0 0.0
      %1092 = vmatpush1.msra.mxu0 %v998
      %1093 = vmatprep.subr.mxu0 0.0
      %1094 = vmatpush1.msra.mxu0 0.0
      %1095 = vmatprep.subr.mxu0 0.0
      %1096 = vmatpush1.msra.mxu0 0.0
      %1097 = vmatprep.subr.mxu0 0.0
      %1098 = vmatpush1.msra.mxu0 0.0
      %1099 = vmatprep.subr.mxu0 0.0
      %1100 = vmatpush1.msra.mxu0 0.0
      %1101 = vmatprep.subr.mxu0 0.0
      %1102 = vmatpush1.msra.mxu0 0.0
      %1103 = vmatprep.subr.mxu0 0.0
      %1104 = vmatpush1.msra.mxu0 0.0
      %1105 = vmatprep.subr.mxu0 0.0
      %1106 = vmatpush1.msra.mxu0 0.0
      %1107 = vmatprep.subr.mxu0 0.0
      %1108 = vmatpush1.msra.mxu0 0.0
      %1109 = vmatprep.subr.mxu0 0.0
      %1110 = vmatpush1.msra.mxu0 0.0
      %1111 = vmatprep.subr.mxu0 0.0
      %1112 = vmatpush1.msra.mxu0 0.0
      %1113 = vmatprep.subr.mxu0 0.0
      %1114 = vmatpush1.msra.mxu0 0.0
      %1115 = vmatprep.subr.mxu0 0.0
      %1116 = vmatpush1.msra.mxu0 0.0
      %1117 = vmatprep.subr.mxu0 0.0
      %1118 = vmatpush1.msra.mxu0 0.0
      %1119 = vmatprep.subr.mxu0 0.0
      %1120 = vmatpush1.msra.mxu0 0.0
      %1121 = vmatprep.subr.mxu0 0.0
      %1122 = vmatpush1.msra.mxu0 0.0
      %1123 = vmatprep.subr.mxu0 0.0
      %1124 = vmatpush1.msra.mxu0 0.0
      %1125 = vmatprep.subr.mxu0 0.0
      %1126 = vmatpush1.msra.mxu0 0.0
      %1127 = vmatprep.subr.mxu0 0.0
      %1128 = vmatpush1.msra.mxu0 0.0
      %1129 = vmatprep.subr.mxu0 0.0
      %1130 = vmatpush1.msra.mxu0 0.0
      %1131 = vmatprep.subr.mxu0 0.0
      %1132 = vmatpush1.msra.mxu0 0.0
      %1133 = vmatprep.subr.mxu0 0.0
      %1134 = vmatpush1.msra.mxu0 0.0
      %1135 = vmatprep.subr.mxu0 0.0
      %1136 = vmatpush1.msra.mxu0 0.0
      %1137 = vmatprep.subr.mxu0 0.0
      %1138 = vmatpush1.msra.mxu0 0.0
      %1139 = vmatprep.subr.mxu0 0.0
      %1140 = vmatpush1.msra.mxu0 0.0
      %1141 = vmatprep.subr.mxu0 0.0
      %1142 = vmatpush1.msra.mxu0 0.0
      %1143 = vmatprep.subr.mxu0 0.0
      %1144 = vmatpush1.msra.mxu0 0.0
      %1145 = vmatprep.subr.mxu0 0.0
      %1146 = vmatpush1.msra.mxu0 0.0
      %1147 = vmatprep.subr.mxu0 0.0
      %1148 = vmatpush1.msra.mxu0 0.0
      %1149 = vmatprep.subr.mxu0 0.0
      %1150 = vmatpush1.msra.mxu0 0.0
      %1151 = vmatprep.subr.mxu0 0.0
      %1152 = vmatpush1.msra.mxu0 0.0
      %1153 = vmatprep.subr.mxu0 0.0
      %1154 = vmatpush1.msra.mxu0 0.0
      %1155 = vmatprep.mubr.f32.mxu0 0.0
      %1156 = vmatmul.mubr.f32.gmra.mrb[0].mxu0 %v1089
      %v1157 = vpop.f32.mrb[0].mxu0
      %v1158 = vadd.f32 0.0, %v1157
      %v1159 = vpop.f32.mrb[0].mxu0
      %1160 = vdwg.mxu0
      %s1161 = scalar_lea.vmem %s5, 8
      %v1162 = vld [vmem:[%s1161] sm:$0xff]
      %v1164 = vsel %vm578, %v1158, 0
      %1166 = vmatprep.subr.mxu0 0.0
      %1167 = vmatpush1.msra.mxu0 %v1162
      %1168 = vmatprep.subr.mxu0 0.0
      %1169 = vmatpush1.msra.mxu0 0.0
      %1170 = vmatprep.subr.mxu0 0.0
      %1171 = vmatpush1.msra.mxu0 0.0
      %1172 = vmatprep.subr.mxu0 0.0
      %1173 = vmatpush1.msra.mxu0 0.0
      %1174 = vmatprep.subr.mxu0 0.0
      %1175 = vmatpush1.msra.mxu0 0.0
      %1176 = vmatprep.subr.mxu0 0.0
      %1177 = vmatpush1.msra.mxu0 0.0
      %1178 = vmatprep.subr.mxu0 0.0
      %1179 = vmatpush1.msra.mxu0 0.0
      %1180 = vmatprep.subr.mxu0 0.0
      %1181 = vmatpush1.msra.mxu0 0.0
      %1182 = vmatprep.subr.mxu0 0.0
      %1183 = vmatpush1.msra.mxu0 0.0
      %1184 = vmatprep.subr.mxu0 0.0
      %1185 = vmatpush1.msra.mxu0 0.0
      %1186 = vmatprep.subr.mxu0 0.0
      %1187 = vmatpush1.msra.mxu0 0.0
      %1188 = vmatprep.subr.mxu0 0.0
      %1189 = vmatpush1.msra.mxu0 0.0
      %1190 = vmatprep.subr.mxu0 0.0
      %1191 = vmatpush1.msra.mxu0 0.0
      %1192 = vmatprep.subr.mxu0 0.0
      %1193 = vmatpush1.msra.mxu0 0.0
      %1194 = vmatprep.subr.mxu0 0.0
      %1195 = vmatpush1.msra.mxu0 0.0
      %1196 = vmatprep.subr.mxu0 0.0
      %1197 = vmatpush1.msra.mxu0 0.0
      %1198 = vmatprep.subr.mxu0 0.0
      %1199 = vmatpush1.msra.mxu0 0.0
      %1200 = vmatprep.subr.mxu0 0.0
      %1201 = vmatpush1.msra.mxu0 0.0
      %1202 = vmatprep.subr.mxu0 0.0
      %1203 = vmatpush1.msra.mxu0 0.0
      %1204 = vmatprep.subr.mxu0 0.0
      %1205 = vmatpush1.msra.mxu0 0.0
      %1206 = vmatprep.subr.mxu0 0.0
      %1207 = vmatpush1.msra.mxu0 0.0
      %1208 = vmatprep.subr.mxu0 0.0
      %1209 = vmatpush1.msra.mxu0 0.0
      %1210 = vmatprep.subr.mxu0 0.0
      %1211 = vmatpush1.msra.mxu0 0.0
      %1212 = vmatprep.subr.mxu0 0.0
      %1213 = vmatpush1.msra.mxu0 0.0
      %1214 = vmatprep.subr.mxu0 0.0
      %1215 = vmatpush1.msra.mxu0 0.0
      %1216 = vmatprep.subr.mxu0 0.0
      %1217 = vmatpush1.msra.mxu0 0.0
      %1218 = vmatprep.subr.mxu0 0.0
      %1219 = vmatpush1.msra.mxu0 0.0
      %1220 = vmatprep.subr.mxu0 0.0
      %1221 = vmatpush1.msra.mxu0 0.0
      %1222 = vmatprep.subr.mxu0 0.0
      %1223 = vmatpush1.msra.mxu0 0.0
      %1224 = vmatprep.subr.mxu0 0.0
      %1225 = vmatpush1.msra.mxu0 0.0
      %1226 = vmatprep.subr.mxu0 0.0
      %1227 = vmatpush1.msra.mxu0 0.0
      %1228 = vmatprep.subr.mxu0 0.0
      %1229 = vmatpush1.msra.mxu0 0.0
      %1230 = vmatprep.mubr.f32.mxu0 0.0
      %1231 = vmatmul.mubr.f32.gmra.mrb[0].mxu0 %v1164
      %v1232 = vpop.f32.mrb[0].mxu0
      %v1233 = vadd.f32 0.0, %v1232
      %v1234 = vpop.f32.mrb[0].mxu0
      %1235 = vdwg.mxu0
      %v1237 = vsel %vm578, %v736, 0
      %1239 = vmatprep.subr.mxu0 0.0
      %1240 = vmatpush1.msra.mxu0 %v739
      %1241 = vmatprep.subr.mxu0 0.0
      %1242 = vmatpush1.msra.mxu0 0.0
      %1243 = vmatprep.subr.mxu0 0.0
      %1244 = vmatpush1.msra.mxu0 0.0
      %1245 = vmatprep.subr.mxu0 0.0
      %1246 = vmatpush1.msra.mxu0 0.0
      %1247 = vmatprep.subr.mxu0 0.0
      %1248 = vmatpush1.msra.mxu0 0.0
      %1249 = vmatprep.subr.mxu0 0.0
      %1250 = vmatpush1.msra.mxu0 0.0
      %1251 = vmatprep.subr.mxu0 0.0
      %1252 = vmatpush1.msra.mxu0 0.0
      %1253 = vmatprep.subr.mxu0 0.0
      %1254 = vmatpush1.msra.mxu0 0.0
      %1255 = vmatprep.subr.mxu0 0.0
      %1256 = vmatpush1.msra.mxu0 0.0
      %1257 = vmatprep.subr.mxu0 0.0
      %1258 = vmatpush1.msra.mxu0 0.0
      %1259 = vmatprep.subr.mxu0 0.0
      %1260 = vmatpush1.msra.mxu0 0.0
      %1261 = vmatprep.subr.mxu0 0.0
      %1262 = vmatpush1.msra.mxu0 0.0
      %1263 = vmatprep.subr.mxu0 0.0
      %1264 = vmatpush1.msra.mxu0 0.0
      %1265 = vmatprep.subr.mxu0 0.0
      %1266 = vmatpush1.msra.mxu0 0.0
      %1267 = vmatprep.subr.mxu0 0.0
      %1268 = vmatpush1.msra.mxu0 0.0
      %1269 = vmatprep.subr.mxu0 0.0
      %1270 = vmatpush1.msra.mxu0 0.0
      %1271 = vmatprep.subr.mxu0 0.0
      %1272 = vmatpush1.msra.mxu0 0.0
      %1273 = vmatprep.subr.mxu0 0.0
      %1274 = vmatpush1.msra.mxu0 0.0
      %1275 = vmatprep.subr.mxu0 0.0
      %1276 = vmatpush1.msra.mxu0 0.0
      %1277 = vmatprep.subr.mxu0 0.0
      %1278 = vmatpush1.msra.mxu0 0.0
      %1279 = vmatprep.subr.mxu0 0.0
      %1280 = vmatpush1.msra.mxu0 0.0
      %1281 = vmatprep.subr.mxu0 0.0
      %1282 = vmatpush1.msra.mxu0 0.0
      %1283 = vmatprep.subr.mxu0 0.0
      %1284 = vmatpush1.msra.mxu0 0.0
      %1285 = vmatprep.subr.mxu0 0.0
      %1286 = vmatpush1.msra.mxu0 0.0
      %1287 = vmatprep.subr.mxu0 0.0
      %1288 = vmatpush1.msra.mxu0 0.0
      %1289 = vmatprep.subr.mxu0 0.0
      %1290 = vmatpush1.msra.mxu0 0.0
      %1291 = vmatprep.subr.mxu0 0.0
      %1292 = vmatpush1.msra.mxu0 0.0
      %1293 = vmatprep.subr.mxu0 0.0
      %1294 = vmatpush1.msra.mxu0 0.0
      %1295 = vmatprep.subr.mxu0 0.0
      %1296 = vmatpush1.msra.mxu0 0.0
      %1297 = vmatprep.subr.mxu0 0.0
      %1298 = vmatpush1.msra.mxu0 0.0
      %1299 = vmatprep.subr.mxu0 0.0
      %1300 = vmatpush1.msra.mxu0 0.0
      %1301 = vmatprep.subr.mxu0 0.0
      %1302 = vmatpush1.msra.mxu0 0.0
      %1303 = vmatprep.mubr.f32.mxu0 0.0
      %1304 = vmatmul.mubr.f32.gmra.mrb[0].mxu0 %v1237
      %v1305 = vpop.f32.mrb[0].mxu0
      %v1306 = vadd.f32 %v1233, %v1305
      %v1307 = vpop.f32.mrb[0].mxu0
      %1308 = vdwg.mxu0
      %s1309 = scalar_lea.vmem %s2, 256
      %v1310 = vld [vmem:[%s1309] sm:$0xff]
      %v1311 = vld [vmem:[%s1309 + $0x8] sm:$0xff]
      %v1312 = vld [vmem:[%s1309 + $0x10] sm:$0xff]
      %v1313 = vld [vmem:[%s1309 + $0x18] sm:$0xff]
      %v1314 = vld [vmem:[%s1309 + $0x20] sm:$0xff]
      %v1315 = vld [vmem:[%s1309 + $0x28] sm:$0xff]
      %v1316 = vld [vmem:[%s1309 + $0x30] sm:$0xff]
      %v1317 = vld [vmem:[%s1309 + $0x38] sm:$0xff]
      %v1318 = vld [vmem:[%s1309 + $0x40] sm:$0xff]
      %v1319 = vld [vmem:[%s1309 + $0x48] sm:$0xff]
      %v1320 = vld [vmem:[%s1309 + $0x50] sm:$0xff]
      %v1321 = vld [vmem:[%s1309 + $0x58] sm:$0xff]
      %v1322 = vld [vmem:[%s1309 + $0x60] sm:$0xff]
      %v1323 = vld [vmem:[%s1309 + $0x68] sm:$0xff]
      %v1324 = vld [vmem:[%s1309 + $0x70] sm:$0xff]
      %v1325 = vld [vmem:[%s1309 + $0x78] sm:$0xff]
      %1326 = vmatprep.subr.mxu0 0.0
      %1327 = vmatpush1.msra.mxu0 %v1310
      %1328 = vmatprep.subr.mxu0 0.0
      %1329 = vmatpush1.msra.mxu0 %v1311
      %1330 = vmatprep.subr.mxu0 0.0
      %1331 = vmatpush1.msra.mxu0 %v1312
      %1332 = vmatprep.subr.mxu0 0.0
      %1333 = vmatpush1.msra.mxu0 %v1313
      %1334 = vmatprep.subr.mxu0 0.0
      %1335 = vmatpush1.msra.mxu0 %v1314
      %1336 = vmatprep.subr.mxu0 0.0
      %1337 = vmatpush1.msra.mxu0 %v1315
      %1338 = vmatprep.subr.mxu0 0.0
      %1339 = vmatpush1.msra.mxu0 %v1316
      %1340 = vmatprep.subr.mxu0 0.0
      %1341 = vmatpush1.msra.mxu0 %v1317
      %1342 = vmatprep.subr.mxu0 0.0
      %1343 = vmatpush1.msra.mxu0 %v1318
      %1344 = vmatprep.subr.mxu0 0.0
      %1345 = vmatpush1.msra.mxu0 %v1319
      %1346 = vmatprep.subr.mxu0 0.0
      %1347 = vmatpush1.msra.mxu0 %v1320
      %1348 = vmatprep.subr.mxu0 0.0
      %1349 = vmatpush1.msra.mxu0 %v1321
      %1350 = vmatprep.subr.mxu0 0.0
      %1351 = vmatpush1.msra.mxu0 %v1322
      %1352 = vmatprep.subr.mxu0 0.0
      %1353 = vmatpush1.msra.mxu0 %v1323
      %1354 = vmatprep.subr.mxu0 0.0
      %1355 = vmatpush1.msra.mxu0 %v1324
      %1356 = vmatprep.subr.mxu0 0.0
      %1357 = vmatpush1.msra.mxu0 %v1325
      %1358 = vmatprep.subr.mxu0 0.0
      %1359 = vmatpush1.msra.mxu0 0.0
      %1360 = vmatprep.subr.mxu0 0.0
      %1361 = vmatpush1.msra.mxu0 0.0
      %1362 = vmatprep.subr.mxu0 0.0
      %1363 = vmatpush1.msra.mxu0 0.0
      %1364 = vmatprep.subr.mxu0 0.0
      %1365 = vmatpush1.msra.mxu0 0.0
      %1366 = vmatprep.subr.mxu0 0.0
      %1367 = vmatpush1.msra.mxu0 0.0
      %1368 = vmatprep.subr.mxu0 0.0
      %1369 = vmatpush1.msra.mxu0 0.0
      %1370 = vmatprep.subr.mxu0 0.0
      %1371 = vmatpush1.msra.mxu0 0.0
      %1372 = vmatprep.subr.mxu0 0.0
      %1373 = vmatpush1.msra.mxu0 0.0
      %1374 = vmatprep.subr.mxu0 0.0
      %1375 = vmatpush1.msra.mxu0 0.0
      %1376 = vmatprep.subr.mxu0 0.0
      %1377 = vmatpush1.msra.mxu0 0.0
      %1378 = vmatprep.subr.mxu0 0.0
      %1379 = vmatpush1.msra.mxu0 0.0
      %1380 = vmatprep.subr.mxu0 0.0
      %1381 = vmatpush1.msra.mxu0 0.0
      %1382 = vmatprep.subr.mxu0 0.0
      %1383 = vmatpush1.msra.mxu0 0.0
      %1384 = vmatprep.subr.mxu0 0.0
      %1385 = vmatpush1.msra.mxu0 0.0
      %1386 = vmatprep.subr.mxu0 0.0
      %1387 = vmatpush1.msra.mxu0 0.0
      %1388 = vmatprep.subr.mxu0 0.0
      %1389 = vmatpush1.msra.mxu0 0.0
      %1390 = vmatprep.mubr.f32.mxu0 0.0
      %1391 = vmatmul.mubr.f32.gmra.mrb[0].mxu0 %v318
      %v1392 = vpop.f32.mrb[0].mxu0
      %v1393 = vadd.f32 0.0, %v1392
      %v1394 = vpop.f32.mrb[0].mxu0
      %1395 = vdwg.mxu0
      %s1396 = scalar_lea.vmem %s3, 256
      %v1397 = vld [vmem:[%s1396] sm:$0xff]
      %v1398 = vld [vmem:[%s1396 + $0x8] sm:$0xff]
      %v1399 = vld [vmem:[%s1396 + $0x10] sm:$0xff]
      %v1400 = vld [vmem:[%s1396 + $0x18] sm:$0xff]
      %v1401 = vld [vmem:[%s1396 + $0x20] sm:$0xff]
      %v1402 = vld [vmem:[%s1396 + $0x28] sm:$0xff]
      %v1403 = vld [vmem:[%s1396 + $0x30] sm:$0xff]
      %v1404 = vld [vmem:[%s1396 + $0x38] sm:$0xff]
      %v1405 = vld [vmem:[%s1396 + $0x40] sm:$0xff]
      %v1406 = vld [vmem:[%s1396 + $0x48] sm:$0xff]
      %v1407 = vld [vmem:[%s1396 + $0x50] sm:$0xff]
      %v1408 = vld [vmem:[%s1396 + $0x58] sm:$0xff]
      %v1409 = vld [vmem:[%s1396 + $0x60] sm:$0xff]
      %v1410 = vld [vmem:[%s1396 + $0x68] sm:$0xff]
      %v1411 = vld [vmem:[%s1396 + $0x70] sm:$0xff]
      %v1412 = vld [vmem:[%s1396 + $0x78] sm:$0xff]
      %1413 = vmatprep.subr.mxu0 0.0
      %1414 = vmatpush1.msra.mxu0 %v1397
      %1415 = vmatprep.subr.mxu0 0.0
      %1416 = vmatpush1.msra.mxu0 %v1398
      %1417 = vmatprep.subr.mxu0 0.0
      %1418 = vmatpush1.msra.mxu0 %v1399
      %1419 = vmatprep.subr.mxu0 0.0
      %1420 = vmatpush1.msra.mxu0 %v1400
      %1421 = vmatprep.subr.mxu0 0.0
      %1422 = vmatpush1.msra.mxu0 %v1401
      %1423 = vmatprep.subr.mxu0 0.0
      %1424 = vmatpush1.msra.mxu0 %v1402
      %1425 = vmatprep.subr.mxu0 0.0
      %1426 = vmatpush1.msra.mxu0 %v1403
      %1427 = vmatprep.subr.mxu0 0.0
      %1428 = vmatpush1.msra.mxu0 %v1404
      %1429 = vmatprep.subr.mxu0 0.0
      %1430 = vmatpush1.msra.mxu0 %v1405
      %1431 = vmatprep.subr.mxu0 0.0
      %1432 = vmatpush1.msra.mxu0 %v1406
      %1433 = vmatprep.subr.mxu0 0.0
      %1434 = vmatpush1.msra.mxu0 %v1407
      %1435 = vmatprep.subr.mxu0 0.0
      %1436 = vmatpush1.msra.mxu0 %v1408
      %1437 = vmatprep.subr.mxu0 0.0
      %1438 = vmatpush1.msra.mxu0 %v1409
      %1439 = vmatprep.subr.mxu0 0.0
      %1440 = vmatpush1.msra.mxu0 %v1410
      %1441 = vmatprep.subr.mxu0 0.0
      %1442 = vmatpush1.msra.mxu0 %v1411
      %1443 = vmatprep.subr.mxu0 0.0
      %1444 = vmatpush1.msra.mxu0 %v1412
      %1445 = vmatprep.subr.mxu0 0.0
      %1446 = vmatpush1.msra.mxu0 0.0
      %1447 = vmatprep.subr.mxu0 0.0
      %1448 = vmatpush1.msra.mxu0 0.0
      %1449 = vmatprep.subr.mxu0 0.0
      %1450 = vmatpush1.msra.mxu0 0.0
      %1451 = vmatprep.subr.mxu0 0.0
      %1452 = vmatpush1.msra.mxu0 0.0
      %1453 = vmatprep.subr.mxu0 0.0
      %1454 = vmatpush1.msra.mxu0 0.0
      %1455 = vmatprep.subr.mxu0 0.0
      %1456 = vmatpush1.msra.mxu0 0.0
      %1457 = vmatprep.subr.mxu0 0.0
      %1458 = vmatpush1.msra.mxu0 0.0
      %1459 = vmatprep.subr.mxu0 0.0
      %1460 = vmatpush1.msra.mxu0 0.0
      %1461 = vmatprep.subr.mxu0 0.0
      %1462 = vmatpush1.msra.mxu0 0.0
      %1463 = vmatprep.subr.mxu0 0.0
      %1464 = vmatpush1.msra.mxu0 0.0
      %1465 = vmatprep.subr.mxu0 0.0
      %1466 = vmatpush1.msra.mxu0 0.0
      %1467 = vmatprep.subr.mxu0 0.0
      %1468 = vmatpush1.msra.mxu0 0.0
      %1469 = vmatprep.subr.mxu0 0.0
      %1470 = vmatpush1.msra.mxu0 0.0
      %1471 = vmatprep.subr.mxu0 0.0
      %1472 = vmatpush1.msra.mxu0 0.0
      %1473 = vmatprep.subr.mxu0 0.0
      %1474 = vmatpush1.msra.mxu0 0.0
      %1475 = vmatprep.subr.mxu0 0.0
      %1476 = vmatpush1.msra.mxu0 0.0
      %1477 = vmatprep.mubr.f32.mxu0 0.0
      %1478 = vmatmul.mubr.f32.gmra.mrb[0].mxu0 %v319
      %v1479 = vpop.f32.mrb[0].mxu0
      %v1480 = vadd.f32 0.0, %v1479
      %v1481 = vpop.f32.mrb[0].mxu0
      %1482 = vdwg.mxu0
      %s1483 = scalar_lea.vmem %s4, 256
      %v1484 = vld [vmem:[%s1483] sm:$0xff]
      %v1485 = vld [vmem:[%s1483 + $0x8] sm:$0xff]
      %v1486 = vld [vmem:[%s1483 + $0x10] sm:$0xff]
      %v1487 = vld [vmem:[%s1483 + $0x18] sm:$0xff]
      %v1488 = vld [vmem:[%s1483 + $0x20] sm:$0xff]
      %v1489 = vld [vmem:[%s1483 + $0x28] sm:$0xff]
      %v1490 = vld [vmem:[%s1483 + $0x30] sm:$0xff]
      %v1491 = vld [vmem:[%s1483 + $0x38] sm:$0xff]
      %v1492 = vld [vmem:[%s1483 + $0x40] sm:$0xff]
      %v1493 = vld [vmem:[%s1483 + $0x48] sm:$0xff]
      %v1494 = vld [vmem:[%s1483 + $0x50] sm:$0xff]
      %v1495 = vld [vmem:[%s1483 + $0x58] sm:$0xff]
      %v1496 = vld [vmem:[%s1483 + $0x60] sm:$0xff]
      %v1497 = vld [vmem:[%s1483 + $0x68] sm:$0xff]
      %v1498 = vld [vmem:[%s1483 + $0x70] sm:$0xff]
      %v1499 = vld [vmem:[%s1483 + $0x78] sm:$0xff]
      %1500 = vmatprep.subr.mxu0 0.0
      %1501 = vmatpush1.msra.mxu0 %v1484
      %1502 = vmatprep.subr.mxu0 0.0
      %1503 = vmatpush1.msra.mxu0 %v1485
      %1504 = vmatprep.subr.mxu0 0.0
      %1505 = vmatpush1.msra.mxu0 %v1486
      %1506 = vmatprep.subr.mxu0 0.0
      %1507 = vmatpush1.msra.mxu0 %v1487
      %1508 = vmatprep.subr.mxu0 0.0
      %1509 = vmatpush1.msra.mxu0 %v1488
      %1510 = vmatprep.subr.mxu0 0.0
      %1511 = vmatpush1.msra.mxu0 %v1489
      %1512 = vmatprep.subr.mxu0 0.0
      %1513 = vmatpush1.msra.mxu0 %v1490
      %1514 = vmatprep.subr.mxu0 0.0
      %1515 = vmatpush1.msra.mxu0 %v1491
      %1516 = vmatprep.subr.mxu0 0.0
      %1517 = vmatpush1.msra.mxu0 %v1492
      %1518 = vmatprep.subr.mxu0 0.0
      %1519 = vmatpush1.msra.mxu0 %v1493
      %1520 = vmatprep.subr.mxu0 0.0
      %1521 = vmatpush1.msra.mxu0 %v1494
      %1522 = vmatprep.subr.mxu0 0.0
      %1523 = vmatpush1.msra.mxu0 %v1495
      %1524 = vmatprep.subr.mxu0 0.0
      %1525 = vmatpush1.msra.mxu0 %v1496
      %1526 = vmatprep.subr.mxu0 0.0
      %1527 = vmatpush1.msra.mxu0 %v1497
      %1528 = vmatprep.subr.mxu0 0.0
      %1529 = vmatpush1.msra.mxu0 %v1498
      %1530 = vmatprep.subr.mxu0 0.0
      %1531 = vmatpush1.msra.mxu0 %v1499
      %1532 = vmatprep.subr.mxu0 0.0
      %1533 = vmatpush1.msra.mxu0 0.0
      %1534 = vmatprep.subr.mxu0 0.0
      %1535 = vmatpush1.msra.mxu0 0.0
      %1536 = vmatprep.subr.mxu0 0.0
      %1537 = vmatpush1.msra.mxu0 0.0
      %1538 = vmatprep.subr.mxu0 0.0
      %1539 = vmatpush1.msra.mxu0 0.0
      %1540 = vmatprep.subr.mxu0 0.0
      %1541 = vmatpush1.msra.mxu0 0.0
      %1542 = vmatprep.subr.mxu0 0.0
      %1543 = vmatpush1.msra.mxu0 0.0
      %1544 = vmatprep.subr.mxu0 0.0
      %1545 = vmatpush1.msra.mxu0 0.0
      %1546 = vmatprep.subr.mxu0 0.0
      %1547 = vmatpush1.msra.mxu0 0.0
      %1548 = vmatprep.subr.mxu0 0.0
      %1549 = vmatpush1.msra.mxu0 0.0
      %1550 = vmatprep.subr.mxu0 0.0
      %1551 = vmatpush1.msra.mxu0 0.0
      %1552 = vmatprep.subr.mxu0 0.0
      %1553 = vmatpush1.msra.mxu0 0.0
      %1554 = vmatprep.subr.mxu0 0.0
      %1555 = vmatpush1.msra.mxu0 0.0
      %1556 = vmatprep.subr.mxu0 0.0
      %1557 = vmatpush1.msra.mxu0 0.0
      %1558 = vmatprep.subr.mxu0 0.0
      %1559 = vmatpush1.msra.mxu0 0.0
      %1560 = vmatprep.subr.mxu0 0.0
      %1561 = vmatpush1.msra.mxu0 0.0
      %1562 = vmatprep.subr.mxu0 0.0
      %1563 = vmatpush1.msra.mxu0 0.0
      %1564 = vmatprep.mubr.f32.mxu0 0.0
      %1565 = vmatmul.mubr.f32.gmra.mrb[0].mxu0 %v319
      %v1566 = vpop.f32.mrb[0].mxu0
      %v1567 = vadd.f32 0.0, %v1566
      %v1568 = vpop.f32.mrb[0].mxu0
      %1569 = vdwg.mxu0
      %v1571 = vsel %vm578, %v1393, 0
      %v1574 = vsel %vm578, %v1480, 0
      %1576 = vmatprep.subr.mxu0 0.0
      %1577 = vmatpush1.xpose.msra.mxu0 %v1574
      %1578 = vmatprep.subr.mxu0 0.0
      %1579 = vmatpush1.xpose.msra.mxu0 0.0
      %1580 = vmatprep.subr.mxu0 0.0
      %1581 = vmatpush1.xpose.msra.mxu0 0.0
      %1582 = vmatprep.subr.mxu0 0.0
      %1583 = vmatpush1.xpose.msra.mxu0 0.0
      %1584 = vmatprep.subr.mxu0 0.0
      %1585 = vmatpush1.xpose.msra.mxu0 0.0
      %1586 = vmatprep.subr.mxu0 0.0
      %1587 = vmatpush1.xpose.msra.mxu0 0.0
      %1588 = vmatprep.subr.mxu0 0.0
      %1589 = vmatpush1.xpose.msra.mxu0 0.0
      %1590 = vmatprep.subr.mxu0 0.0
      %1591 = vmatpush1.xpose.msra.mxu0 0.0
      %1592 = vmatprep.subr.mxu0 0.0
      %1593 = vmatpush1.xpose.msra.mxu0 0.0
      %1594 = vmatprep.subr.mxu0 0.0
      %1595 = vmatpush1.xpose.msra.mxu0 0.0
      %1596 = vmatprep.subr.mxu0 0.0
      %1597 = vmatpush1.xpose.msra.mxu0 0.0
      %1598 = vmatprep.subr.mxu0 0.0
      %1599 = vmatpush1.xpose.msra.mxu0 0.0
      %1600 = vmatprep.subr.mxu0 0.0
      %1601 = vmatpush1.xpose.msra.mxu0 0.0
      %1602 = vmatprep.subr.mxu0 0.0
      %1603 = vmatpush1.xpose.msra.mxu0 0.0
      %1604 = vmatprep.subr.mxu0 0.0
      %1605 = vmatpush1.xpose.msra.mxu0 0.0
      %1606 = vmatprep.subr.mxu0 0.0
      %1607 = vmatpush1.xpose.msra.mxu0 0.0
      %1608 = vmatprep.subr.mxu0 0.0
      %1609 = vmatpush1.xpose.msra.mxu0 0.0
      %1610 = vmatprep.subr.mxu0 0.0
      %1611 = vmatpush1.xpose.msra.mxu0 0.0
      %1612 = vmatprep.subr.mxu0 0.0
      %1613 = vmatpush1.xpose.msra.mxu0 0.0
      %1614 = vmatprep.subr.mxu0 0.0
      %1615 = vmatpush1.xpose.msra.mxu0 0.0
      %1616 = vmatprep.subr.mxu0 0.0
      %1617 = vmatpush1.xpose.msra.mxu0 0.0
      %1618 = vmatprep.subr.mxu0 0.0
      %1619 = vmatpush1.xpose.msra.mxu0 0.0
      %1620 = vmatprep.subr.mxu0 0.0
      %1621 = vmatpush1.xpose.msra.mxu0 0.0
      %1622 = vmatprep.subr.mxu0 0.0
      %1623 = vmatpush1.xpose.msra.mxu0 0.0
      %1624 = vmatprep.subr.mxu0 0.0
      %1625 = vmatpush1.xpose.msra.mxu0 0.0
      %1626 = vmatprep.subr.mxu0 0.0
      %1627 = vmatpush1.xpose.msra.mxu0 0.0
      %1628 = vmatprep.subr.mxu0 0.0
      %1629 = vmatpush1.xpose.msra.mxu0 0.0
      %1630 = vmatprep.subr.mxu0 0.0
      %1631 = vmatpush1.xpose.msra.mxu0 0.0
      %1632 = vmatprep.subr.mxu0 0.0
      %1633 = vmatpush1.xpose.msra.mxu0 0.0
      %1634 = vmatprep.subr.mxu0 0.0
      %1635 = vmatpush1.xpose.msra.mxu0 0.0
      %1636 = vmatprep.subr.mxu0 0.0
      %1637 = vmatpush1.xpose.msra.mxu0 0.0
      %1638 = vmatprep.subr.mxu0 0.0
      %1639 = vmatpush1.xpose.msra.mxu0 0.0
      %1640 = vmatprep.mubr.f32.mxu0 0.0
      %1641 = vmatmul.mubr.f32.gmra.mrb[0].mxu0 %v1571
      %v1642 = vpop.f32.mrb[0].mxu0
      %v1643 = vadd.f32 0.0, %v1642
      %v1644 = vpop.f32.mrb[0].mxu0
      %1645 = vdwg.mxu0
      %v1646 = vsel %vm578, %v1643, -inf
      %1647 = vmax.xlane.f32.xlu0 %v1646
      %v1648 = vpop.xlane.xlu0 %1647
      %v1649 = vsub.f32 %v1643, %v1648
      %v1650 = vmul.f32 %v1649, 1.442695
      %v1651 = vpow.pop %v1650
      %v1652 = vsel %vm578, %v1651, 0.0
      %1653 = vadd.xlane.f32.xlu0 %v1652
      %v1654 = vpop.xlane.xlu0 %1653
      %v1655 = vrcp.pop %v1654
      %v1656 = vmul.f32 %v1651, %v1655
      %v1658 = vsel %vm578, %v1656, 0
      %1660 = vmatprep.subr.mxu0 0.0
      %1661 = vmatpush1.msra.mxu0 %v1567
      %1662 = vmatprep.subr.mxu0 0.0
      %1663 = vmatpush1.msra.mxu0 0.0
      %1664 = vmatprep.subr.mxu0 0.0
      %1665 = vmatpush1.msra.mxu0 0.0
      %1666 = vmatprep.subr.mxu0 0.0
      %1667 = vmatpush1.msra.mxu0 0.0
      %1668 = vmatprep.subr.mxu0 0.0
      %1669 = vmatpush1.msra.mxu0 0.0
      %1670 = vmatprep.subr.mxu0 0.0
      %1671 = vmatpush1.msra.mxu0 0.0
      %1672 = vmatprep.subr.mxu0 0.0
      %1673 = vmatpush1.msra.mxu0 0.0
      %1674 = vmatprep.subr.mxu0 0.0
      %1675 = vmatpush1.msra.mxu0 0.0
      %1676 = vmatprep.subr.mxu0 0.0
      %1677 = vmatpush1.msra.mxu0 0.0
      %1678 = vmatprep.subr.mxu0 0.0
      %1679 = vmatpush1.msra.mxu0 0.0
      %1680 = vmatprep.subr.mxu0 0.0
      %1681 = vmatpush1.msra.mxu0 0.0
      %1682 = vmatprep.subr.mxu0 0.0
      %1683 = vmatpush1.msra.mxu0 0.0
      %1684 = vmatprep.subr.mxu0 0.0
      %1685 = vmatpush1.msra.mxu0 0.0
      %1686 = vmatprep.subr.mxu0 0.0
      %1687 = vmatpush1.msra.mxu0 0.0
      %1688 = vmatprep.subr.mxu0 0.0
      %1689 = vmatpush1.msra.mxu0 0.0
      %1690 = vmatprep.subr.mxu0 0.0
      %1691 = vmatpush1.msra.mxu0 0.0
      %1692 = vmatprep.subr.mxu0 0.0
      %1693 = vmatpush1.msra.mxu0 0.0
      %1694 = vmatprep.subr.mxu0 0.0
      %1695 = vmatpush1.msra.mxu0 0.0
      %1696 = vmatprep.subr.mxu0 0.0
      %1697 = vmatpush1.msra.mxu0 0.0
      %1698 = vmatprep.subr.mxu0 0.0
      %1699 = vmatpush1.msra.mxu0 0.0
      %1700 = vmatprep.subr.mxu0 0.0
      %1701 = vmatpush1.msra.mxu0 0.0
      %1702 = vmatprep.subr.mxu0 0.0
      %1703 = vmatpush1.msra.mxu0 0.0
      %1704 = vmatprep.subr.mxu0 0.0
      %1705 = vmatpush1.msra.mxu0 0.0
      %1706 = vmatprep.subr.mxu0 0.0
      %1707 = vmatpush1.msra.mxu0 0.0
      %1708 = vmatprep.subr.mxu0 0.0
      %1709 = vmatpush1.msra.mxu0 0.0
      %1710 = vmatprep.subr.mxu0 0.0
      %1711 = vmatpush1.msra.mxu0 0.0
      %1712 = vmatprep.subr.mxu0 0.0
      %1713 = vmatpush1.msra.mxu0 0.0
      %1714 = vmatprep.subr.mxu0 0.0
      %1715 = vmatpush1.msra.mxu0 0.0
      %1716 = vmatprep.subr.mxu0 0.0
      %1717 = vmatpush1.msra.mxu0 0.0
      %1718 = vmatprep.subr.mxu0 0.0
      %1719 = vmatpush1.msra.mxu0 0.0
      %1720 = vmatprep.subr.mxu0 0.0
      %1721 = vmatpush1.msra.mxu0 0.0
      %1722 = vmatprep.subr.mxu0 0.0
      %1723 = vmatpush1.msra.mxu0 0.0
      %1724 = vmatprep.mubr.f32.mxu0 0.0
      %1725 = vmatmul.mubr.f32.gmra.mrb[0].mxu0 %v1658
      %v1726 = vpop.f32.mrb[0].mxu0
      %v1727 = vadd.f32 0.0, %v1726
      %v1728 = vpop.f32.mrb[0].mxu0
      %1729 = vdwg.mxu0
      %s1730 = scalar_lea.vmem %s5, 16
      %v1731 = vld [vmem:[%s1730] sm:$0xff]
      %v1733 = vsel %vm578, %v1727, 0
      %1735 = vmatprep.subr.mxu0 0.0
      %1736 = vmatpush1.msra.mxu0 %v1731
      %1737 = vmatprep.subr.mxu0 0.0
      %1738 = vmatpush1.msra.mxu0 0.0
      %1739 = vmatprep.subr.mxu0 0.0
      %1740 = vmatpush1.msra.mxu0 0.0
      %1741 = vmatprep.subr.mxu0 0.0
      %1742 = vmatpush1.msra.mxu0 0.0
      %1743 = vmatprep.subr.mxu0 0.0
      %1744 = vmatpush1.msra.mxu0 0.0
      %1745 = vmatprep.subr.mxu0 0.0
      %1746 = vmatpush1.msra.mxu0 0.0
      %1747 = vmatprep.subr.mxu0 0.0
      %1748 = vmatpush1.msra.mxu0 0.0
      %1749 = vmatprep.subr.mxu0 0.0
      %1750 = vmatpush1.msra.mxu0 0.0
      %1751 = vmatprep.subr.mxu0 0.0
      %1752 = vmatpush1.msra.mxu0 0.0
      %1753 = vmatprep.subr.mxu0 0.0
      %1754 = vmatpush1.msra.mxu0 0.0
      %1755 = vmatprep.subr.mxu0 0.0
      %1756 = vmatpush1.msra.mxu0 0.0
      %1757 = vmatprep.subr.mxu0 0.0
      %1758 = vmatpush1.msra.mxu0 0.0
      %1759 = vmatprep.subr.mxu0 0.0
      %1760 = vmatpush1.msra.mxu0 0.0
      %1761 = vmatprep.subr.mxu0 0.0
      %1762 = vmatpush1.msra.mxu0 0.0
      %1763 = vmatprep.subr.mxu0 0.0
      %1764 = vmatpush1.msra.mxu0 0.0
      %1765 = vmatprep.subr.mxu0 0.0
      %1766 = vmatpush1.msra.mxu0 0.0
      %1767 = vmatprep.subr.mxu0 0.0
      %1768 = vmatpush1.msra.mxu0 0.0
      %1769 = vmatprep.subr.mxu0 0.0
      %1770 = vmatpush1.msra.mxu0 0.0
      %1771 = vmatprep.subr.mxu0 0.0
      %1772 = vmatpush1.msra.mxu0 0.0
      %1773 = vmatprep.subr.mxu0 0.0
      %1774 = vmatpush1.msra.mxu0 0.0
      %1775 = vmatprep.subr.mxu0 0.0
      %1776 = vmatpush1.msra.mxu0 0.0
      %1777 = vmatprep.subr.mxu0 0.0
      %1778 = vmatpush1.msra.mxu0 0.0
      %1779 = vmatprep.subr.mxu0 0.0
      %1780 = vmatpush1.msra.mxu0 0.0
      %1781 = vmatprep.subr.mxu0 0.0
      %1782 = vmatpush1.msra.mxu0 0.0
      %1783 = vmatprep.subr.mxu0 0.0
      %1784 = vmatpush1.msra.mxu0 0.0
      %1785 = vmatprep.subr.mxu0 0.0
      %1786 = vmatpush1.msra.mxu0 0.0
      %1787 = vmatprep.subr.mxu0 0.0
      %1788 = vmatpush1.msra.mxu0 0.0
      %1789 = vmatprep.subr.mxu0 0.0
      %1790 = vmatpush1.msra.mxu0 0.0
      %1791 = vmatprep.subr.mxu0 0.0
      %1792 = vmatpush1.msra.mxu0 0.0
      %1793 = vmatprep.subr.mxu0 0.0
      %1794 = vmatpush1.msra.mxu0 0.0
      %1795 = vmatprep.subr.mxu0 0.0
      %1796 = vmatpush1.msra.mxu0 0.0
      %1797 = vmatprep.subr.mxu0 0.0
      %1798 = vmatpush1.msra.mxu0 0.0
      %1799 = vmatprep.mubr.f32.mxu0 0.0
      %1800 = vmatmul.mubr.f32.gmra.mrb[0].mxu0 %v1733
      %v1801 = vpop.f32.mrb[0].mxu0
      %v1802 = vadd.f32 0.0, %v1801
      %v1803 = vpop.f32.mrb[0].mxu0
      %1804 = vdwg.mxu0
      %v1805 = vadd.f32 %v1306, %v1802
      %s1806 = scalar_lea.vmem %s2, 384
      %v1807 = vld [vmem:[%s1806] sm:$0xff]
      %v1808 = vld [vmem:[%s1806 + $0x8] sm:$0xff]
      %v1809 = vld [vmem:[%s1806 + $0x10] sm:$0xff]
      %v1810 = vld [vmem:[%s1806 + $0x18] sm:$0xff]
      %v1811 = vld [vmem:[%s1806 + $0x20] sm:$0xff]
      %v1812 = vld [vmem:[%s1806 + $0x28] sm:$0xff]
      %v1813 = vld [vmem:[%s1806 + $0x30] sm:$0xff]
      %v1814 = vld [vmem:[%s1806 + $0x38] sm:$0xff]
      %v1815 = vld [vmem:[%s1806 + $0x40] sm:$0xff]
      %v1816 = vld [vmem:[%s1806 + $0x48] sm:$0xff]
      %v1817 = vld [vmem:[%s1806 + $0x50] sm:$0xff]
      %v1818 = vld [vmem:[%s1806 + $0x58] sm:$0xff]
      %v1819 = vld [vmem:[%s1806 + $0x60] sm:$0xff]
      %v1820 = vld [vmem:[%s1806 + $0x68] sm:$0xff]
      %v1821 = vld [vmem:[%s1806 + $0x70] sm:$0xff]
      %v1822 = vld [vmem:[%s1806 + $0x78] sm:$0xff]
      %1823 = vmatprep.subr.mxu0 0.0
      %1824 = vmatpush1.msra.mxu0 %v1807
      %1825 = vmatprep.subr.mxu0 0.0
      %1826 = vmatpush1.msra.mxu0 %v1808
      %1827 = vmatprep.subr.mxu0 0.0
      %1828 = vmatpush1.msra.mxu0 %v1809
      %1829 = vmatprep.subr.mxu0 0.0
      %1830 = vmatpush1.msra.mxu0 %v1810
      %1831 = vmatprep.subr.mxu0 0.0
      %1832 = vmatpush1.msra.mxu0 %v1811
      %1833 = vmatprep.subr.mxu0 0.0
      %1834 = vmatpush1.msra.mxu0 %v1812
      %1835 = vmatprep.subr.mxu0 0.0
      %1836 = vmatpush1.msra.mxu0 %v1813
      %1837 = vmatprep.subr.mxu0 0.0
      %1838 = vmatpush1.msra.mxu0 %v1814
      %1839 = vmatprep.subr.mxu0 0.0
      %1840 = vmatpush1.msra.mxu0 %v1815
      %1841 = vmatprep.subr.mxu0 0.0
      %1842 = vmatpush1.msra.mxu0 %v1816
      %1843 = vmatprep.subr.mxu0 0.0
      %1844 = vmatpush1.msra.mxu0 %v1817
      %1845 = vmatprep.subr.mxu0 0.0
      %1846 = vmatpush1.msra.mxu0 %v1818
      %1847 = vmatprep.subr.mxu0 0.0
      %1848 = vmatpush1.msra.mxu0 %v1819
      %1849 = vmatprep.subr.mxu0 0.0
      %1850 = vmatpush1.msra.mxu0 %v1820
      %1851 = vmatprep.subr.mxu0 0.0
      %1852 = vmatpush1.msra.mxu0 %v1821
      %1853 = vmatprep.subr.mxu0 0.0
      %1854 = vmatpush1.msra.mxu0 %v1822
      %1855 = vmatprep.subr.mxu0 0.0
      %1856 = vmatpush1.msra.mxu0 0.0
      %1857 = vmatprep.subr.mxu0 0.0
      %1858 = vmatpush1.msra.mxu0 0.0
      %1859 = vmatprep.subr.mxu0 0.0
      %1860 = vmatpush1.msra.mxu0 0.0
      %1861 = vmatprep.subr.mxu0 0.0
      %1862 = vmatpush1.msra.mxu0 0.0
      %1863 = vmatprep.subr.mxu0 0.0
      %1864 = vmatpush1.msra.mxu0 0.0
      %1865 = vmatprep.subr.mxu0 0.0
      %1866 = vmatpush1.msra.mxu0 0.0
      %1867 = vmatprep.subr.mxu0 0.0
      %1868 = vmatpush1.msra.mxu0 0.0
      %1869 = vmatprep.subr.mxu0 0.0
      %1870 = vmatpush1.msra.mxu0 0.0
      %1871 = vmatprep.subr.mxu0 0.0
      %1872 = vmatpush1.msra.mxu0 0.0
      %1873 = vmatprep.subr.mxu0 0.0
      %1874 = vmatpush1.msra.mxu0 0.0
      %1875 = vmatprep.subr.mxu0 0.0
      %1876 = vmatpush1.msra.mxu0 0.0
      %1877 = vmatprep.subr.mxu0 0.0
      %1878 = vmatpush1.msra.mxu0 0.0
      %1879 = vmatprep.subr.mxu0 0.0
      %1880 = vmatpush1.msra.mxu0 0.0
      %1881 = vmatprep.subr.mxu0 0.0
      %1882 = vmatpush1.msra.mxu0 0.0
      %1883 = vmatprep.subr.mxu0 0.0
      %1884 = vmatpush1.msra.mxu0 0.0
      %1885 = vmatprep.subr.mxu0 0.0
      %1886 = vmatpush1.msra.mxu0 0.0
      %1887 = vmatprep.mubr.f32.mxu0 0.0
      %1888 = vmatmul.mubr.f32.gmra.mrb[0].mxu0 %v318
      %v1889 = vpop.f32.mrb[0].mxu0
      %v1890 = vadd.f32 0.0, %v1889
      %v1891 = vpop.f32.mrb[0].mxu0
      %1892 = vdwg.mxu0
      %s1893 = scalar_lea.vmem %s3, 384
      %v1894 = vld [vmem:[%s1893] sm:$0xff]
      %v1895 = vld [vmem:[%s1893 + $0x8] sm:$0xff]
      %v1896 = vld [vmem:[%s1893 + $0x10] sm:$0xff]
      %v1897 = vld [vmem:[%s1893 + $0x18] sm:$0xff]
      %v1898 = vld [vmem:[%s1893 + $0x20] sm:$0xff]
      %v1899 = vld [vmem:[%s1893 + $0x28] sm:$0xff]
      %v1900 = vld [vmem:[%s1893 + $0x30] sm:$0xff]
      %v1901 = vld [vmem:[%s1893 + $0x38] sm:$0xff]
      %v1902 = vld [vmem:[%s1893 + $0x40] sm:$0xff]
      %v1903 = vld [vmem:[%s1893 + $0x48] sm:$0xff]
      %v1904 = vld [vmem:[%s1893 + $0x50] sm:$0xff]
      %v1905 = vld [vmem:[%s1893 + $0x58] sm:$0xff]
      %v1906 = vld [vmem:[%s1893 + $0x60] sm:$0xff]
      %v1907 = vld [vmem:[%s1893 + $0x68] sm:$0xff]
      %v1908 = vld [vmem:[%s1893 + $0x70] sm:$0xff]
      %v1909 = vld [vmem:[%s1893 + $0x78] sm:$0xff]
      %1910 = vmatprep.subr.mxu0 0.0
      %1911 = vmatpush1.msra.mxu0 %v1894
      %1912 = vmatprep.subr.mxu0 0.0
      %1913 = vmatpush1.msra.mxu0 %v1895
      %1914 = vmatprep.subr.mxu0 0.0
      %1915 = vmatpush1.msra.mxu0 %v1896
      %1916 = vmatprep.subr.mxu0 0.0
      %1917 = vmatpush1.msra.mxu0 %v1897
      %1918 = vmatprep.subr.mxu0 0.0
      %1919 = vmatpush1.msra.mxu0 %v1898
      %1920 = vmatprep.subr.mxu0 0.0
      %1921 = vmatpush1.msra.mxu0 %v1899
      %1922 = vmatprep.subr.mxu0 0.0
      %1923 = vmatpush1.msra.mxu0 %v1900
      %1924 = vmatprep.subr.mxu0 0.0
      %1925 = vmatpush1.msra.mxu0 %v1901
      %1926 = vmatprep.subr.mxu0 0.0
      %1927 = vmatpush1.msra.mxu0 %v1902
      %1928 = vmatprep.subr.mxu0 0.0
      %1929 = vmatpush1.msra.mxu0 %v1903
      %1930 = vmatprep.subr.mxu0 0.0
      %1931 = vmatpush1.msra.mxu0 %v1904
      %1932 = vmatprep.subr.mxu0 0.0
      %1933 = vmatpush1.msra.mxu0 %v1905
      %1934 = vmatprep.subr.mxu0 0.0
      %1935 = vmatpush1.msra.mxu0 %v1906
      %1936 = vmatprep.subr.mxu0 0.0
      %1937 = vmatpush1.msra.mxu0 %v1907
      %1938 = vmatprep.subr.mxu0 0.0
      %1939 = vmatpush1.msra.mxu0 %v1908
      %1940 = vmatprep.subr.mxu0 0.0
      %1941 = vmatpush1.msra.mxu0 %v1909
      %1942 = vmatprep.subr.mxu0 0.0
      %1943 = vmatpush1.msra.mxu0 0.0
      %1944 = vmatprep.subr.mxu0 0.0
      %1945 = vmatpush1.msra.mxu0 0.0
      %1946 = vmatprep.subr.mxu0 0.0
      %1947 = vmatpush1.msra.mxu0 0.0
      %1948 = vmatprep.subr.mxu0 0.0
      %1949 = vmatpush1.msra.mxu0 0.0
      %1950 = vmatprep.subr.mxu0 0.0
      %1951 = vmatpush1.msra.mxu0 0.0
      %1952 = vmatprep.subr.mxu0 0.0
      %1953 = vmatpush1.msra.mxu0 0.0
      %1954 = vmatprep.subr.mxu0 0.0
      %1955 = vmatpush1.msra.mxu0 0.0
      %1956 = vmatprep.subr.mxu0 0.0
      %1957 = vmatpush1.msra.mxu0 0.0
      %1958 = vmatprep.subr.mxu0 0.0
      %1959 = vmatpush1.msra.mxu0 0.0
      %1960 = vmatprep.subr.mxu0 0.0
      %1961 = vmatpush1.msra.mxu0 0.0
      %1962 = vmatprep.subr.mxu0 0.0
      %1963 = vmatpush1.msra.mxu0 0.0
      %1964 = vmatprep.subr.mxu0 0.0
      %1965 = vmatpush1.msra.mxu0 0.0
      %1966 = vmatprep.subr.mxu0 0.0
      %1967 = vmatpush1.msra.mxu0 0.0
      %1968 = vmatprep.subr.mxu0 0.0
      %1969 = vmatpush1.msra.mxu0 0.0
      %1970 = vmatprep.subr.mxu0 0.0
      %1971 = vmatpush1.msra.mxu0 0.0
      %1972 = vmatprep.subr.mxu0 0.0
      %1973 = vmatpush1.msra.mxu0 0.0
      %1974 = vmatprep.mubr.f32.mxu0 0.0
      %1975 = vmatmul.mubr.f32.gmra.mrb[0].mxu0 %v319
      %v1976 = vpop.f32.mrb[0].mxu0
      %v1977 = vadd.f32 0.0, %v1976
      %v1978 = vpop.f32.mrb[0].mxu0
      %1979 = vdwg.mxu0
      %s1980 = scalar_lea.vmem %s4, 384
      %v1981 = vld [vmem:[%s1980] sm:$0xff]
      %v1982 = vld [vmem:[%s1980 + $0x8] sm:$0xff]
      %v1983 = vld [vmem:[%s1980 + $0x10] sm:$0xff]
      %v1984 = vld [vmem:[%s1980 + $0x18] sm:$0xff]
      %v1985 = vld [vmem:[%s1980 + $0x20] sm:$0xff]
      %v1986 = vld [vmem:[%s1980 + $0x28] sm:$0xff]
      %v1987 = vld [vmem:[%s1980 + $0x30] sm:$0xff]
      %v1988 = vld [vmem:[%s1980 + $0x38] sm:$0xff]
      %v1989 = vld [vmem:[%s1980 + $0x40] sm:$0xff]
      %v1990 = vld [vmem:[%s1980 + $0x48] sm:$0xff]
      %v1991 = vld [vmem:[%s1980 + $0x50] sm:$0xff]
      %v1992 = vld [vmem:[%s1980 + $0x58] sm:$0xff]
      %v1993 = vld [vmem:[%s1980 + $0x60] sm:$0xff]
      %v1994 = vld [vmem:[%s1980 + $0x68] sm:$0xff]
      %v1995 = vld [vmem:[%s1980 + $0x70] sm:$0xff]
      %v1996 = vld [vmem:[%s1980 + $0x78] sm:$0xff]
      %1997 = vmatprep.subr.mxu0 0.0
      %1998 = vmatpush1.msra.mxu0 %v1981
      %1999 = vmatprep.subr.mxu0 0.0
      %2000 = vmatpush1.msra.mxu0 %v1982
      %2001 = vmatprep.subr.mxu0 0.0
      %2002 = vmatpush1.msra.mxu0 %v1983
      %2003 = vmatprep.subr.mxu0 0.0
      %2004 = vmatpush1.msra.mxu0 %v1984
      %2005 = vmatprep.subr.mxu0 0.0
      %2006 = vmatpush1.msra.mxu0 %v1985
      %2007 = vmatprep.subr.mxu0 0.0
      %2008 = vmatpush1.msra.mxu0 %v1986
      %2009 = vmatprep.subr.mxu0 0.0
      %2010 = vmatpush1.msra.mxu0 %v1987
      %2011 = vmatprep.subr.mxu0 0.0
      %2012 = vmatpush1.msra.mxu0 %v1988
      %2013 = vmatprep.subr.mxu0 0.0
      %2014 = vmatpush1.msra.mxu0 %v1989
      %2015 = vmatprep.subr.mxu0 0.0
      %2016 = vmatpush1.msra.mxu0 %v1990
      %2017 = vmatprep.subr.mxu0 0.0
      %2018 = vmatpush1.msra.mxu0 %v1991
      %2019 = vmatprep.subr.mxu0 0.0
      %2020 = vmatpush1.msra.mxu0 %v1992
      %2021 = vmatprep.subr.mxu0 0.0
      %2022 = vmatpush1.msra.mxu0 %v1993
      %2023 = vmatprep.subr.mxu0 0.0
      %2024 = vmatpush1.msra.mxu0 %v1994
      %2025 = vmatprep.subr.mxu0 0.0
      %2026 = vmatpush1.msra.mxu0 %v1995
      %2027 = vmatprep.subr.mxu0 0.0
      %2028 = vmatpush1.msra.mxu0 %v1996
      %2029 = vmatprep.subr.mxu0 0.0
      %2030 = vmatpush1.msra.mxu0 0.0
      %2031 = vmatprep.subr.mxu0 0.0
      %2032 = vmatpush1.msra.mxu0 0.0
      %2033 = vmatprep.subr.mxu0 0.0
      %2034 = vmatpush1.msra.mxu0 0.0
      %2035 = vmatprep.subr.mxu0 0.0
      %2036 = vmatpush1.msra.mxu0 0.0
      %2037 = vmatprep.subr.mxu0 0.0
      %2038 = vmatpush1.msra.mxu0 0.0
      %2039 = vmatprep.subr.mxu0 0.0
      %2040 = vmatpush1.msra.mxu0 0.0
      %2041 = vmatprep.subr.mxu0 0.0
      %2042 = vmatpush1.msra.mxu0 0.0
      %2043 = vmatprep.subr.mxu0 0.0
      %2044 = vmatpush1.msra.mxu0 0.0
      %2045 = vmatprep.subr.mxu0 0.0
      %2046 = vmatpush1.msra.mxu0 0.0
      %2047 = vmatprep.subr.mxu0 0.0
      %2048 = vmatpush1.msra.mxu0 0.0
      %2049 = vmatprep.subr.mxu0 0.0
      %2050 = vmatpush1.msra.mxu0 0.0
      %2051 = vmatprep.subr.mxu0 0.0
      %2052 = vmatpush1.msra.mxu0 0.0
      %2053 = vmatprep.subr.mxu0 0.0
      %2054 = vmatpush1.msra.mxu0 0.0
      %2055 = vmatprep.subr.mxu0 0.0
      %2056 = vmatpush1.msra.mxu0 0.0
      %2057 = vmatprep.subr.mxu0 0.0
      %2058 = vmatpush1.msra.mxu0 0.0
      %2059 = vmatprep.subr.mxu0 0.0
      %2060 = vmatpush1.msra.mxu0 0.0
      %2061 = vmatprep.mubr.f32.mxu0 0.0
      %2062 = vmatmul.mubr.f32.gmra.mrb[0].mxu0 %v319
      %v2063 = vpop.f32.mrb[0].mxu0
      %v2064 = vadd.f32 0.0, %v2063
      %v2065 = vpop.f32.mrb[0].mxu0
      %2066 = vdwg.mxu0
      %v2068 = vsel %vm578, %v1890, 0
      %v2071 = vsel %vm578, %v1977, 0
      %2073 = vmatprep.subr.mxu0 0.0
      %2074 = vmatpush1.xpose.msra.mxu0 %v2071
      %2075 = vmatprep.subr.mxu0 0.0
      %2076 = vmatpush1.xpose.msra.mxu0 0.0
      %2077 = vmatprep.subr.mxu0 0.0
      %2078 = vmatpush1.xpose.msra.mxu0 0.0
      %2079 = vmatprep.subr.mxu0 0.0
      %2080 = vmatpush1.xpose.msra.mxu0 0.0
      %2081 = vmatprep.subr.mxu0 0.0
      %2082 = vmatpush1.xpose.msra.mxu0 0.0
      %2083 = vmatprep.subr.mxu0 0.0
      %2084 = vmatpush1.xpose.msra.mxu0 0.0
      %2085 = vmatprep.subr.mxu0 0.0
      %2086 = vmatpush1.xpose.msra.mxu0 0.0
      %2087 = vmatprep.subr.mxu0 0.0
      %2088 = vmatpush1.xpose.msra.mxu0 0.0
      %2089 = vmatprep.subr.mxu0 0.0
      %2090 = vmatpush1.xpose.msra.mxu0 0.0
      %2091 = vmatprep.subr.mxu0 0.0
      %2092 = vmatpush1.xpose.msra.mxu0 0.0
      %2093 = vmatprep.subr.mxu0 0.0
      %2094 = vmatpush1.xpose.msra.mxu0 0.0
      %2095 = vmatprep.subr.mxu0 0.0
      %2096 = vmatpush1.xpose.msra.mxu0 0.0
      %2097 = vmatprep.subr.mxu0 0.0
      %2098 = vmatpush1.xpose.msra.mxu0 0.0
      %2099 = vmatprep.subr.mxu0 0.0
      %2100 = vmatpush1.xpose.msra.mxu0 0.0
      %2101 = vmatprep.subr.mxu0 0.0
      %2102 = vmatpush1.xpose.msra.mxu0 0.0
      %2103 = vmatprep.subr.mxu0 0.0
      %2104 = vmatpush1.xpose.msra.mxu0 0.0
      %2105 = vmatprep.subr.mxu0 0.0
      %2106 = vmatpush1.xpose.msra.mxu0 0.0
      %2107 = vmatprep.subr.mxu0 0.0
      %2108 = vmatpush1.xpose.msra.mxu0 0.0
      %2109 = vmatprep.subr.mxu0 0.0
      %2110 = vmatpush1.xpose.msra.mxu0 0.0
      %2111 = vmatprep.subr.mxu0 0.0
      %2112 = vmatpush1.xpose.msra.mxu0 0.0
      %2113 = vmatprep.subr.mxu0 0.0
      %2114 = vmatpush1.xpose.msra.mxu0 0.0
      %2115 = vmatprep.subr.mxu0 0.0
      %2116 = vmatpush1.xpose.msra.mxu0 0.0
      %2117 = vmatprep.subr.mxu0 0.0
      %2118 = vmatpush1.xpose.msra.mxu0 0.0
      %2119 = vmatprep.subr.mxu0 0.0
      %2120 = vmatpush1.xpose.msra.mxu0 0.0
      %2121 = vmatprep.subr.mxu0 0.0
      %2122 = vmatpush1.xpose.msra.mxu0 0.0
      %2123 = vmatprep.subr.mxu0 0.0
      %2124 = vmatpush1.xpose.msra.mxu0 0.0
      %2125 = vmatprep.subr.mxu0 0.0
      %2126 = vmatpush1.xpose.msra.mxu0 0.0
      %2127 = vmatprep.subr.mxu0 0.0
      %2128 = vmatpush1.xpose.msra.mxu0 0.0
      %2129 = vmatprep.subr.mxu0 0.0
      %2130 = vmatpush1.xpose.msra.mxu0 0.0
      %2131 = vmatprep.subr.mxu0 0.0
      %2132 = vmatpush1.xpose.msra.mxu0 0.0
      %2133 = vmatprep.subr.mxu0 0.0
      %2134 = vmatpush1.xpose.msra.mxu0 0.0
      %2135 = vmatprep.subr.mxu0 0.0
      %2136 = vmatpush1.xpose.msra.mxu0 0.0
      %2137 = vmatprep.mubr.f32.mxu0 0.0
      %2138 = vmatmul.mubr.f32.gmra.mrb[0].mxu0 %v2068
      %v2139 = vpop.f32.mrb[0].mxu0
      %v2140 = vadd.f32 0.0, %v2139
      %v2141 = vpop.f32.mrb[0].mxu0
      %2142 = vdwg.mxu0
      %v2143 = vsel %vm578, %v2140, -inf
      %2144 = vmax.xlane.f32.xlu0 %v2143
      %v2145 = vpop.xlane.xlu0 %2144
      %v2146 = vsub.f32 %v2140, %v2145
      %v2147 = vmul.f32 %v2146, 1.442695
      %v2148 = vpow.pop %v2147
      %v2149 = vsel %vm578, %v2148, 0.0
      %2150 = vadd.xlane.f32.xlu0 %v2149
      %v2151 = vpop.xlane.xlu0 %2150
      %v2152 = vrcp.pop %v2151
      %v2153 = vmul.f32 %v2148, %v2152
      %v2155 = vsel %vm578, %v2153, 0
      %2157 = vmatprep.subr.mxu0 0.0
      %2158 = vmatpush1.msra.mxu0 %v2064
      %2159 = vmatprep.subr.mxu0 0.0
      %2160 = vmatpush1.msra.mxu0 0.0
      %2161 = vmatprep.subr.mxu0 0.0
      %2162 = vmatpush1.msra.mxu0 0.0
      %2163 = vmatprep.subr.mxu0 0.0
      %2164 = vmatpush1.msra.mxu0 0.0
      %2165 = vmatprep.subr.mxu0 0.0
      %2166 = vmatpush1.msra.mxu0 0.0
      %2167 = vmatprep.subr.mxu0 0.0
      %2168 = vmatpush1.msra.mxu0 0.0
      %2169 = vmatprep.subr.mxu0 0.0
      %2170 = vmatpush1.msra.mxu0 0.0
      %2171 = vmatprep.subr.mxu0 0.0
      %2172 = vmatpush1.msra.mxu0 0.0
      %2173 = vmatprep.subr.mxu0 0.0
      %2174 = vmatpush1.msra.mxu0 0.0
      %2175 = vmatprep.subr.mxu0 0.0
      %2176 = vmatpush1.msra.mxu0 0.0
      %2177 = vmatprep.subr.mxu0 0.0
      %2178 = vmatpush1.msra.mxu0 0.0
      %2179 = vmatprep.subr.mxu0 0.0
      %2180 = vmatpush1.msra.mxu0 0.0
      %2181 = vmatprep.subr.mxu0 0.0
      %2182 = vmatpush1.msra.mxu0 0.0
      %2183 = vmatprep.subr.mxu0 0.0
      %2184 = vmatpush1.msra.mxu0 0.0
      %2185 = vmatprep.subr.mxu0 0.0
      %2186 = vmatpush1.msra.mxu0 0.0
      %2187 = vmatprep.subr.mxu0 0.0
      %2188 = vmatpush1.msra.mxu0 0.0
      %2189 = vmatprep.subr.mxu0 0.0
      %2190 = vmatpush1.msra.mxu0 0.0
      %2191 = vmatprep.subr.mxu0 0.0
      %2192 = vmatpush1.msra.mxu0 0.0
      %2193 = vmatprep.subr.mxu0 0.0
      %2194 = vmatpush1.msra.mxu0 0.0
      %2195 = vmatprep.subr.mxu0 0.0
      %2196 = vmatpush1.msra.mxu0 0.0
      %2197 = vmatprep.subr.mxu0 0.0
      %2198 = vmatpush1.msra.mxu0 0.0
      %2199 = vmatprep.subr.mxu0 0.0
      %2200 = vmatpush1.msra.mxu0 0.0
      %2201 = vmatprep.subr.mxu0 0.0
      %2202 = vmatpush1.msra.mxu0 0.0
      %2203 = vmatprep.subr.mxu0 0.0
      %2204 = vmatpush1.msra.mxu0 0.0
      %2205 = vmatprep.subr.mxu0 0.0
      %2206 = vmatpush1.msra.mxu0 0.0
      %2207 = vmatprep.subr.mxu0 0.0
      %2208 = vmatpush1.msra.mxu0 0.0
      %2209 = vmatprep.subr.mxu0 0.0
      %2210 = vmatpush1.msra.mxu0 0.0
      %2211 = vmatprep.subr.mxu0 0.0
      %2212 = vmatpush1.msra.mxu0 0.0
      %2213 = vmatprep.subr.mxu0 0.0
      %2214 = vmatpush1.msra.mxu0 0.0
      %2215 = vmatprep.subr.mxu0 0.0
      %2216 = vmatpush1.msra.mxu0 0.0
      %2217 = vmatprep.subr.mxu0 0.0
      %2218 = vmatpush1.msra.mxu0 0.0
      %2219 = vmatprep.subr.mxu0 0.0
      %2220 = vmatpush1.msra.mxu0 0.0
      %2221 = vmatprep.mubr.f32.mxu0 0.0
      %2222 = vmatmul.mubr.f32.gmra.mrb[0].mxu0 %v2155
      %v2223 = vpop.f32.mrb[0].mxu0
      %v2224 = vadd.f32 0.0, %v2223
      %v2225 = vpop.f32.mrb[0].mxu0
      %2226 = vdwg.mxu0
      %s2227 = scalar_lea.vmem %s5, 24
      %v2228 = vld [vmem:[%s2227] sm:$0xff]
      %v2230 = vsel %vm578, %v2224, 0
      %2232 = vmatprep.subr.mxu0 0.0
      %2233 = vmatpush1.msra.mxu0 %v2228
      %2234 = vmatprep.subr.mxu0 0.0
      %2235 = vmatpush1.msra.mxu0 0.0
      %2236 = vmatprep.subr.mxu0 0.0
      %2237 = vmatpush1.msra.mxu0 0.0
      %2238 = vmatprep.subr.mxu0 0.0
      %2239 = vmatpush1.msra.mxu0 0.0
      %2240 = vmatprep.subr.mxu0 0.0
      %2241 = vmatpush1.msra.mxu0 0.0
      %2242 = vmatprep.subr.mxu0 0.0
      %2243 = vmatpush1.msra.mxu0 0.0
      %2244 = vmatprep.subr.mxu0 0.0
      %2245 = vmatpush1.msra.mxu0 0.0
      %2246 = vmatprep.subr.mxu0 0.0
      %2247 = vmatpush1.msra.mxu0 0.0
      %2248 = vmatprep.subr.mxu0 0.0
      %2249 = vmatpush1.msra.mxu0 0.0
      %2250 = vmatprep.subr.mxu0 0.0
      %2251 = vmatpush1.msra.mxu0 0.0
      %2252 = vmatprep.subr.mxu0 0.0
      %2253 = vmatpush1.msra.mxu0 0.0
      %2254 = vmatprep.subr.mxu0 0.0
      %2255 = vmatpush1.msra.mxu0 0.0
      %2256 = vmatprep.subr.mxu0 0.0
      %2257 = vmatpush1.msra.mxu0 0.0
      %2258 = vmatprep.subr.mxu0 0.0
      %2259 = vmatpush1.msra.mxu0 0.0
      %2260 = vmatprep.subr.mxu0 0.0
      %2261 = vmatpush1.msra.mxu0 0.0
      %2262 = vmatprep.subr.mxu0 0.0
      %2263 = vmatpush1.msra.mxu0 0.0
      %2264 = vmatprep.subr.mxu0 0.0
      %2265 = vmatpush1.msra.mxu0 0.0
      %2266 = vmatprep.subr.mxu0 0.0
      %2267 = vmatpush1.msra.mxu0 0.0
      %2268 = vmatprep.subr.mxu0 0.0
      %2269 = vmatpush1.msra.mxu0 0.0
      %2270 = vmatprep.subr.mxu0 0.0
      %2271 = vmatpush1.msra.mxu0 0.0
      %2272 = vmatprep.subr.mxu0 0.0
      %2273 = vmatpush1.msra.mxu0 0.0
      %2274 = vmatprep.subr.mxu0 0.0
      %2275 = vmatpush1.msra.mxu0 0.0
      %2276 = vmatprep.subr.mxu0 0.0
      %2277 = vmatpush1.msra.mxu0 0.0
      %2278 = vmatprep.subr.mxu0 0.0
      %2279 = vmatpush1.msra.mxu0 0.0
      %2280 = vmatprep.subr.mxu0 0.0
      %2281 = vmatpush1.msra.mxu0 0.0
      %2282 = vmatprep.subr.mxu0 0.0
      %2283 = vmatpush1.msra.mxu0 0.0
      %2284 = vmatprep.subr.mxu0 0.0
      %2285 = vmatpush1.msra.mxu0 0.0
      %2286 = vmatprep.subr.mxu0 0.0
      %2287 = vmatpush1.msra.mxu0 0.0
      %2288 = vmatprep.subr.mxu0 0.0
      %2289 = vmatpush1.msra.mxu0 0.0
      %2290 = vmatprep.subr.mxu0 0.0
      %2291 = vmatpush1.msra.mxu0 0.0
      %2292 = vmatprep.subr.mxu0 0.0
      %2293 = vmatpush1.msra.mxu0 0.0
      %2294 = vmatprep.subr.mxu0 0.0
      %2295 = vmatpush1.msra.mxu0 0.0
      %2296 = vmatprep.mubr.f32.mxu0 0.0
      %2297 = vmatmul.mubr.f32.gmra.mrb[0].mxu0 %v2230
      %v2298 = vpop.f32.mrb[0].mxu0
      %v2299 = vadd.f32 0.0, %v2298
      %v2300 = vpop.f32.mrb[0].mxu0
      %2301 = vdwg.mxu0
      %v2302 = vadd.f32 %v1805, %v2299
      %v2303 = vld [vmem:[%s6] sm:$0xff]
      %v2304 = vld [vmem:[%s6 + $0x8] sm:$0xff]
      %v2305 = vld [vmem:[%s6 + $0x10] sm:$0xff]
      %v2306 = vld [vmem:[%s6 + $0x18] sm:$0xff]
      %v2307 = vld [vmem:[%s6 + $0x20] sm:$0xff]
      %v2308 = vld [vmem:[%s6 + $0x28] sm:$0xff]
      %v2309 = vld [vmem:[%s6 + $0x30] sm:$0xff]
      %v2310 = vld [vmem:[%s6 + $0x38] sm:$0xff]
      %v2311 = vld [vmem:[%s6 + $0x40] sm:$0xff]
      %v2312 = vld [vmem:[%s6 + $0x48] sm:$0xff]
      %v2313 = vld [vmem:[%s6 + $0x50] sm:$0xff]
      %v2314 = vld [vmem:[%s6 + $0x58] sm:$0xff]
      %v2315 = vld [vmem:[%s6 + $0x60] sm:$0xff]
      %v2316 = vld [vmem:[%s6 + $0x68] sm:$0xff]
      %v2317 = vld [vmem:[%s6 + $0x70] sm:$0xff]
      %v2318 = vld [vmem:[%s6 + $0x78] sm:$0xff]
      %v2319 = vld [vmem:[%s7] sm:$0x1]
      %v2321 = vlaneseq
      %v2322 = vshrl.u32 %v2321, 7
      %v2323 = vsub.s32 0, %v2322
      %v2324 = vrot.slane %v2319, %v2323
      %2326 = vmatprep.subr.mxu0 0.0
      %2327 = vmatpush1.msra.mxu0 %v2303
      %2328 = vmatprep.subr.mxu0 0.0
      %2329 = vmatpush1.msra.mxu0 %v2304
      %2330 = vmatprep.subr.mxu0 0.0
      %2331 = vmatpush1.msra.mxu0 %v2305
      %2332 = vmatprep.subr.mxu0 0.0
      %2333 = vmatpush1.msra.mxu0 %v2306
      %2334 = vmatprep.subr.mxu0 0.0
      %2335 = vmatpush1.msra.mxu0 %v2307
      %2336 = vmatprep.subr.mxu0 0.0
      %2337 = vmatpush1.msra.mxu0 %v2308
      %2338 = vmatprep.subr.mxu0 0.0
      %2339 = vmatpush1.msra.mxu0 %v2309
      %2340 = vmatprep.subr.mxu0 0.0
      %2341 = vmatpush1.msra.mxu0 %v2310
      %2342 = vmatprep.subr.mxu0 0.0
      %2343 = vmatpush1.msra.mxu0 %v2311
      %2344 = vmatprep.subr.mxu0 0.0
      %2345 = vmatpush1.msra.mxu0 %v2312
      %2346 = vmatprep.subr.mxu0 0.0
      %2347 = vmatpush1.msra.mxu0 %v2313
      %2348 = vmatprep.subr.mxu0 0.0
      %2349 = vmatpush1.msra.mxu0 %v2314
      %2350 = vmatprep.subr.mxu0 0.0
      %2351 = vmatpush1.msra.mxu0 %v2315
      %2352 = vmatprep.subr.mxu0 0.0
      %2353 = vmatpush1.msra.mxu0 %v2316
      %2354 = vmatprep.subr.mxu0 0.0
      %2355 = vmatpush1.msra.mxu0 %v2317
      %2356 = vmatprep.subr.mxu0 0.0
      %2357 = vmatpush1.msra.mxu0 %v2318
      %2358 = vmatprep.subr.mxu0 0.0
      %2359 = vmatpush1.msra.mxu0 0.0
      %2360 = vmatprep.subr.mxu0 0.0
      %2361 = vmatpush1.msra.mxu0 0.0
      %2362 = vmatprep.subr.mxu0 0.0
      %2363 = vmatpush1.msra.mxu0 0.0
      %2364 = vmatprep.subr.mxu0 0.0
      %2365 = vmatpush1.msra.mxu0 0.0
      %2366 = vmatprep.subr.mxu0 0.0
      %2367 = vmatpush1.msra.mxu0 0.0
      %2368 = vmatprep.subr.mxu0 0.0
      %2369 = vmatpush1.msra.mxu0 0.0
      %2370 = vmatprep.subr.mxu0 0.0
      %2371 = vmatpush1.msra.mxu0 0.0
      %2372 = vmatprep.subr.mxu0 0.0
      %2373 = vmatpush1.msra.mxu0 0.0
      %2374 = vmatprep.subr.mxu0 0.0
      %2375 = vmatpush1.msra.mxu0 0.0
      %2376 = vmatprep.subr.mxu0 0.0
      %2377 = vmatpush1.msra.mxu0 0.0
      %2378 = vmatprep.subr.mxu0 0.0
      %2379 = vmatpush1.msra.mxu0 0.0
      %2380 = vmatprep.subr.mxu0 0.0
      %2381 = vmatpush1.msra.mxu0 0.0
      %2382 = vmatprep.subr.mxu0 0.0
      %2383 = vmatpush1.msra.mxu0 0.0
      %2384 = vmatprep.subr.mxu0 0.0
      %2385 = vmatpush1.msra.mxu0 0.0
      %2386 = vmatprep.subr.mxu0 0.0
      %2387 = vmatpush1.msra.mxu0 0.0
      %2388 = vmatprep.subr.mxu0 0.0
      %2389 = vmatpush1.msra.mxu0 0.0
      %2390 = vmatprep.mubr.f32.mxu0 0.0
      %2391 = vmatmul.mubr.f32.gmra.mrb[0].mxu0 %v2302
      %v2392 = vpop.f32.mrb[0].mxu0
      %v2393 = vadd.f32 %v2324, %v2392
      %v2394 = vpop.f32.mrb[0].mxu0
      %2395 = vdwg.mxu0
      %2396 = vst [vmem:[%s317] sm:$0xff] %v2393
      %p2397 = scmp.lt.s32.totalorder %s19, 1
      %s2398 = scalar_select %p2397, %s19, 1
      %s2399 = smul.addr %s2398, 8
      %s2400 = scalar_lea.vmem %s8, %s2399
      // Predicated region
      $region53: #{transf_enc_dec_apply.5} parent=51 // pred_check
        %p2401 = pneg %p215
      $region54: #{transf_enc_dec_apply.5} parent=51 // pred_check_branch
        %2403 = sbr.rel (%p2401) target = $region56
      $region55: #{transf_enc_dec_apply.5} parent=51 // pred_region
        _
      $region56: #{transf_enc_dec_apply.5} parent=51 // pred_fallthru
        _
    $region52: #{transf_enc_dec_apply.5} parent=5 // pred_fallthru
      _
    %p2404 = scmp.le.s32.totalorder 2, %s14
    // Predicated region
    $region57: #{transf_enc_dec_apply.5} parent=5 // pred_check
      %p2405 = pneg %p2404
    $region58: #{transf_enc_dec_apply.5} parent=5 // pred_check_branch
      %2407 = sbr.rel (%p2405) target = $region60
    $region59: #{transf_enc_dec_apply.5} parent=5 // pred_region
      %s2408 = ssub.s32 %s14, 2
      // Predicated region
      $region61: #{transf_enc_dec_apply.5} parent=59 // pred_check
        %p2409 = pneg %p221
      $region62: #{transf_enc_dec_apply.5} parent=59 // pred_check_branch
        %2411 = sbr.rel (%p2409) target = $region64
      $region63: #{transf_enc_dec_apply.5} parent=59 // pred_region
        %p2412 = scmp.lt.s32.totalorder %s20, 1
        %s2413 = scalar_select %p2412, %s20, 1
        %s2414 = smul.addr %s2413, 8
        %s2415 = scalar_lea.vmem %s8, %s2414
      $region64: #{transf_enc_dec_apply.5} parent=59 // pred_fallthru
        _
    $region60: #{transf_enc_dec_apply.5} parent=5 // pred_fallthru
      _
  $region6: #{transf_enc_dec_apply.5} parent=0 // loop_footer
    %s18 = sadd.s32 1, %s14
  $region7: #{transf_enc_dec_apply.5} parent=0 // loop_footer_branch
    %13 = sbr.rel target = $region3
  $region8: #{transf_enc_dec_apply.5} parent=0 // loop_exit
    _

</llo_original>
